<compile_context>
chip_gen: v6e
topology: v6e:2x2x1
jax: 0.10.0
libtpu: 0.0.40
codegen_flags: <defaults>
</compile_context>

<pallas_src>
import functools

import jax
import jax.numpy as jnp
from jax import lax
from jax.experimental import pallas as pl
from jax.experimental.pallas import tpu as pltpu


def gnn_kernel(x_ref, mask_ref, wqkv_ref, b_ref, out_ref, proj_ref,
               *, num_heads, head_dim, out_dim):
    """One graph per grid step: fused QKV' projection + 4-head DPGAT + Linear."""
    n = x_ref.shape[0]
    hd = num_heads * head_dim

    # Single lane-dense MXU projection for (scaled-Q | K | x@(V@W_lin)) of ALL
    # heads, staged through VMEM scratch (keeps vreg pressure low).
    proj_ref[...] = jnp.dot(x_ref[...], wqkv_ref[...],
                            preferred_element_type=jnp.float32)

    acc = jnp.zeros((n, out_dim), jnp.float32)
    for h in range(num_heads):                      # unrolled at trace time
        q_h = proj_ref[:, h * head_dim:(h + 1) * head_dim]          # (N, D)
        k_h = proj_ref[:, hd + h * head_dim:hd + (h + 1) * head_dim]
        xvw_h = proj_ref[:, 2 * hd + h * out_dim:2 * hd + (h + 1) * out_dim]

        # S = (Q / (8*sqrt(F))) @ K^T ; the scale is pre-folded into wqkv.
        # Contract K's last axis directly (no explicit transpose / relayout).
        s = lax.dot_general(q_h, k_h,
                            dimension_numbers=(((1,), (1,)), ((), ())),
                            preferred_element_type=jnp.float32)      # (N, N)
        e = jnp.exp(jnp.tanh(s) * 8.0)               # soft clip + exp (EUP)
        e = jnp.where(mask_ref[...] != 0, e, 0.0)    # adjacency mask (int8)

        # Deferred normalization: aggregate un-normalized, scale the small
        # (N, D_out) result by the exact reciprocal of the (N, 1) row sums.
        rowsum = jnp.sum(e, axis=-1, keepdims=True)
        agg = jnp.dot(e, xvw_h, preferred_element_type=jnp.float32)  # (N, Dout)
        acc = acc + agg * pl.reciprocal(rowsum, approx=False)

    out_ref[...] = acc + b_ref[...]                  # bias broadcast (1, Dout)


def fuse_gnn_weights(q_heads, k_heads, v_heads, w_lin, b_lin):
    """One-time (off the per-call path) algebraic fusion of all parameters.

    Returns wqkv of shape (F, 2*H*D + H*D_out) whose column blocks are
    [scaled Q heads | K heads | per-head V @ W_lin block], plus the (1, D_out)
    bias.  Mathematically identical to the PyTorch module (associativity).
    """
    num_heads, input_dim, head_dim = q_heads.shape
    out_dim = w_lin.shape[1]
    inv_scale = 1.0 / (8.0 * float(input_dim) ** 0.5)

    q_cat = (jnp.transpose(q_heads, (1, 0, 2))
             .reshape(input_dim, num_heads * head_dim)) * inv_scale
    k_cat = (jnp.transpose(k_heads, (1, 0, 2))
             .reshape(input_dim, num_heads * head_dim))
    # Fold the output Linear into V: per head v_h @ W_lin[h*D:(h+1)*D].
    vw = jnp.einsum("hfd,hdo->hfo", v_heads,
                    w_lin.reshape(num_heads, head_dim, out_dim))
    vw_cat = jnp.transpose(vw, (1, 0, 2)).reshape(input_dim, num_heads * out_dim)

    wqkv = jnp.concatenate([q_cat, k_cat, vw_cat], axis=1)
    return wqkv, b_lin.reshape(1, out_dim)


def gnn_layer(x, a_mask_i8, wqkv, bias2d, *, num_heads, head_dim):
    """Batched GNNlayer forward: x (B,N,F), mask (B,N,N) int8 -> (B,N,D_out)."""
    batch, n, input_dim = x.shape
    out_dim = bias2d.shape[1]
    fused_cols = wqkv.shape[1]
    assert fused_cols == 2 * num_heads * head_dim + num_heads * out_dim

    kernel = functools.partial(gnn_kernel, num_heads=num_heads,
                               head_dim=head_dim, out_dim=out_dim)
    grid_spec = pltpu.PrefetchScalarGridSpec(
        num_scalar_prefetch=0,
        grid=(batch,),
        in_specs=[
            # Per-graph blocks (batch dim squeezed out of the kernel refs).
            pl.BlockSpec((None, n, input_dim), lambda b: (b, 0, 0)),
            pl.BlockSpec((None, n, n), lambda b: (b, 0, 0)),
            # Weights: constant block index -> DMA'd once, VMEM-resident.
            pl.BlockSpec(wqkv.shape, lambda b: (0, 0)),
            pl.BlockSpec(bias2d.shape, lambda b: (0, 0)),
        ],
        out_specs=pl.BlockSpec((None, n, out_dim), lambda b: (b, 0, 0)),
        scratch_shapes=[pltpu.VMEM((n, fused_cols), jnp.float32)],
    )
    return pl.pallas_call(
        kernel,
        out_shape=jax.ShapeDtypeStruct((batch, n, out_dim), jnp.float32),
        grid_spec=grid_spec,
        compiler_params=pltpu.CompilerParams(
            dimension_semantics=("parallel",)),   # shards over v7x's 2 TCs
    )(x, a_mask_i8, wqkv, bias2d)


def gnn_reference(x, a_mask_f32, q_heads, k_heads, v_heads, w_lin, b_lin):
    """Pure-JAX reference matching the PyTorch GNNlayer forward exactly."""
    input_dim = x.shape[-1]
    heads = []
    for h in range(q_heads.shape[0]):
        Q = x @ q_heads[h]
        K = x @ k_heads[h]
        A = Q @ K.T
        A = A / (input_dim ** 0.5)
        A = jnp.tanh(A / 8.0) * 8.0
        A = jnp.exp(A) * a_mask_f32
        A = A / jnp.sum(A, -1, keepdims=True)
        hX = A @ x
        heads.append(hX @ v_heads[h])
    cat = jnp.concatenate(heads, axis=-1)
    return cat @ w_lin + b_lin


if __name__ == "__main__":
    key = jax.random.PRNGKey(0)
    k_x, k_a, k_q, k_k, k_v, k_w, k_b = jax.random.split(key, 7)

    B = 2            # batched graphs (amortizes launch; 'parallel' grid axis)
    N = 128          # nodes per graph
    INPUT_DIM = 32   # input feature dimension
    OUTPUT_DIM = 32  # per-head / final output dimension
    NUM_HEADS = 4

    x = jax.random.normal(k_x, (B, N, INPUT_DIM), dtype=jnp.float32)

    # Binary adjacency mask with self-loops (every row has >= 1 nonzero).
    adj = jax.random.uniform(k_a, (B, N, N)) < 0.3
    adj = jnp.logical_or(adj, jnp.eye(N, dtype=bool)[None])
    a_mask_i8 = adj.astype(jnp.int8)      # kernel input (4x smaller DMA)
    a_mask_f32 = adj.astype(jnp.float32)  # reference input

    # Per-head q/k/v parameters (torch.randn equivalents) and output Linear.
    q_heads = jax.random.normal(k_q, (NUM_HEADS, INPUT_DIM, OUTPUT_DIM), jnp.float32)
    k_heads = jax.random.normal(k_k, (NUM_HEADS, INPUT_DIM, OUTPUT_DIM), jnp.float32)
    v_heads = jax.random.normal(k_v, (NUM_HEADS, INPUT_DIM, OUTPUT_DIM), jnp.float32)
    lin_in = NUM_HEADS * OUTPUT_DIM
    bound = 1.0 / (lin_in ** 0.5)
    w_lin = jax.random.uniform(k_w, (lin_in, OUTPUT_DIM), jnp.float32, -bound, bound)
    b_lin = jax.random.uniform(k_b, (OUTPUT_DIM,), jnp.float32, -bound, bound)

    # One-time weight fusion (scale fold + W_lin fold), off the per-call path.
    wqkv, bias2d = fuse_gnn_weights(q_heads, k_heads, v_heads, w_lin, b_lin)

    out = gnn_layer(x, a_mask_i8, wqkv, bias2d,
                    num_heads=NUM_HEADS, head_dim=OUTPUT_DIM)
    out = jax.block_until_ready(out)

    ref = jax.vmap(lambda xb, ab: gnn_reference(
        xb, ab, q_heads, k_heads, v_heads, w_lin, b_lin))(x, a_mask_f32)

    assert out.shape == (B, N, OUTPUT_DIM)
    # All math stays f32 in the kernel; only f32 reassociation (deferred
    # normalization, W_lin fold) differs from the reference ordering.
    assert jnp.allclose(out, ref, rtol=2e-3, atol=2e-3), "mismatch vs reference"

    print("KERNEL_OK")
</pallas_src>

<mosaic_0001>
module attributes {stable_mosaic.version = 11 : i64} {
  func.func @gnn_kernel(%arg0: i32, %arg1: memref<1x128x32xf32, #tpu.memory_space<vmem>>, %arg2: memref<1x128x128xi8, #tpu.memory_space<vmem>>, %arg3: memref<32x384xf32, #tpu.memory_space<vmem>>, %arg4: memref<1x32xf32, #tpu.memory_space<vmem>>, %arg5: memref<1x128x32xf32, #tpu.memory_space<vmem>>, %arg6: memref<128x384xf32, #tpu.memory_space<vmem>>) attributes {dimension_semantics = [#tpu.dimension_semantics<parallel>], iteration_bounds = array<i64: 2>, scalar_prefetch = 0 : i64, scratch_operands = 1 : i64, tpu.core_type = #tpu.core_type<tc>, window_params = [{transform_indices = @transform_0, window_bounds = array<i64: 1, 128, 32>}, {transform_indices = @transform_1, window_bounds = array<i64: 1, 128, 128>}, {pipeline_mode = #tpu.pipeline_mode<synchronous>, transform_indices = @transform_2, window_bounds = array<i64: 32, 384>}, {pipeline_mode = #tpu.pipeline_mode<synchronous>, transform_indices = @transform_3, window_bounds = array<i64: 1, 32>}, {transform_indices = @transform_4, window_bounds = array<i64: 1, 128, 32>}]} {
    %c0 = arith.constant 0 : index
    %c0_0 = arith.constant 0 : index
    %c0_1 = arith.constant 0 : index
    %0 = vector.load %arg1[%c0, %c0_0, %c0_1] : memref<1x128x32xf32, #tpu.memory_space<vmem>>, vector<1x128x32xf32>
    %1 = vector.shape_cast %0 : vector<1x128x32xf32> to vector<128x32xf32>
    %c0_2 = arith.constant 0 : index
    %c0_3 = arith.constant 0 : index
    %2 = vector.load %arg3[%c0_2, %c0_3] : memref<32x384xf32, #tpu.memory_space<vmem>>, vector<32x384xf32>
    %cst = arith.constant dense<0.000000e+00> : vector<128x384xf32>
    %3 = tpu.matmul %1, %2, %cst {dimension_numbers = #tpu.dot_dimension_numbers<[1], [0], [0], [1], [0, 0, 1, 1], [], []>} : vector<128x32xf32>, vector<32x384xf32>, vector<128x384xf32> -> vector<128x384xf32>
    %c0_4 = arith.constant 0 : index
    %c0_5 = arith.constant 0 : index
    %4 = vector.load %arg6[%c0_4, %c0_5] : memref<128x384xf32, #tpu.memory_space<vmem>>, vector<128x384xf32>
    tpu.vector_store %arg6[%c0_4, %c0_5], %3 {strides = array<i32>} : memref<128x384xf32, #tpu.memory_space<vmem>>, vector<128x384xf32>,
    %cst_6 = arith.constant 0.000000e+00 : f32
    %5 = vector.broadcast %cst_6 : f32 to vector<128x32xf32>
    %c0_7 = arith.constant 0 : index
    %c0_8 = arith.constant 0 : index
    %6 = vector.load %arg6[%c0_7, %c0_8] : memref<128x384xf32, #tpu.memory_space<vmem>>, vector<128x32xf32>
    %c0_9 = arith.constant 0 : index
    %c128 = arith.constant 128 : index
    %7 = vector.load %arg6[%c0_9, %c128] : memref<128x384xf32, #tpu.memory_space<vmem>>, vector<128x32xf32>
    %c0_10 = arith.constant 0 : index
    %c256 = arith.constant 256 : index
    %8 = vector.load %arg6[%c0_10, %c256] : memref<128x384xf32, #tpu.memory_space<vmem>>, vector<128x32xf32>
    %cst_11 = arith.constant dense<0.000000e+00> : vector<128x128xf32>
    %9 = tpu.matmul %6, %7, %cst_11 {dimension_numbers = #tpu.dot_dimension_numbers<[1], [1], [0], [0], [0, 0, 1, 0], [], []>} : vector<128x32xf32>, vector<128x32xf32>, vector<128x128xf32> -> vector<128x128xf32>
    %10 = math.tanh %9 : vector<128x128xf32>
    %cst_12 = arith.constant 8.000000e+00 : f32
    %11 = vector.broadcast %cst_12 : f32 to vector<128x128xf32>
    %12 = arith.mulf %10, %11 : vector<128x128xf32>
    %13 = math.exp %12 : vector<128x128xf32>
    %c0_13 = arith.constant 0 : index
    %c0_14 = arith.constant 0 : index
    %c0_15 = arith.constant 0 : index
    %14 = vector.load %arg2[%c0_13, %c0_14, %c0_15] : memref<1x128x128xi8, #tpu.memory_space<vmem>>, vector<1x128x128xi8>
    %15 = vector.shape_cast %14 : vector<1x128x128xi8> to vector<128x128xi8>
    %c0_i8 = arith.constant 0 : i8
    %16 = vector.broadcast %c0_i8 : i8 to vector<128x128xi8>
    %17 = arith.cmpi ne, %15, %16 : vector<128x128xi8>
    %cst_16 = arith.constant 0.000000e+00 : f32
    %18 = vector.broadcast %cst_16 : f32 to vector<128x128xf32>
    %19 = arith.select %17, %13, %18 : vector<128x128xi1>, vector<128x128xf32>
    %cst_17 = arith.constant dense<0.000000e+00> : vector<128xf32>
    %20 = vector.multi_reduction <add>, %19, %cst_17 [1] : vector<128x128xf32> to vector<128xf32>
    %21 = vector.shape_cast %20 : vector<128xf32> to vector<128x1xf32>
    %cst_18 = arith.constant dense<0.000000e+00> : vector<128x32xf32>
    %22 = tpu.matmul %19, %8, %cst_18 {dimension_numbers = #tpu.dot_dimension_numbers<[1], [0], [0], [1], [0, 0, 1, 1], [], []>} : vector<128x128xf32>, vector<128x32xf32>, vector<128x32xf32> -> vector<128x32xf32>
    %23 = tpu.reciprocal %21 : vector<128x1xf32> -> vector<128x1xf32>
    %24 = vector.broadcast %23 : vector<128x1xf32> to vector<128x32xf32>
    %25 = arith.mulf %22, %24 : vector<128x32xf32>
    %26 = arith.addf %5, %25 : vector<128x32xf32>
    %c0_19 = arith.constant 0 : index
    %c32 = arith.constant 32 : index
    %27 = vector.load %arg6[%c0_19, %c32] : memref<128x384xf32, #tpu.memory_space<vmem>>, vector<128x32xf32>
    %c0_20 = arith.constant 0 : index
    %c160 = arith.constant 160 : index
    %28 = vector.load %arg6[%c0_20, %c160] : memref<128x384xf32, #tpu.memory_space<vmem>>, vector<128x32xf32>
    %c0_21 = arith.constant 0 : index
    %c288 = arith.constant 288 : index
    %29 = vector.load %arg6[%c0_21, %c288] : memref<128x384xf32, #tpu.memory_space<vmem>>, vector<128x32xf32>
    %cst_22 = arith.constant dense<0.000000e+00> : vector<128x128xf32>
    %30 = tpu.matmul %27, %28, %cst_22 {dimension_numbers = #tpu.dot_dimension_numbers<[1], [1], [0], [0], [0, 0, 1, 0], [], []>} : vector<128x32xf32>, vector<128x32xf32>, vector<128x128xf32> -> vector<128x128xf32>
    %31 = math.tanh %30 : vector<128x128xf32>
    %cst_23 = arith.constant 8.000000e+00 : f32
    %32 = vector.broadcast %cst_23 : f32 to vector<128x128xf32>
    %33 = arith.mulf %31, %32 : vector<128x128xf32>
    %34 = math.exp %33 : vector<128x128xf32>
    %c0_24 = arith.constant 0 : index
    %c0_25 = arith.constant 0 : index
    %c0_26 = arith.constant 0 : index
    %35 = vector.load %arg2[%c0_24, %c0_25, %c0_26] : memref<1x128x128xi8, #tpu.memory_space<vmem>>, vector<1x128x128xi8>
    %36 = vector.shape_cast %35 : vector<1x128x128xi8> to vector<128x128xi8>
    %c0_i8_27 = arith.constant 0 : i8
    %37 = vector.broadcast %c0_i8_27 : i8 to vector<128x128xi8>
    %38 = arith.cmpi ne, %36, %37 : vector<128x128xi8>
    %cst_28 = arith.constant 0.000000e+00 : f32
    %39 = vector.broadcast %cst_28 : f32 to vector<128x128xf32>
    %40 = arith.select %38, %34, %39 : vector<128x128xi1>, vector<128x128xf32>
    %cst_29 = arith.constant dense<0.000000e+00> : vector<128xf32>
    %41 = vector.multi_reduction <add>, %40, %cst_29 [1] : vector<128x128xf32> to vector<128xf32>
    %42 = vector.shape_cast %41 : vector<128xf32> to vector<128x1xf32>
    %cst_30 = arith.constant dense<0.000000e+00> : vector<128x32xf32>
    %43 = tpu.matmul %40, %29, %cst_30 {dimension_numbers = #tpu.dot_dimension_numbers<[1], [0], [0], [1], [0, 0, 1, 1], [], []>} : vector<128x128xf32>, vector<128x32xf32>, vector<128x32xf32> -> vector<128x32xf32>
    %44 = tpu.reciprocal %42 : vector<128x1xf32> -> vector<128x1xf32>
    %45 = vector.broadcast %44 : vector<128x1xf32> to vector<128x32xf32>
    %46 = arith.mulf %43, %45 : vector<128x32xf32>
    %47 = arith.addf %26, %46 : vector<128x32xf32>
    %c0_31 = arith.constant 0 : index
    %c64 = arith.constant 64 : index
    %48 = vector.load %arg6[%c0_31, %c64] : memref<128x384xf32, #tpu.memory_space<vmem>>, vector<128x32xf32>
    %c0_32 = arith.constant 0 : index
    %c192 = arith.constant 192 : index
    %49 = vector.load %arg6[%c0_32, %c192] : memref<128x384xf32, #tpu.memory_space<vmem>>, vector<128x32xf32>
    %c0_33 = arith.constant 0 : index
    %c320 = arith.constant 320 : index
    %50 = vector.load %arg6[%c0_33, %c320] : memref<128x384xf32, #tpu.memory_space<vmem>>, vector<128x32xf32>
    %cst_34 = arith.constant dense<0.000000e+00> : vector<128x128xf32>
    %51 = tpu.matmul %48, %49, %cst_34 {dimension_numbers = #tpu.dot_dimension_numbers<[1], [1], [0], [0], [0, 0, 1, 0], [], []>} : vector<128x32xf32>, vector<128x32xf32>, vector<128x128xf32> -> vector<128x128xf32>
    %52 = math.tanh %51 : vector<128x128xf32>
    %cst_35 = arith.constant 8.000000e+00 : f32
    %53 = vector.broadcast %cst_35 : f32 to vector<128x128xf32>
    %54 = arith.mulf %52, %53 : vector<128x128xf32>
    %55 = math.exp %54 : vector<128x128xf32>
    %c0_36 = arith.constant 0 : index
    %c0_37 = arith.constant 0 : index
    %c0_38 = arith.constant 0 : index
    %56 = vector.load %arg2[%c0_36, %c0_37, %c0_38] : memref<1x128x128xi8, #tpu.memory_space<vmem>>, vector<1x128x128xi8>
    %57 = vector.shape_cast %56 : vector<1x128x128xi8> to vector<128x128xi8>
    %c0_i8_39 = arith.constant 0 : i8
    %58 = vector.broadcast %c0_i8_39 : i8 to vector<128x128xi8>
    %59 = arith.cmpi ne, %57, %58 : vector<128x128xi8>
    %cst_40 = arith.constant 0.000000e+00 : f32
    %60 = vector.broadcast %cst_40 : f32 to vector<128x128xf32>
    %61 = arith.select %59, %55, %60 : vector<128x128xi1>, vector<128x128xf32>
    %cst_41 = arith.constant dense<0.000000e+00> : vector<128xf32>
    %62 = vector.multi_reduction <add>, %61, %cst_41 [1] : vector<128x128xf32> to vector<128xf32>
    %63 = vector.shape_cast %62 : vector<128xf32> to vector<128x1xf32>
    %cst_42 = arith.constant dense<0.000000e+00> : vector<128x32xf32>
    %64 = tpu.matmul %61, %50, %cst_42 {dimension_numbers = #tpu.dot_dimension_numbers<[1], [0], [0], [1], [0, 0, 1, 1], [], []>} : vector<128x128xf32>, vector<128x32xf32>, vector<128x32xf32> -> vector<128x32xf32>
    %65 = tpu.reciprocal %63 : vector<128x1xf32> -> vector<128x1xf32>
    %66 = vector.broadcast %65 : vector<128x1xf32> to vector<128x32xf32>
    %67 = arith.mulf %64, %66 : vector<128x32xf32>
    %68 = arith.addf %47, %67 : vector<128x32xf32>
    %c0_43 = arith.constant 0 : index
    %c96 = arith.constant 96 : index
    %69 = vector.load %arg6[%c0_43, %c96] : memref<128x384xf32, #tpu.memory_space<vmem>>, vector<128x32xf32>
    %c0_44 = arith.constant 0 : index
    %c224 = arith.constant 224 : index
    %70 = vector.load %arg6[%c0_44, %c224] : memref<128x384xf32, #tpu.memory_space<vmem>>, vector<128x32xf32>
    %c0_45 = arith.constant 0 : index
    %c352 = arith.constant 352 : index
    %71 = vector.load %arg6[%c0_45, %c352] : memref<128x384xf32, #tpu.memory_space<vmem>>, vector<128x32xf32>
    %cst_46 = arith.constant dense<0.000000e+00> : vector<128x128xf32>
    %72 = tpu.matmul %69, %70, %cst_46 {dimension_numbers = #tpu.dot_dimension_numbers<[1], [1], [0], [0], [0, 0, 1, 0], [], []>} : vector<128x32xf32>, vector<128x32xf32>, vector<128x128xf32> -> vector<128x128xf32>
    %73 = math.tanh %72 : vector<128x128xf32>
    %cst_47 = arith.constant 8.000000e+00 : f32
    %74 = vector.broadcast %cst_47 : f32 to vector<128x128xf32>
    %75 = arith.mulf %73, %74 : vector<128x128xf32>
    %76 = math.exp %75 : vector<128x128xf32>
    %c0_48 = arith.constant 0 : index
    %c0_49 = arith.constant 0 : index
    %c0_50 = arith.constant 0 : index
    %77 = vector.load %arg2[%c0_48, %c0_49, %c0_50] : memref<1x128x128xi8, #tpu.memory_space<vmem>>, vector<1x128x128xi8>
    %78 = vector.shape_cast %77 : vector<1x128x128xi8> to vector<128x128xi8>
    %c0_i8_51 = arith.constant 0 : i8
    %79 = vector.broadcast %c0_i8_51 : i8 to vector<128x128xi8>
    %80 = arith.cmpi ne, %78, %79 : vector<128x128xi8>
    %cst_52 = arith.constant 0.000000e+00 : f32
    %81 = vector.broadcast %cst_52 : f32 to vector<128x128xf32>
    %82 = arith.select %80, %76, %81 : vector<128x128xi1>, vector<128x128xf32>
    %cst_53 = arith.constant dense<0.000000e+00> : vector<128xf32>
    %83 = vector.multi_reduction <add>, %82, %cst_53 [1] : vector<128x128xf32> to vector<128xf32>
    %84 = vector.shape_cast %83 : vector<128xf32> to vector<128x1xf32>
    %cst_54 = arith.constant dense<0.000000e+00> : vector<128x32xf32>
    %85 = tpu.matmul %82, %71, %cst_54 {dimension_numbers = #tpu.dot_dimension_numbers<[1], [0], [0], [1], [0, 0, 1, 1], [], []>} : vector<128x128xf32>, vector<128x32xf32>, vector<128x32xf32> -> vector<128x32xf32>
    %86 = tpu.reciprocal %84 : vector<128x1xf32> -> vector<128x1xf32>
    %87 = vector.broadcast %86 : vector<128x1xf32> to vector<128x32xf32>
    %88 = arith.mulf %85, %87 : vector<128x32xf32>
    %89 = arith.addf %68, %88 : vector<128x32xf32>
    %c0_55 = arith.constant 0 : index
    %c0_56 = arith.constant 0 : index
    %90 = vector.load %arg4[%c0_55, %c0_56] : memref<1x32xf32, #tpu.memory_space<vmem>>, vector<1x32xf32>
    %91 = vector.broadcast %90 : vector<1x32xf32> to vector<128x32xf32>
    %92 = arith.addf %89, %91 : vector<128x32xf32>
    %c0_57 = arith.constant 0 : index
    %c0_58 = arith.constant 0 : index
    %c0_59 = arith.constant 0 : index
    %93 = vector.load %arg5[%c0_57, %c0_58, %c0_59] : memref<1x128x32xf32, #tpu.memory_space<vmem>>, vector<1x128x32xf32>
    %94 = vector.shape_cast %93 : vector<1x128x32xf32> to vector<128x32xf32>
    %95 = vector.shape_cast %92 : vector<128x32xf32> to vector<1x128x32xf32>
    tpu.vector_store %arg5[%c0_57, %c0_58, %c0_59], %95 {strides = array<i32>} : memref<1x128x32xf32, #tpu.memory_space<vmem>>, vector<1x128x32xf32>,
    return
  }
  func.func @transform_0(%arg0: i32) -> (i32, i32, i32) {
    %c0_i32 = arith.constant 0 : i32
    %c0_i32_0 = arith.constant 0 : i32
    %c0_i32_1 = arith.constant 0 : i32
    return %arg0, %c0_i32, %c0_i32_0 : i32, i32, i32
  }
  func.func @transform_1(%arg0: i32) -> (i32, i32, i32) {
    %c0_i32 = arith.constant 0 : i32
    %c0_i32_0 = arith.constant 0 : i32
    %c0_i32_1 = arith.constant 0 : i32
    return %arg0, %c0_i32, %c0_i32_0 : i32, i32, i32
  }
  func.func @transform_2(%arg0: i32) -> (i32, i32) {
    %c0_i32 = arith.constant 0 : i32
    %c0_i32_0 = arith.constant 0 : i32
    %c0_i32_1 = arith.constant 0 : i32
    return %c0_i32, %c0_i32_0 : i32, i32
  }
  func.func @transform_3(%arg0: i32) -> (i32, i32) {
    %c0_i32 = arith.constant 0 : i32
    %c0_i32_0 = arith.constant 0 : i32
    %c0_i32_1 = arith.constant 0 : i32
    return %c0_i32, %c0_i32_0 : i32, i32
  }
  func.func @transform_4(%arg0: i32) -> (i32, i32, i32) {
    %c0_i32 = arith.constant 0 : i32
    %c0_i32_0 = arith.constant 0 : i32
    %c0_i32_1 = arith.constant 0 : i32
    return %arg0, %c0_i32, %c0_i32_0 : i32, i32, i32
  }
}

</mosaic_0001>

<llo_original>
// kernel: tpu_custom_call.1
$region0: #{tpu_custom_call.1}
  #allocation0 [shape = 'u32[]', space=smem, size = 0x4, offset = 0x4, fixed_abs, tag = 'smem constant byte address 0x4 - core index']
  #allocation1 [shape = 'u32[144,128]{1,0:T(1,128)}', space=vmem, size = 0x12000, scoped, tag = 'internal scratch']
  #allocation2 [shape = 'f32[128,384]{1,0:T(8,128)}', space=vmem, size = 0x30000, scoped, tag = 'scratch operand']
  %s0 = inlined_call_operand.vmem [shape: f32[2,128,32], index: 0, kind: input, shape index: {}]
  %s1 = inlined_call_operand.vmem [shape: s8[2,128,128], index: 1, kind: input, shape index: {}]
  %s2 = inlined_call_operand.vmem [shape: f32[32,384], index: 2, kind: input, shape index: {}]
  %s3 = inlined_call_operand.vmem [shape: f32[1,32], index: 3, kind: input, shape index: {}]
  %s4 = inlined_call_operand.vmem [shape: f32[2,128,32], index: 4, kind: output, shape index: {}]
  %s5 = sld [smem:[#allocation0]]
  $region49: #{tpu_custom_call.1} parent=0
    _
  %s7 = ssub.s32 1, %s5
  %s8 = scalar_select 0, %s7, %s5
  loop: start=0, step=1, limit=4
  $region2: #{tpu_custom_call.1} parent=0 // loop_pre_header
    _
  $region3: #{tpu_custom_call.1} parent=0 // loop_header
    %s10 = sphi 0, %s14
    %p11 = scmp.ge.s32.totalorder %s10, 4
    %s20 = sphi 0, %s22
    %s23 = sphi 0, %s20
    %s24 = sphi 0, %s23
    %s40 = sphi 0, %s24
    %s46 = sphi 0, %s48
    %s49 = sphi 0, %s46
    %s50 = sphi 0, %s49
    %s66 = sphi 0, %s50
    %s70 = sphi 0, %s70
    %s72 = sphi 0, %s70
    %s73 = sphi 0, %s72
    %s87 = sphi 0, %s73
    %s91 = sphi 0, %s91
    %s93 = sphi 0, %s91
    %s94 = sphi 0, %s93
    %s108 = sphi 0, %s94
    %s114 = sphi 0, %s116
    %s117 = sphi 0, %s114
    %s118 = sphi 0, %s117
    %s134 = sphi 0, %s118
  $region4: #{tpu_custom_call.1} parent=0 // loop_header_branch
    %13 = sbr.rel (%p11) target = $region8
  $region5: #{tpu_custom_call.1} parent=0 // loop_body
    %s15 = ssub.s32 %s10, 1
    %s16 = ssub.s32 %s10, 2
    %s17 = sadd.s32 %s10, 1
    %s18 = ssub.s32 %s10, %s17
    %p19 = scmp.eq.s32.totalorder %s18, 0
    %s21 = sadd.s32 %s20, 1
    %s22 = scalar_select %p19, %s20, %s21
    %p25 = pneg %p19
    %p26 = scmp.eq.s32.totalorder %s10, 1
    %p27 = por %p25, %p26
    %p28 = scmp.ne.s32.totalorder %s20, %s23
    %p29 = scmp.eq.s32.totalorder %s10, 0
    %p30 = por %p28, %p29
    %p31 = scmp.ne.s32.totalorder %s20, %s23
    %p32 = scmp.eq.s32.totalorder %s15, 1
    %p33 = por %p31, %p32
    %p34 = scmp.ne.s32.totalorder %s23, %s24
    %p35 = scmp.eq.s32.totalorder %s15, 0
    %p36 = por %p34, %p35
    %p37 = scmp.ne.s32.totalorder %s23, %s24
    %p38 = scmp.eq.s32.totalorder %s16, 1
    %p39 = por %p37, %p38
    %p41 = scmp.ne.s32.totalorder %s24, %s40
    %p42 = scmp.eq.s32.totalorder %s16, 0
    %p43 = por %p41, %p42
    %s44 = ssub.s32 %s10, %s17
    %p45 = scmp.eq.s32.totalorder %s44, 0
    %s47 = sadd.s32 %s46, 1
    %s48 = scalar_select %p45, %s46, %s47
    %p51 = pneg %p45
    %p52 = scmp.eq.s32.totalorder %s10, 1
    %p53 = por %p51, %p52
    %p54 = scmp.ne.s32.totalorder %s46, %s49
    %p55 = scmp.eq.s32.totalorder %s10, 0
    %p56 = por %p54, %p55
    %p57 = scmp.ne.s32.totalorder %s46, %s49
    %p58 = scmp.eq.s32.totalorder %s15, 1
    %p59 = por %p57, %p58
    %p60 = scmp.ne.s32.totalorder %s49, %s50
    %p61 = scmp.eq.s32.totalorder %s15, 0
    %p62 = por %p60, %p61
    %p63 = scmp.ne.s32.totalorder %s49, %s50
    %p64 = scmp.eq.s32.totalorder %s16, 1
    %p65 = por %p63, %p64
    %p67 = scmp.ne.s32.totalorder %s50, %s66
    %p68 = scmp.eq.s32.totalorder %s16, 0
    %p69 = por %p67, %p68
    %s71 = sadd.s32 %s70, 1
    %p74 = scmp.eq.s32.totalorder %s10, 1
    %p75 = scmp.ne.s32.totalorder %s70, %s72
    %p76 = scmp.eq.s32.totalorder %s10, 0
    %p77 = por %p75, %p76
    %p78 = scmp.ne.s32.totalorder %s70, %s72
    %p79 = scmp.eq.s32.totalorder %s15, 1
    %p80 = por %p78, %p79
    %p81 = scmp.ne.s32.totalorder %s72, %s73
    %p82 = scmp.eq.s32.totalorder %s15, 0
    %p83 = por %p81, %p82
    %p84 = scmp.ne.s32.totalorder %s72, %s73
    %p85 = scmp.eq.s32.totalorder %s16, 1
    %p86 = por %p84, %p85
    %p88 = scmp.ne.s32.totalorder %s73, %s87
    %p89 = scmp.eq.s32.totalorder %s16, 0
    %p90 = por %p88, %p89
    %s92 = sadd.s32 %s91, 1
    %p95 = scmp.eq.s32.totalorder %s10, 1
    %p96 = scmp.ne.s32.totalorder %s91, %s93
    %p97 = scmp.eq.s32.totalorder %s10, 0
    %p98 = por %p96, %p97
    %p99 = scmp.ne.s32.totalorder %s91, %s93
    %p100 = scmp.eq.s32.totalorder %s15, 1
    %p101 = por %p99, %p100
    %p102 = scmp.ne.s32.totalorder %s93, %s94
    %p103 = scmp.eq.s32.totalorder %s15, 0
    %p104 = por %p102, %p103
    %p105 = scmp.ne.s32.totalorder %s93, %s94
    %p106 = scmp.eq.s32.totalorder %s16, 1
    %p107 = por %p105, %p106
    %p109 = scmp.ne.s32.totalorder %s94, %s108
    %p110 = scmp.eq.s32.totalorder %s16, 0
    %p111 = por %p109, %p110
    %s112 = ssub.s32 %s10, %s17
    %p113 = scmp.eq.s32.totalorder %s112, 0
    %s115 = sadd.s32 %s114, 1
    %s116 = scalar_select %p113, %s114, %s115
    %p119 = pneg %p113
    %p120 = scmp.eq.s32.totalorder %s10, 1
    %p121 = por %p119, %p120
    %p122 = scmp.ne.s32.totalorder %s114, %s117
    %p123 = scmp.eq.s32.totalorder %s10, 0
    %p124 = por %p122, %p123
    %p125 = scmp.ne.s32.totalorder %s114, %s117
    %p126 = scmp.eq.s32.totalorder %s15, 1
    %p127 = por %p125, %p126
    %p128 = scmp.ne.s32.totalorder %s117, %s118
    %p129 = scmp.eq.s32.totalorder %s15, 0
    %p130 = por %p128, %p129
    %p131 = scmp.ne.s32.totalorder %s117, %s118
    %p132 = scmp.eq.s32.totalorder %s16, 1
    %p133 = por %p131, %p132
    %p135 = scmp.ne.s32.totalorder %s118, %s134
    %p136 = scmp.eq.s32.totalorder %s16, 0
    %p137 = por %p135, %p136
    %p138 = scmp.le.s32.totalorder 1, %s10
    %p139 = scmp.lt.s32.totalorder %s10, 3
    %p140 = pnand %p138, %p139
    %p141 = pneg %p140
    // Predicated region
    $region9: #{tpu_custom_call.1} parent=5 // pred_check
      _
    $region10: #{tpu_custom_call.1} parent=5 // pred_check_branch
      %143 = sbr.rel (%p140) target = $region12
    $region11: #{tpu_custom_call.1} parent=5 // pred_region
      %s144 = ssub.s32 %s10, 1
      // Predicated region
      $region13: #{tpu_custom_call.1} parent=11 // pred_check
        %p145 = pneg %p83
      $region14: #{tpu_custom_call.1} parent=11 // pred_check_branch
        %147 = sbr.rel (%p145) target = $region16
      $region15: #{tpu_custom_call.1} parent=11 // pred_region
        _
      $region16: #{tpu_custom_call.1} parent=11 // pred_fallthru
        _
      // Predicated region
      $region17: #{tpu_custom_call.1} parent=11 // pred_check
        %p148 = pneg %p104
      $region18: #{tpu_custom_call.1} parent=11 // pred_check_branch
        %150 = sbr.rel (%p148) target = $region20
      $region19: #{tpu_custom_call.1} parent=11 // pred_region
        _
      $region20: #{tpu_custom_call.1} parent=11 // pred_fallthru
        _
    $region12: #{tpu_custom_call.1} parent=5 // pred_fallthru
      _
    %p151 = scmp.lt.s32.totalorder %s10, 2
    // Predicated region
    $region21: #{tpu_custom_call.1} parent=5 // pred_check
      %p152 = pneg %p151
    $region22: #{tpu_custom_call.1} parent=5 // pred_check_branch
      %154 = sbr.rel (%p152) target = $region24
    $region23: #{tpu_custom_call.1} parent=5 // pred_region
      // Predicated region
      $region25: #{tpu_custom_call.1} parent=23 // pred_check
        %p155 = pneg %p30
      $region26: #{tpu_custom_call.1} parent=23 // pred_check_branch
        %157 = sbr.rel (%p155) target = $region28
      $region27: #{tpu_custom_call.1} parent=23 // pred_region
        %p158 = scmp.lt.s32.totalorder %s10, 1
        %s159 = scalar_select %p158, %s10, 1
        %s160 = smul.addr %s159, 16
        %s161 = smul.addr %s160, 8
        %s162 = scalar_lea.vmem %s0, %s161
      $region28: #{tpu_custom_call.1} parent=23 // pred_fallthru
        _
      // Predicated region
      $region29: #{tpu_custom_call.1} parent=23 // pred_check
        %p163 = pneg %p56
      $region30: #{tpu_custom_call.1} parent=23 // pred_check_branch
        %165 = sbr.rel (%p163) target = $region32
      $region31: #{tpu_custom_call.1} parent=23 // pred_region
        %p166 = scmp.lt.s32.totalorder %s10, 1
        %s167 = scalar_select %p166, %s10, 1
        %s168 = smul.addr %s167, 4
        %s169 = smul.addr %s168, 8
        %s170 = scalar_lea.vmem %s1, %s169
      $region32: #{tpu_custom_call.1} parent=23 // pred_fallthru
        _
    $region24: #{tpu_custom_call.1} parent=5 // pred_fallthru
      _
    %p171 = scmp.le.s32.totalorder 1, %s10
    %p172 = scmp.lt.s32.totalorder %s10, 3
    %p173 = pnand %p171, %p172
    %p174 = pneg %p173
    // Predicated region
    $region33: #{tpu_custom_call.1} parent=5 // pred_check
      _
    $region34: #{tpu_custom_call.1} parent=5 // pred_check_branch
      %176 = sbr.rel (%p173) target = $region36
    $region35: #{tpu_custom_call.1} parent=5 // pred_region
      %s177 = ssub.s32 %s10, 1
      %p178 = scmp.lt.s32.totalorder %s15, 1
      %s179 = scalar_select %p178, %s15, 1
      %s180 = smul.addr %s179, 16
      %s181 = smul.addr %s180, 8
      %s182 = scalar_lea.vmem %s0, %s181
      %p183 = pneg %p36
      %p184 = pneg %p33
      %p185 = scmp.lt.s32.totalorder %s15, 1
      %s186 = scalar_select %p185, %s15, 1
      %s187 = smul.addr %s186, 4
      %s188 = smul.addr %s187, 8
      %s189 = scalar_lea.vmem %s1, %s188
      %p190 = pneg %p62
      %p191 = pneg %p59
      %p192 = pneg %p83
      %p193 = pneg %p80
      %p194 = pneg %p104
      %p195 = pneg %p101
      %p196 = pneg %p130
      %p197 = pneg %p127
      %p198 = scmp.lt.s32.totalorder %s15, 1
      %s199 = scalar_select %p198, %s15, 1
      %s200 = smul.addr %s199, 16
      %s201 = smul.addr %s200, 8
      %s202 = scalar_lea.vmem %s4, %s201
      %p203 = scmp.lt.s32.totalorder %s15, 1
      %s204 = scalar_select %p203, %s15, 1
      %s205 = smul.addr %s204, 16
      %s206 = smul.addr %s205, 8
      %s207 = scalar_lea.vmem %s0, %s206
      %p208 = scmp.lt.s32.totalorder %s15, 1
      %s209 = scalar_select %p208, %s15, 1
      %s210 = smul.addr %s209, 4
      %s211 = smul.addr %s210, 8
      %s212 = scalar_lea.vmem %s1, %s211
      %p213 = scmp.lt.s32.totalorder %s15, 1
      %s214 = scalar_select %p213, %s15, 1
      %s215 = smul.addr %s214, 16
      %s216 = smul.addr %s215, 8
      %s217 = scalar_lea.vmem %s4, %s216
      %v220 = vld [vmem:[%s207] sm:$0xff]
      %v221 = vld [vmem:[%s207 + $0x8] sm:$0xff]
      %v222 = vld [vmem:[%s207 + $0x10] sm:$0xff]
      %v223 = vld [vmem:[%s207 + $0x18] sm:$0xff]
      %v224 = vld [vmem:[%s207 + $0x20] sm:$0xff]
      %v225 = vld [vmem:[%s207 + $0x28] sm:$0xff]
      %v226 = vld [vmem:[%s207 + $0x30] sm:$0xff]
      %v227 = vld [vmem:[%s207 + $0x38] sm:$0xff]
      %v228 = vld [vmem:[%s207 + $0x40] sm:$0xff]
      %v229 = vld [vmem:[%s207 + $0x48] sm:$0xff]
      %v230 = vld [vmem:[%s207 + $0x50] sm:$0xff]
      %v231 = vld [vmem:[%s207 + $0x58] sm:$0xff]
      %v232 = vld [vmem:[%s207 + $0x60] sm:$0xff]
      %v233 = vld [vmem:[%s207 + $0x68] sm:$0xff]
      %v234 = vld [vmem:[%s207 + $0x70] sm:$0xff]
      %v235 = vld [vmem:[%s207 + $0x78] sm:$0xff]
      %v236 = vld [vmem:[%s2] sm:$0xff]
      %v237 = vld [vmem:[%s2 + $0x8] sm:$0xff]
      %v238 = vld [vmem:[%s2 + $0x10] sm:$0xff]
      %v239 = vld [vmem:[%s2 + $0x18] sm:$0xff]
      %v240 = vld [vmem:[%s2 + $0x20] sm:$0xff]
      %v241 = vld [vmem:[%s2 + $0x28] sm:$0xff]
      %v242 = vld [vmem:[%s2 + $0x30] sm:$0xff]
      %v243 = vld [vmem:[%s2 + $0x38] sm:$0xff]
      %v244 = vld [vmem:[%s2 + $0x40] sm:$0xff]
      %v245 = vld [vmem:[%s2 + $0x48] sm:$0xff]
      %v246 = vld [vmem:[%s2 + $0x50] sm:$0xff]
      %v247 = vld [vmem:[%s2 + $0x58] sm:$0xff]
      %vm248 = vcmask 261120
      %v250 = vsel %vm248, %v220, 0
      %v253 = vsel %vm248, %v221, 0
      %v256 = vsel %vm248, %v222, 0
      %v259 = vsel %vm248, %v223, 0
      %v262 = vsel %vm248, %v224, 0
      %v265 = vsel %vm248, %v225, 0
      %v268 = vsel %vm248, %v226, 0
      %v271 = vsel %vm248, %v227, 0
      %v274 = vsel %vm248, %v228, 0
      %v277 = vsel %vm248, %v229, 0
      %v280 = vsel %vm248, %v230, 0
      %v283 = vsel %vm248, %v231, 0
      %v286 = vsel %vm248, %v232, 0
      %v289 = vsel %vm248, %v233, 0
      %v292 = vsel %vm248, %v234, 0
      %v295 = vsel %vm248, %v235, 0
      %297 = vmatprep.subr.mxu0 0.0
      %298 = vmatpush1.msra.mxu0 0.0
      %299 = vmatprep.subr.mxu0 0.0
      %300 = vmatpush1.msra.mxu0 0.0
      %301 = vmatprep.subr.mxu0 0.0
      %302 = vmatpush1.msra.mxu0 0.0
      %303 = vmatprep.subr.mxu0 0.0
      %304 = vmatpush1.msra.mxu0 0.0
      %305 = vmatprep.subr.mxu0 0.0
      %306 = vmatpush1.msra.mxu0 0.0
      %307 = vmatprep.subr.mxu0 0.0
      %308 = vmatpush1.msra.mxu0 0.0
      %309 = vmatprep.subr.mxu0 0.0
      %310 = vmatpush1.msra.mxu0 0.0
      %311 = vmatprep.subr.mxu0 0.0
      %312 = vmatpush1.msra.mxu0 0.0
      %313 = vmatprep.subr.mxu0 0.0
      %314 = vmatpush1.msra.mxu0 0.0
      %315 = vmatprep.subr.mxu0 0.0
      %316 = vmatpush1.msra.mxu0 0.0
      %317 = vmatprep.subr.mxu0 0.0
      %318 = vmatpush1.msra.mxu0 0.0
      %319 = vmatprep.subr.mxu0 0.0
      %320 = vmatpush1.msra.mxu0 0.0
      %321 = vmatprep.subr.mxu0 %v246
      %322 = vmatpush1.msra.mxu0 %v245
      %323 = vmatprep.subr.mxu0 %v243
      %324 = vmatpush1.msra.mxu0 %v242
      %325 = vmatprep.subr.mxu0 %v240
      %326 = vmatpush1.msra.mxu0 %v239
      %327 = vmatprep.subr.mxu0 %v237
      %328 = vmatpush1.msra.mxu0 %v236
      %329 = vmatprep.subr.mxu0 0.0
      %330 = vmatpush2.msra.mxu0 0.0
      %331 = vmatprep.subr.mxu0 0.0
      %332 = vmatpush2.msra.mxu0 0.0
      %333 = vmatprep.subr.mxu0 0.0
      %334 = vmatpush2.msra.mxu0 0.0
      %335 = vmatprep.subr.mxu0 0.0
      %336 = vmatpush2.msra.mxu0 0.0
      %337 = vmatprep.subr.mxu0 0.0
      %338 = vmatpush2.msra.mxu0 0.0
      %339 = vmatprep.subr.mxu0 0.0
      %340 = vmatpush2.msra.mxu0 0.0
      %341 = vmatprep.subr.mxu0 0.0
      %342 = vmatpush2.msra.mxu0 0.0
      %343 = vmatprep.subr.mxu0 0.0
      %344 = vmatpush2.msra.mxu0 0.0
      %345 = vmatprep.subr.mxu0 0.0
      %346 = vmatpush2.msra.mxu0 0.0
      %347 = vmatprep.subr.mxu0 0.0
      %348 = vmatpush2.msra.mxu0 0.0
      %349 = vmatprep.subr.mxu0 0.0
      %350 = vmatpush2.msra.mxu0 0.0
      %351 = vmatprep.subr.mxu0 0.0
      %352 = vmatpush2.msra.mxu0 0.0
      %353 = vmatprep.subr.mxu0 0.0
      %354 = vmatpush2.msra.mxu0 0.0
      %355 = vmatprep.subr.mxu0 0.0
      %356 = vmatpush2.msra.mxu0 0.0
      %357 = vmatprep.subr.mxu0 0.0
      %358 = vmatpush2.msra.mxu0 0.0
      %359 = vmatprep.subr.mxu0 0.0
      %360 = vmatpush2.msra.mxu0 0.0
      %361 = vmatprep.mubr.f32.mxu0 0.0
      %362 = vmatmul.mubr.f32.gmra.mxu0 %v250
      %v363 = vpop.f32.mrf.mxu0
      %v364 = vadd.f32 0.0, %v363
      %v365 = vpop.f32.mrf.mxu0
      %v366 = vadd.f32 0.0, %v365
      %367 = vmatprep.mubr.f32.mxu0 0.0
      %368 = vmatmul.mubr.f32.gmra.mxu0 %v253
      %v369 = vpop.f32.mrf.mxu0
      %v370 = vadd.f32 0.0, %v369
      %v371 = vpop.f32.mrf.mxu0
      %v372 = vadd.f32 0.0, %v371
      %373 = vmatprep.mubr.f32.mxu0 0.0
      %374 = vmatmul.mubr.f32.gmra.mxu0 %v256
      %v375 = vpop.f32.mrf.mxu0
      %v376 = vadd.f32 0.0, %v375
      %v377 = vpop.f32.mrf.mxu0
      %v378 = vadd.f32 0.0, %v377
      %379 = vmatprep.mubr.f32.mxu0 0.0
      %380 = vmatmul.mubr.f32.gmra.mxu0 %v259
      %v381 = vpop.f32.mrf.mxu0
      %v382 = vadd.f32 0.0, %v381
      %v383 = vpop.f32.mrf.mxu0
      %v384 = vadd.f32 0.0, %v383
      %385 = vmatprep.mubr.f32.mxu0 0.0
      %386 = vmatmul.mubr.f32.gmra.mxu0 %v262
      %v387 = vpop.f32.mrf.mxu0
      %v388 = vadd.f32 0.0, %v387
      %v389 = vpop.f32.mrf.mxu0
      %v390 = vadd.f32 0.0, %v389
      %391 = vmatprep.mubr.f32.mxu0 0.0
      %392 = vmatmul.mubr.f32.gmra.mxu0 %v265
      %v393 = vpop.f32.mrf.mxu0
      %v394 = vadd.f32 0.0, %v393
      %v395 = vpop.f32.mrf.mxu0
      %v396 = vadd.f32 0.0, %v395
      %397 = vmatprep.mubr.f32.mxu0 0.0
      %398 = vmatmul.mubr.f32.gmra.mxu0 %v268
      %v399 = vpop.f32.mrf.mxu0
      %v400 = vadd.f32 0.0, %v399
      %v401 = vpop.f32.mrf.mxu0
      %v402 = vadd.f32 0.0, %v401
      %403 = vmatprep.mubr.f32.mxu0 0.0
      %404 = vmatmul.mubr.f32.gmra.mxu0 %v271
      %v405 = vpop.f32.mrf.mxu0
      %v406 = vadd.f32 0.0, %v405
      %v407 = vpop.f32.mrf.mxu0
      %v408 = vadd.f32 0.0, %v407
      %409 = vmatprep.mubr.f32.mxu0 0.0
      %410 = vmatmul.mubr.f32.gmra.mxu0 %v274
      %v411 = vpop.f32.mrf.mxu0
      %v412 = vadd.f32 0.0, %v411
      %v413 = vpop.f32.mrf.mxu0
      %v414 = vadd.f32 0.0, %v413
      %415 = vmatprep.mubr.f32.mxu0 0.0
      %416 = vmatmul.mubr.f32.gmra.mxu0 %v277
      %v417 = vpop.f32.mrf.mxu0
      %v418 = vadd.f32 0.0, %v417
      %v419 = vpop.f32.mrf.mxu0
      %v420 = vadd.f32 0.0, %v419
      %421 = vmatprep.mubr.f32.mxu0 0.0
      %422 = vmatmul.mubr.f32.gmra.mxu0 %v280
      %v423 = vpop.f32.mrf.mxu0
      %v424 = vadd.f32 0.0, %v423
      %v425 = vpop.f32.mrf.mxu0
      %v426 = vadd.f32 0.0, %v425
      %427 = vmatprep.mubr.f32.mxu0 0.0
      %428 = vmatmul.mubr.f32.gmra.mxu0 %v283
      %v429 = vpop.f32.mrf.mxu0
      %v430 = vadd.f32 0.0, %v429
      %v431 = vpop.f32.mrf.mxu0
      %v432 = vadd.f32 0.0, %v431
      %433 = vmatprep.mubr.f32.mxu0 0.0
      %434 = vmatmul.mubr.f32.gmra.mxu0 %v286
      %v435 = vpop.f32.mrf.mxu0
      %v436 = vadd.f32 0.0, %v435
      %v437 = vpop.f32.mrf.mxu0
      %v438 = vadd.f32 0.0, %v437
      %439 = vmatprep.mubr.f32.mxu0 0.0
      %440 = vmatmul.mubr.f32.gmra.mxu0 %v289
      %v441 = vpop.f32.mrf.mxu0
      %v442 = vadd.f32 0.0, %v441
      %v443 = vpop.f32.mrf.mxu0
      %v444 = vadd.f32 0.0, %v443
      %445 = vmatprep.mubr.f32.mxu0 0.0
      %446 = vmatmul.mubr.f32.gmra.mxu0 %v292
      %v447 = vpop.f32.mrf.mxu0
      %v448 = vadd.f32 0.0, %v447
      %v449 = vpop.f32.mrf.mxu0
      %v450 = vadd.f32 0.0, %v449
      %451 = vmatprep.mubr.f32.mxu0 0.0
      %452 = vmatmul.mubr.f32.gmra.mxu0 %v295
      %v453 = vpop.f32.mrf.mxu0
      %v454 = vadd.f32 0.0, %v453
      %v455 = vpop.f32.mrf.mxu0
      %v456 = vadd.f32 0.0, %v455
      %457 = vdwg.mxu0
      %458 = vmatprep.subr.mxu0 0.0
      %459 = vmatpush1.msra.mxu0 0.0
      %460 = vmatprep.subr.mxu0 0.0
      %461 = vmatpush1.msra.mxu0 0.0
      %462 = vmatprep.subr.mxu0 0.0
      %463 = vmatpush1.msra.mxu0 0.0
      %464 = vmatprep.subr.mxu0 0.0
      %465 = vmatpush1.msra.mxu0 0.0
      %466 = vmatprep.subr.mxu0 0.0
      %467 = vmatpush1.msra.mxu0 0.0
      %468 = vmatprep.subr.mxu0 0.0
      %469 = vmatpush1.msra.mxu0 0.0
      %470 = vmatprep.subr.mxu0 0.0
      %471 = vmatpush1.msra.mxu0 0.0
      %472 = vmatprep.subr.mxu0 0.0
      %473 = vmatpush1.msra.mxu0 0.0
      %474 = vmatprep.subr.mxu0 0.0
      %475 = vmatpush1.msra.mxu0 0.0
      %476 = vmatprep.subr.mxu0 0.0
      %477 = vmatpush1.msra.mxu0 0.0
      %478 = vmatprep.subr.mxu0 0.0
      %479 = vmatpush1.msra.mxu0 0.0
      %480 = vmatprep.subr.mxu0 0.0
      %481 = vmatpush1.msra.mxu0 0.0
      %482 = vmatprep.subr.mxu0 0.0
      %483 = vmatpush1.msra.mxu0 %v247
      %484 = vmatprep.subr.mxu0 0.0
      %485 = vmatpush1.msra.mxu0 %v244
      %486 = vmatprep.subr.mxu0 0.0
      %487 = vmatpush1.msra.mxu0 %v241
      %488 = vmatprep.subr.mxu0 0.0
      %489 = vmatpush1.msra.mxu0 %v238
      %490 = vmatprep.subr.mxu0 0.0
      %491 = vmatpush2.msra.mxu0 0.0
      %492 = vmatprep.subr.mxu0 0.0
      %493 = vmatpush2.msra.mxu0 0.0
      %494 = vmatprep.subr.mxu0 0.0
      %495 = vmatpush2.msra.mxu0 0.0
      %496 = vmatprep.subr.mxu0 0.0
      %497 = vmatpush2.msra.mxu0 0.0
      %498 = vmatprep.subr.mxu0 0.0
      %499 = vmatpush2.msra.mxu0 0.0
      %500 = vmatprep.subr.mxu0 0.0
      %501 = vmatpush2.msra.mxu0 0.0
      %502 = vmatprep.subr.mxu0 0.0
      %503 = vmatpush2.msra.mxu0 0.0
      %504 = vmatprep.subr.mxu0 0.0
      %505 = vmatpush2.msra.mxu0 0.0
      %506 = vmatprep.subr.mxu0 0.0
      %507 = vmatpush2.msra.mxu0 0.0
      %508 = vmatprep.subr.mxu0 0.0
      %509 = vmatpush2.msra.mxu0 0.0
      %510 = vmatprep.subr.mxu0 0.0
      %511 = vmatpush2.msra.mxu0 0.0
      %512 = vmatprep.subr.mxu0 0.0
      %513 = vmatpush2.msra.mxu0 0.0
      %514 = vmatprep.subr.mxu0 0.0
      %515 = vmatpush2.msra.mxu0 0.0
      %516 = vmatprep.subr.mxu0 0.0
      %517 = vmatpush2.msra.mxu0 0.0
      %518 = vmatprep.subr.mxu0 0.0
      %519 = vmatpush2.msra.mxu0 0.0
      %520 = vmatprep.subr.mxu0 0.0
      %521 = vmatpush2.msra.mxu0 0.0
      %522 = vmatprep.mubr.f32.mxu0 0.0
      %523 = vmatmul.mubr.f32.gmra.mxu0 %v250
      %v524 = vpop.f32.mrf.mxu0
      %v525 = vadd.f32 0.0, %v524
      %v526 = vpop.f32.mrf.mxu0
      %527 = vmatprep.mubr.f32.mxu0 0.0
      %528 = vmatmul.mubr.f32.gmra.mxu0 %v253
      %v529 = vpop.f32.mrf.mxu0
      %v530 = vadd.f32 0.0, %v529
      %v531 = vpop.f32.mrf.mxu0
      %532 = vmatprep.mubr.f32.mxu0 0.0
      %533 = vmatmul.mubr.f32.gmra.mxu0 %v256
      %v534 = vpop.f32.mrf.mxu0
      %v535 = vadd.f32 0.0, %v534
      %v536 = vpop.f32.mrf.mxu0
      %537 = vmatprep.mubr.f32.mxu0 0.0
      %538 = vmatmul.mubr.f32.gmra.mxu0 %v259
      %v539 = vpop.f32.mrf.mxu0
      %v540 = vadd.f32 0.0, %v539
      %v541 = vpop.f32.mrf.mxu0
      %542 = vmatprep.mubr.f32.mxu0 0.0
      %543 = vmatmul.mubr.f32.gmra.mxu0 %v262
      %v544 = vpop.f32.mrf.mxu0
      %v545 = vadd.f32 0.0, %v544
      %v546 = vpop.f32.mrf.mxu0
      %547 = vmatprep.mubr.f32.mxu0 0.0
      %548 = vmatmul.mubr.f32.gmra.mxu0 %v265
      %v549 = vpop.f32.mrf.mxu0
      %v550 = vadd.f32 0.0, %v549
      %v551 = vpop.f32.mrf.mxu0
      %552 = vmatprep.mubr.f32.mxu0 0.0
      %553 = vmatmul.mubr.f32.gmra.mxu0 %v268
      %v554 = vpop.f32.mrf.mxu0
      %v555 = vadd.f32 0.0, %v554
      %v556 = vpop.f32.mrf.mxu0
      %557 = vmatprep.mubr.f32.mxu0 0.0
      %558 = vmatmul.mubr.f32.gmra.mxu0 %v271
      %v559 = vpop.f32.mrf.mxu0
      %v560 = vadd.f32 0.0, %v559
      %v561 = vpop.f32.mrf.mxu0
      %562 = vmatprep.mubr.f32.mxu0 0.0
      %563 = vmatmul.mubr.f32.gmra.mxu0 %v274
      %v564 = vpop.f32.mrf.mxu0
      %v565 = vadd.f32 0.0, %v564
      %v566 = vpop.f32.mrf.mxu0
      %567 = vmatprep.mubr.f32.mxu0 0.0
      %568 = vmatmul.mubr.f32.gmra.mxu0 %v277
      %v569 = vpop.f32.mrf.mxu0
      %v570 = vadd.f32 0.0, %v569
      %v571 = vpop.f32.mrf.mxu0
      %572 = vmatprep.mubr.f32.mxu0 0.0
      %573 = vmatmul.mubr.f32.gmra.mxu0 %v280
      %v574 = vpop.f32.mrf.mxu0
      %v575 = vadd.f32 0.0, %v574
      %v576 = vpop.f32.mrf.mxu0
      %577 = vmatprep.mubr.f32.mxu0 0.0
      %578 = vmatmul.mubr.f32.gmra.mxu0 %v283
      %v579 = vpop.f32.mrf.mxu0
      %v580 = vadd.f32 0.0, %v579
      %v581 = vpop.f32.mrf.mxu0
      %582 = vmatprep.mubr.f32.mxu0 0.0
      %583 = vmatmul.mubr.f32.gmra.mxu0 %v286
      %v584 = vpop.f32.mrf.mxu0
      %v585 = vadd.f32 0.0, %v584
      %v586 = vpop.f32.mrf.mxu0
      %587 = vmatprep.mubr.f32.mxu0 0.0
      %588 = vmatmul.mubr.f32.gmra.mxu0 %v289
      %v589 = vpop.f32.mrf.mxu0
      %v590 = vadd.f32 0.0, %v589
      %v591 = vpop.f32.mrf.mxu0
      %592 = vmatprep.mubr.f32.mxu0 0.0
      %593 = vmatmul.mubr.f32.gmra.mxu0 %v292
      %v594 = vpop.f32.mrf.mxu0
      %v595 = vadd.f32 0.0, %v594
      %v596 = vpop.f32.mrf.mxu0
      %597 = vmatprep.mubr.f32.mxu0 0.0
      %598 = vmatmul.mubr.f32.gmra.mxu0 %v295
      %v599 = vpop.f32.mrf.mxu0
      %v600 = vadd.f32 0.0, %v599
      %v601 = vpop.f32.mrf.mxu0
      %602 = vdwg.mxu0
      %603 = vst [vmem:[#allocation2] sm:$0xff] %v364
      %604 = vst [vmem:[#allocation2 + $0x8] sm:$0xff] %v366
      %605 = vst [vmem:[#allocation2 + $0x10] sm:$0xff] %v525
      %606 = vst [vmem:[#allocation2 + $0x18] sm:$0xff] %v370
      %607 = vst [vmem:[#allocation2 + $0x20] sm:$0xff] %v372
      %608 = vst [vmem:[#allocation2 + $0x28] sm:$0xff] %v530
      %609 = vst [vmem:[#allocation2 + $0x30] sm:$0xff] %v376
      %610 = vst [vmem:[#allocation2 + $0x38] sm:$0xff] %v378
      %611 = vst [vmem:[#allocation2 + $0x40] sm:$0xff] %v535
      %612 = vst [vmem:[#allocation2 + $0x48] sm:$0xff] %v382
      %613 = vst [vmem:[#allocation2 + $0x50] sm:$0xff] %v384
      %614 = vst [vmem:[#allocation2 + $0x58] sm:$0xff] %v540
      %615 = vst [vmem:[#allocation2 + $0x60] sm:$0xff] %v388
      %616 = vst [vmem:[#allocation2 + $0x68] sm:$0xff] %v390
      %617 = vst [vmem:[#allocation2 + $0x70] sm:$0xff] %v545
      %618 = vst [vmem:[#allocation2 + $0x78] sm:$0xff] %v394
      %619 = vst [vmem:[#allocation2 + $0x80] sm:$0xff] %v396
      %620 = vst [vmem:[#allocation2 + $0x88] sm:$0xff] %v550
      %621 = vst [vmem:[#allocation2 + $0x90] sm:$0xff] %v400
      %622 = vst [vmem:[#allocation2 + $0x98] sm:$0xff] %v402
      %623 = vst [vmem:[#allocation2 + $0xa0] sm:$0xff] %v555
      %624 = vst [vmem:[#allocation2 + $0xa8] sm:$0xff] %v406
      %625 = vst [vmem:[#allocation2 + $0xb0] sm:$0xff] %v408
      %626 = vst [vmem:[#allocation2 + $0xb8] sm:$0xff] %v560
      %627 = vst [vmem:[#allocation2 + $0xc0] sm:$0xff] %v412
      %628 = vst [vmem:[#allocation2 + $0xc8] sm:$0xff] %v414
      %629 = vst [vmem:[#allocation2 + $0xd0] sm:$0xff] %v565
      %630 = vst [vmem:[#allocation2 + $0xd8] sm:$0xff] %v418
      %631 = vst [vmem:[#allocation2 + $0xe0] sm:$0xff] %v420
      %632 = vst [vmem:[#allocation2 + $0xe8] sm:$0xff] %v570
      %633 = vst [vmem:[#allocation2 + $0xf0] sm:$0xff] %v424
      %634 = vst [vmem:[#allocation2 + $0xf8] sm:$0xff] %v426
      %635 = vst [vmem:[#allocation2 + $0x100] sm:$0xff] %v575
      %636 = vst [vmem:[#allocation2 + $0x108] sm:$0xff] %v430
      %637 = vst [vmem:[#allocation2 + $0x110] sm:$0xff] %v432
      %638 = vst [vmem:[#allocation2 + $0x118] sm:$0xff] %v580
      %639 = vst [vmem:[#allocation2 + $0x120] sm:$0xff] %v436
      %640 = vst [vmem:[#allocation2 + $0x128] sm:$0xff] %v438
      %641 = vst [vmem:[#allocation2 + $0x130] sm:$0xff] %v585
      %642 = vst [vmem:[#allocation2 + $0x138] sm:$0xff] %v442
      %643 = vst [vmem:[#allocation2 + $0x140] sm:$0xff] %v444
      %644 = vst [vmem:[#allocation2 + $0x148] sm:$0xff] %v590
      %645 = vst [vmem:[#allocation2 + $0x150] sm:$0xff] %v448
      %646 = vst [vmem:[#allocation2 + $0x158] sm:$0xff] %v450
      %647 = vst [vmem:[#allocation2 + $0x160] sm:$0xff] %v595
      %648 = vst [vmem:[#allocation2 + $0x168] sm:$0xff] %v454
      %649 = vst [vmem:[#allocation2 + $0x170] sm:$0xff] %v456
      %650 = vst [vmem:[#allocation2 + $0x178] sm:$0xff] %v600
      %v651 = vld [vmem:[#allocation2] sm:$0xff]
      %v652 = vld [vmem:[#allocation2 + $0x18] sm:$0xff]
      %v653 = vld [vmem:[#allocation2 + $0x30] sm:$0xff]
      %v654 = vld [vmem:[#allocation2 + $0x48] sm:$0xff]
      %v655 = vld [vmem:[#allocation2 + $0x60] sm:$0xff]
      %v656 = vld [vmem:[#allocation2 + $0x78] sm:$0xff]
      %v657 = vld [vmem:[#allocation2 + $0x90] sm:$0xff]
      %v658 = vld [vmem:[#allocation2 + $0xa8] sm:$0xff]
      %v659 = vld [vmem:[#allocation2 + $0xc0] sm:$0xff]
      %v660 = vld [vmem:[#allocation2 + $0xd8] sm:$0xff]
      %v661 = vld [vmem:[#allocation2 + $0xf0] sm:$0xff]
      %v662 = vld [vmem:[#allocation2 + $0x108] sm:$0xff]
      %v663 = vld [vmem:[#allocation2 + $0x120] sm:$0xff]
      %v664 = vld [vmem:[#allocation2 + $0x138] sm:$0xff]
      %v665 = vld [vmem:[#allocation2 + $0x150] sm:$0xff]
      %v666 = vld [vmem:[#allocation2 + $0x168] sm:$0xff]
      %v667 = vld [vmem:[#allocation2 + $0x8] sm:$0xff]
      %v668 = vld [vmem:[#allocation2 + $0x20] sm:$0xff]
      %v669 = vld [vmem:[#allocation2 + $0x38] sm:$0xff]
      %v670 = vld [vmem:[#allocation2 + $0x50] sm:$0xff]
      %v671 = vld [vmem:[#allocation2 + $0x68] sm:$0xff]
      %v672 = vld [vmem:[#allocation2 + $0x80] sm:$0xff]
      %v673 = vld [vmem:[#allocation2 + $0x98] sm:$0xff]
      %v674 = vld [vmem:[#allocation2 + $0xb0] sm:$0xff]
      %v675 = vld [vmem:[#allocation2 + $0xc8] sm:$0xff]
      %v676 = vld [vmem:[#allocation2 + $0xe0] sm:$0xff]
      %v677 = vld [vmem:[#allocation2 + $0xf8] sm:$0xff]
      %v678 = vld [vmem:[#allocation2 + $0x110] sm:$0xff]
      %v679 = vld [vmem:[#allocation2 + $0x128] sm:$0xff]
      %v680 = vld [vmem:[#allocation2 + $0x140] sm:$0xff]
      %v681 = vld [vmem:[#allocation2 + $0x158] sm:$0xff]
      %v682 = vld [vmem:[#allocation2 + $0x170] sm:$0xff]
      %v683 = vld [vmem:[#allocation2 + $0x10] sm:$0xff]
      %v684 = vld [vmem:[#allocation2 + $0x28] sm:$0xff]
      %v685 = vld [vmem:[#allocation2 + $0x40] sm:$0xff]
      %v686 = vld [vmem:[#allocation2 + $0x58] sm:$0xff]
      %v687 = vld [vmem:[#allocation2 + $0x70] sm:$0xff]
      %v688 = vld [vmem:[#allocation2 + $0x88] sm:$0xff]
      %v689 = vld [vmem:[#allocation2 + $0xa0] sm:$0xff]
      %v690 = vld [vmem:[#allocation2 + $0xb8] sm:$0xff]
      %v691 = vld [vmem:[#allocation2 + $0xd0] sm:$0xff]
      %v692 = vld [vmem:[#allocation2 + $0xe8] sm:$0xff]
      %v693 = vld [vmem:[#allocation2 + $0x100] sm:$0xff]
      %v694 = vld [vmem:[#allocation2 + $0x118] sm:$0xff]
      %v695 = vld [vmem:[#allocation2 + $0x130] sm:$0xff]
      %v696 = vld [vmem:[#allocation2 + $0x148] sm:$0xff]
      %v697 = vld [vmem:[#allocation2 + $0x160] sm:$0xff]
      %v698 = vld [vmem:[#allocation2 + $0x178] sm:$0xff]
      %v700 = vsel %vm248, %v651, 0
      %v703 = vsel %vm248, %v652, 0
      %v706 = vsel %vm248, %v653, 0
      %v709 = vsel %vm248, %v654, 0
      %v712 = vsel %vm248, %v655, 0
      %v715 = vsel %vm248, %v656, 0
      %v718 = vsel %vm248, %v657, 0
      %v721 = vsel %vm248, %v658, 0
      %v724 = vsel %vm248, %v659, 0
      %v727 = vsel %vm248, %v660, 0
      %v730 = vsel %vm248, %v661, 0
      %v733 = vsel %vm248, %v662, 0
      %v736 = vsel %vm248, %v663, 0
      %v739 = vsel %vm248, %v664, 0
      %v742 = vsel %vm248, %v665, 0
      %v745 = vsel %vm248, %v666, 0
      %v748 = vsel %vm248, %v667, 0
      %v751 = vsel %vm248, %v668, 0
      %v754 = vsel %vm248, %v669, 0
      %v757 = vsel %vm248, %v670, 0
      %v760 = vsel %vm248, %v671, 0
      %v763 = vsel %vm248, %v672, 0
      %v766 = vsel %vm248, %v673, 0
      %v769 = vsel %vm248, %v674, 0
      %v772 = vsel %vm248, %v675, 0
      %v775 = vsel %vm248, %v676, 0
      %v778 = vsel %vm248, %v677, 0
      %v781 = vsel %vm248, %v678, 0
      %v784 = vsel %vm248, %v679, 0
      %v787 = vsel %vm248, %v680, 0
      %v790 = vsel %vm248, %v681, 0
      %v793 = vsel %vm248, %v682, 0
      %795 = vmatprep.subr.mxu0 0.0
      %796 = vmatpush1.xpose.msra.mxu0 %v793
      %797 = vmatprep.subr.mxu0 0.0
      %798 = vmatpush1.xpose.msra.mxu0 %v790
      %799 = vmatprep.subr.mxu0 0.0
      %800 = vmatpush1.xpose.msra.mxu0 %v787
      %801 = vmatprep.subr.mxu0 0.0
      %802 = vmatpush1.xpose.msra.mxu0 %v784
      %803 = vmatprep.subr.mxu0 0.0
      %804 = vmatpush1.xpose.msra.mxu0 %v781
      %805 = vmatprep.subr.mxu0 0.0
      %806 = vmatpush1.xpose.msra.mxu0 %v778
      %807 = vmatprep.subr.mxu0 0.0
      %808 = vmatpush1.xpose.msra.mxu0 %v775
      %809 = vmatprep.subr.mxu0 0.0
      %810 = vmatpush1.xpose.msra.mxu0 %v772
      %811 = vmatprep.subr.mxu0 0.0
      %812 = vmatpush1.xpose.msra.mxu0 %v769
      %813 = vmatprep.subr.mxu0 0.0
      %814 = vmatpush1.xpose.msra.mxu0 %v766
      %815 = vmatprep.subr.mxu0 0.0
      %816 = vmatpush1.xpose.msra.mxu0 %v763
      %817 = vmatprep.subr.mxu0 0.0
      %818 = vmatpush1.xpose.msra.mxu0 %v760
      %819 = vmatprep.subr.mxu0 0.0
      %820 = vmatpush1.xpose.msra.mxu0 %v757
      %821 = vmatprep.subr.mxu0 0.0
      %822 = vmatpush1.xpose.msra.mxu0 %v754
      %823 = vmatprep.subr.mxu0 0.0
      %824 = vmatpush1.xpose.msra.mxu0 %v751
      %825 = vmatprep.subr.mxu0 0.0
      %826 = vmatpush1.xpose.msra.mxu0 %v748
      %827 = vmatprep.subr.mxu0 0.0
      %828 = vmatpush2.xpose.msra.mxu0 0.0
      %829 = vmatprep.subr.mxu0 0.0
      %830 = vmatpush2.xpose.msra.mxu0 0.0
      %831 = vmatprep.subr.mxu0 0.0
      %832 = vmatpush2.xpose.msra.mxu0 0.0
      %833 = vmatprep.subr.mxu0 0.0
      %834 = vmatpush2.xpose.msra.mxu0 0.0
      %835 = vmatprep.subr.mxu0 0.0
      %836 = vmatpush2.xpose.msra.mxu0 0.0
      %837 = vmatprep.subr.mxu0 0.0
      %838 = vmatpush2.xpose.msra.mxu0 0.0
      %839 = vmatprep.subr.mxu0 0.0
      %840 = vmatpush2.xpose.msra.mxu0 0.0
      %841 = vmatprep.subr.mxu0 0.0
      %842 = vmatpush2.xpose.msra.mxu0 0.0
      %843 = vmatprep.subr.mxu0 0.0
      %844 = vmatpush2.xpose.msra.mxu0 0.0
      %845 = vmatprep.subr.mxu0 0.0
      %846 = vmatpush2.xpose.msra.mxu0 0.0
      %847 = vmatprep.subr.mxu0 0.0
      %848 = vmatpush2.xpose.msra.mxu0 0.0
      %849 = vmatprep.subr.mxu0 0.0
      %850 = vmatpush2.xpose.msra.mxu0 0.0
      %851 = vmatprep.subr.mxu0 0.0
      %852 = vmatpush2.xpose.msra.mxu0 0.0
      %853 = vmatprep.subr.mxu0 0.0
      %854 = vmatpush2.xpose.msra.mxu0 0.0
      %855 = vmatprep.subr.mxu0 0.0
      %856 = vmatpush2.xpose.msra.mxu0 0.0
      %857 = vmatprep.subr.mxu0 0.0
      %858 = vmatpush2.xpose.msra.mxu0 0.0
      %859 = vmatprep.mubr.f32.mxu0 0.0
      %860 = vmatmul.mubr.f32.gmra.mxu0 %v700
      %v861 = vpop.f32.mrf.mxu0
      %v862 = vadd.f32 0.0, %v861
      %v863 = vpop.f32.mrf.mxu0
      %864 = vmatprep.mubr.f32.mxu0 0.0
      %865 = vmatmul.mubr.f32.gmra.mxu0 %v703
      %v866 = vpop.f32.mrf.mxu0
      %v867 = vadd.f32 0.0, %v866
      %v868 = vpop.f32.mrf.mxu0
      %869 = vmatprep.mubr.f32.mxu0 0.0
      %870 = vmatmul.mubr.f32.gmra.mxu0 %v706
      %v871 = vpop.f32.mrf.mxu0
      %v872 = vadd.f32 0.0, %v871
      %v873 = vpop.f32.mrf.mxu0
      %874 = vmatprep.mubr.f32.mxu0 0.0
      %875 = vmatmul.mubr.f32.gmra.mxu0 %v709
      %v876 = vpop.f32.mrf.mxu0
      %v877 = vadd.f32 0.0, %v876
      %v878 = vpop.f32.mrf.mxu0
      %879 = vmatprep.mubr.f32.mxu0 0.0
      %880 = vmatmul.mubr.f32.gmra.mxu0 %v712
      %v881 = vpop.f32.mrf.mxu0
      %v882 = vadd.f32 0.0, %v881
      %v883 = vpop.f32.mrf.mxu0
      %884 = vmatprep.mubr.f32.mxu0 0.0
      %885 = vmatmul.mubr.f32.gmra.mxu0 %v715
      %v886 = vpop.f32.mrf.mxu0
      %v887 = vadd.f32 0.0, %v886
      %v888 = vpop.f32.mrf.mxu0
      %889 = vmatprep.mubr.f32.mxu0 0.0
      %890 = vmatmul.mubr.f32.gmra.mxu0 %v718
      %v891 = vpop.f32.mrf.mxu0
      %v892 = vadd.f32 0.0, %v891
      %v893 = vpop.f32.mrf.mxu0
      %894 = vmatprep.mubr.f32.mxu0 0.0
      %895 = vmatmul.mubr.f32.gmra.mxu0 %v721
      %v896 = vpop.f32.mrf.mxu0
      %v897 = vadd.f32 0.0, %v896
      %v898 = vpop.f32.mrf.mxu0
      %899 = vmatprep.mubr.f32.mxu0 0.0
      %900 = vmatmul.mubr.f32.gmra.mxu0 %v724
      %v901 = vpop.f32.mrf.mxu0
      %v902 = vadd.f32 0.0, %v901
      %v903 = vpop.f32.mrf.mxu0
      %904 = vmatprep.mubr.f32.mxu0 0.0
      %905 = vmatmul.mubr.f32.gmra.mxu0 %v727
      %v906 = vpop.f32.mrf.mxu0
      %v907 = vadd.f32 0.0, %v906
      %v908 = vpop.f32.mrf.mxu0
      %909 = vmatprep.mubr.f32.mxu0 0.0
      %910 = vmatmul.mubr.f32.gmra.mxu0 %v730
      %v911 = vpop.f32.mrf.mxu0
      %v912 = vadd.f32 0.0, %v911
      %v913 = vpop.f32.mrf.mxu0
      %914 = vmatprep.mubr.f32.mxu0 0.0
      %915 = vmatmul.mubr.f32.gmra.mxu0 %v733
      %v916 = vpop.f32.mrf.mxu0
      %v917 = vadd.f32 0.0, %v916
      %v918 = vpop.f32.mrf.mxu0
      %919 = vmatprep.mubr.f32.mxu0 0.0
      %920 = vmatmul.mubr.f32.gmra.mxu0 %v736
      %v921 = vpop.f32.mrf.mxu0
      %v922 = vadd.f32 0.0, %v921
      %v923 = vpop.f32.mrf.mxu0
      %924 = vmatprep.mubr.f32.mxu0 0.0
      %925 = vmatmul.mubr.f32.gmra.mxu0 %v739
      %v926 = vpop.f32.mrf.mxu0
      %v927 = vadd.f32 0.0, %v926
      %v928 = vpop.f32.mrf.mxu0
      %929 = vmatprep.mubr.f32.mxu0 0.0
      %930 = vmatmul.mubr.f32.gmra.mxu0 %v742
      %v931 = vpop.f32.mrf.mxu0
      %v932 = vadd.f32 0.0, %v931
      %v933 = vpop.f32.mrf.mxu0
      %934 = vmatprep.mubr.f32.mxu0 0.0
      %935 = vmatmul.mubr.f32.gmra.mxu0 %v745
      %v936 = vpop.f32.mrf.mxu0
      %v937 = vadd.f32 0.0, %v936
      %v938 = vpop.f32.mrf.mxu0
      %939 = vdwg.mxu0
      %v940 = vtanh.pop %v862
      %v941 = vtanh.pop %v867
      %v942 = vtanh.pop %v872
      %v943 = vtanh.pop %v877
      %v944 = vtanh.pop %v882
      %v945 = vtanh.pop %v887
      %v946 = vtanh.pop %v892
      %v947 = vtanh.pop %v897
      %v948 = vtanh.pop %v902
      %v949 = vtanh.pop %v907
      %v950 = vtanh.pop %v912
      %v951 = vtanh.pop %v917
      %v952 = vtanh.pop %v922
      %v953 = vtanh.pop %v927
      %v954 = vtanh.pop %v932
      %v955 = vtanh.pop %v937
      %v956 = vmul.f32 %v940, 8.0
      %v957 = vmul.f32 %v941, 8.0
      %v958 = vmul.f32 %v942, 8.0
      %v959 = vmul.f32 %v943, 8.0
      %v960 = vmul.f32 %v944, 8.0
      %v961 = vmul.f32 %v945, 8.0
      %v962 = vmul.f32 %v946, 8.0
      %v963 = vmul.f32 %v947, 8.0
      %v964 = vmul.f32 %v948, 8.0
      %v965 = vmul.f32 %v949, 8.0
      %v966 = vmul.f32 %v950, 8.0
      %v967 = vmul.f32 %v951, 8.0
      %v968 = vmul.f32 %v952, 8.0
      %v969 = vmul.f32 %v953, 8.0
      %v970 = vmul.f32 %v954, 8.0
      %v971 = vmul.f32 %v955, 8.0
      %v972 = vmul.f32 %v956, 1.442695
      %v973 = vpow.pop %v972
      %v974 = vmul.f32 %v957, 1.442695
      %v975 = vpow.pop %v974
      %v976 = vmul.f32 %v958, 1.442695
      %v977 = vpow.pop %v976
      %v978 = vmul.f32 %v959, 1.442695
      %v979 = vpow.pop %v978
      %v980 = vmul.f32 %v960, 1.442695
      %v981 = vpow.pop %v980
      %v982 = vmul.f32 %v961, 1.442695
      %v983 = vpow.pop %v982
      %v984 = vmul.f32 %v962, 1.442695
      %v985 = vpow.pop %v984
      %v986 = vmul.f32 %v963, 1.442695
      %v987 = vpow.pop %v986
      %v988 = vmul.f32 %v964, 1.442695
      %v989 = vpow.pop %v988
      %v990 = vmul.f32 %v965, 1.442695
      %v991 = vpow.pop %v990
      %v992 = vmul.f32 %v966, 1.442695
      %v993 = vpow.pop %v992
      %v994 = vmul.f32 %v967, 1.442695
      %v995 = vpow.pop %v994
      %v996 = vmul.f32 %v968, 1.442695
      %v997 = vpow.pop %v996
      %v998 = vmul.f32 %v969, 1.442695
      %v999 = vpow.pop %v998
      %v1000 = vmul.f32 %v970, 1.442695
      %v1001 = vpow.pop %v1000
      %v1002 = vmul.f32 %v971, 1.442695
      %v1003 = vpow.pop %v1002
      %v1004 = vld [vmem:[%s212] sm:$0xff]
      %v1005 = vld [vmem:[%s212 + $0x8] sm:$0xff]
      %v1006 = vld [vmem:[%s212 + $0x10] sm:$0xff]
      %v1007 = vld [vmem:[%s212 + $0x18] sm:$0xff]
      %vm1008 = vnez %v1004
      %vm1009 = vnez %v1005
      %vm1010 = vnez %v1006
      %vm1011 = vnez %v1007
      %v1012 = vsel %vm1008, 16843009, 0
      %v1013 = vsel %vm1009, 16843009, 0
      %v1014 = vsel %vm1010, 16843009, 0
      %v1015 = vsel %vm1011, 16843009, 0
      %v1016 = vunpack.c.0.s8 %v1012
      %v1017 = vunpack.c.1.s8 %v1012
      %v1018 = vunpack.c.2.s8 %v1012
      %v1019 = vunpack.c.3.s8 %v1012
      %v1020 = vunpack.c.0.s8 %v1013
      %v1021 = vunpack.c.1.s8 %v1013
      %v1022 = vunpack.c.2.s8 %v1013
      %v1023 = vunpack.c.3.s8 %v1013
      %v1024 = vunpack.c.0.s8 %v1014
      %v1025 = vunpack.c.1.s8 %v1014
      %v1026 = vunpack.c.2.s8 %v1014
      %v1027 = vunpack.c.3.s8 %v1014
      %v1028 = vunpack.c.0.s8 %v1015
      %v1029 = vunpack.c.1.s8 %v1015
      %v1030 = vunpack.c.2.s8 %v1015
      %v1031 = vunpack.c.3.s8 %v1015
      %v1032 = vpack.c.b16 %v1016, %v1016
      %v1033 = vpack.c.b8 %v1032, %v1032
      %v1034 = vpack.c.b16 %v1017, %v1017
      %v1035 = vpack.c.b8 %v1034, %v1034
      %v1036 = vpack.c.b16 %v1018, %v1018
      %v1037 = vpack.c.b8 %v1036, %v1036
      %v1038 = vpack.c.b16 %v1019, %v1019
      %v1039 = vpack.c.b8 %v1038, %v1038
      %v1040 = vpack.c.b16 %v1020, %v1020
      %v1041 = vpack.c.b8 %v1040, %v1040
      %v1042 = vpack.c.b16 %v1021, %v1021
      %v1043 = vpack.c.b8 %v1042, %v1042
      %v1044 = vpack.c.b16 %v1022, %v1022
      %v1045 = vpack.c.b8 %v1044, %v1044
      %v1046 = vpack.c.b16 %v1023, %v1023
      %v1047 = vpack.c.b8 %v1046, %v1046
      %v1048 = vpack.c.b16 %v1024, %v1024
      %v1049 = vpack.c.b8 %v1048, %v1048
      %v1050 = vpack.c.b16 %v1025, %v1025
      %v1051 = vpack.c.b8 %v1050, %v1050
      %v1052 = vpack.c.b16 %v1026, %v1026
      %v1053 = vpack.c.b8 %v1052, %v1052
      %v1054 = vpack.c.b16 %v1027, %v1027
      %v1055 = vpack.c.b8 %v1054, %v1054
      %v1056 = vpack.c.b16 %v1028, %v1028
      %v1057 = vpack.c.b8 %v1056, %v1056
      %v1058 = vpack.c.b16 %v1029, %v1029
      %v1059 = vpack.c.b8 %v1058, %v1058
      %v1060 = vpack.c.b16 %v1030, %v1030
      %v1061 = vpack.c.b8 %v1060, %v1060
      %v1062 = vpack.c.b16 %v1031, %v1031
      %v1063 = vpack.c.b8 %v1062, %v1062
      %vm1064 = vnez %v1033
      %vm1065 = vnez %v1035
      %vm1066 = vnez %v1037
      %vm1067 = vnez %v1039
      %vm1068 = vnez %v1041
      %vm1069 = vnez %v1043
      %vm1070 = vnez %v1045
      %vm1071 = vnez %v1047
      %vm1072 = vnez %v1049
      %vm1073 = vnez %v1051
      %vm1074 = vnez %v1053
      %vm1075 = vnez %v1055
      %vm1076 = vnez %v1057
      %vm1077 = vnez %v1059
      %vm1078 = vnez %v1061
      %vm1079 = vnez %v1063
      %v1080 = vsel %vm1064, 16843009, 0
      %v1081 = vsel %vm1065, 16843009, 0
      %v1082 = vsel %vm1066, 16843009, 0
      %v1083 = vsel %vm1067, 16843009, 0
      %v1084 = vsel %vm1068, 16843009, 0
      %v1085 = vsel %vm1069, 16843009, 0
      %v1086 = vsel %vm1070, 16843009, 0
      %v1087 = vsel %vm1071, 16843009, 0
      %v1088 = vsel %vm1072, 16843009, 0
      %v1089 = vsel %vm1073, 16843009, 0
      %v1090 = vsel %vm1074, 16843009, 0
      %v1091 = vsel %vm1075, 16843009, 0
      %v1092 = vsel %vm1076, 16843009, 0
      %v1093 = vsel %vm1077, 16843009, 0
      %v1094 = vsel %vm1078, 16843009, 0
      %v1095 = vsel %vm1079, 16843009, 0
      %v1096 = vunpack.c.0.s8 %v1080
      %v1097 = vunpack.c.0.s8 %v1081
      %v1098 = vunpack.c.0.s8 %v1082
      %v1099 = vunpack.c.0.s8 %v1083
      %v1100 = vunpack.c.0.s8 %v1084
      %v1101 = vunpack.c.0.s8 %v1085
      %v1102 = vunpack.c.0.s8 %v1086
      %v1103 = vunpack.c.0.s8 %v1087
      %v1104 = vunpack.c.0.s8 %v1088
      %v1105 = vunpack.c.0.s8 %v1089
      %v1106 = vunpack.c.0.s8 %v1090
      %v1107 = vunpack.c.0.s8 %v1091
      %v1108 = vunpack.c.0.s8 %v1092
      %v1109 = vunpack.c.0.s8 %v1093
      %v1110 = vunpack.c.0.s8 %v1094
      %v1111 = vunpack.c.0.s8 %v1095
      %vm1112 = vcmp.ne.s32.totalorder %v1096, 0
      %vm1113 = vcmp.ne.s32.totalorder %v1097, 0
      %vm1114 = vcmp.ne.s32.totalorder %v1098, 0
      %vm1115 = vcmp.ne.s32.totalorder %v1099, 0
      %vm1116 = vcmp.ne.s32.totalorder %v1100, 0
      %vm1117 = vcmp.ne.s32.totalorder %v1101, 0
      %vm1118 = vcmp.ne.s32.totalorder %v1102, 0
      %vm1119 = vcmp.ne.s32.totalorder %v1103, 0
      %vm1120 = vcmp.ne.s32.totalorder %v1104, 0
      %vm1121 = vcmp.ne.s32.totalorder %v1105, 0
      %vm1122 = vcmp.ne.s32.totalorder %v1106, 0
      %vm1123 = vcmp.ne.s32.totalorder %v1107, 0
      %vm1124 = vcmp.ne.s32.totalorder %v1108, 0
      %vm1125 = vcmp.ne.s32.totalorder %v1109, 0
      %vm1126 = vcmp.ne.s32.totalorder %v1110, 0
      %vm1127 = vcmp.ne.s32.totalorder %v1111, 0
      %v1128 = vsel %vm1112, %v973, 0.0
      %v1129 = vsel %vm1113, %v975, 0.0
      %v1130 = vsel %vm1114, %v977, 0.0
      %v1131 = vsel %vm1115, %v979, 0.0
      %v1132 = vsel %vm1116, %v981, 0.0
      %v1133 = vsel %vm1117, %v983, 0.0
      %v1134 = vsel %vm1118, %v985, 0.0
      %v1135 = vsel %vm1119, %v987, 0.0
      %v1136 = vsel %vm1120, %v989, 0.0
      %v1137 = vsel %vm1121, %v991, 0.0
      %v1138 = vsel %vm1122, %v993, 0.0
      %v1139 = vsel %vm1123, %v995, 0.0
      %v1140 = vsel %vm1124, %v997, 0.0
      %v1141 = vsel %vm1125, %v999, 0.0
      %v1142 = vsel %vm1126, %v1001, 0.0
      %v1143 = vsel %vm1127, %v1003, 0.0
      %1144 = vadd.xlane.f32.xlu0 %v1128
      %v1145 = vpop.xlane.xlu0 %1144
      %1146 = vadd.xlane.f32.xlu0 %v1129
      %v1147 = vpop.xlane.xlu0 %1146
      %1148 = vadd.xlane.f32.xlu0 %v1130
      %v1149 = vpop.xlane.xlu0 %1148
      %1150 = vadd.xlane.f32.xlu0 %v1131
      %v1151 = vpop.xlane.xlu0 %1150
      %1152 = vadd.xlane.f32.xlu0 %v1132
      %v1153 = vpop.xlane.xlu0 %1152
      %1154 = vadd.xlane.f32.xlu0 %v1133
      %v1155 = vpop.xlane.xlu0 %1154
      %1156 = vadd.xlane.f32.xlu0 %v1134
      %v1157 = vpop.xlane.xlu0 %1156
      %1158 = vadd.xlane.f32.xlu0 %v1135
      %v1159 = vpop.xlane.xlu0 %1158
      %1160 = vadd.xlane.f32.xlu0 %v1136
      %v1161 = vpop.xlane.xlu0 %1160
      %1162 = vadd.xlane.f32.xlu0 %v1137
      %v1163 = vpop.xlane.xlu0 %1162
      %1164 = vadd.xlane.f32.xlu0 %v1138
      %v1165 = vpop.xlane.xlu0 %1164
      %1166 = vadd.xlane.f32.xlu0 %v1139
      %v1167 = vpop.xlane.xlu0 %1166
      %1168 = vadd.xlane.f32.xlu0 %v1140
      %v1169 = vpop.xlane.xlu0 %1168
      %1170 = vadd.xlane.f32.xlu0 %v1141
      %v1171 = vpop.xlane.xlu0 %1170
      %1172 = vadd.xlane.f32.xlu0 %v1142
      %v1173 = vpop.xlane.xlu0 %1172
      %1174 = vadd.xlane.f32.xlu0 %v1143
      %v1175 = vpop.xlane.xlu0 %1174
      %1176 = vmatprep.subr.mxu0 0.0
      %1177 = vmatpush1.msra.mxu0 %v698
      %1178 = vmatprep.subr.mxu0 0.0
      %1179 = vmatpush1.msra.mxu0 %v697
      %1180 = vmatprep.subr.mxu0 0.0
      %1181 = vmatpush1.msra.mxu0 %v696
      %1182 = vmatprep.subr.mxu0 0.0
      %1183 = vmatpush1.msra.mxu0 %v695
      %1184 = vmatprep.subr.mxu0 0.0
      %1185 = vmatpush1.msra.mxu0 %v694
      %1186 = vmatprep.subr.mxu0 0.0
      %1187 = vmatpush1.msra.mxu0 %v693
      %1188 = vmatprep.subr.mxu0 0.0
      %1189 = vmatpush1.msra.mxu0 %v692
      %1190 = vmatprep.subr.mxu0 0.0
      %1191 = vmatpush1.msra.mxu0 %v691
      %1192 = vmatprep.subr.mxu0 0.0
      %1193 = vmatpush1.msra.mxu0 %v690
      %1194 = vmatprep.subr.mxu0 0.0
      %1195 = vmatpush1.msra.mxu0 %v689
      %1196 = vmatprep.subr.mxu0 0.0
      %1197 = vmatpush1.msra.mxu0 %v688
      %1198 = vmatprep.subr.mxu0 0.0
      %1199 = vmatpush1.msra.mxu0 %v687
      %1200 = vmatprep.subr.mxu0 0.0
      %1201 = vmatpush1.msra.mxu0 %v686
      %1202 = vmatprep.subr.mxu0 0.0
      %1203 = vmatpush1.msra.mxu0 %v685
      %1204 = vmatprep.subr.mxu0 0.0
      %1205 = vmatpush1.msra.mxu0 %v684
      %1206 = vmatprep.subr.mxu0 0.0
      %1207 = vmatpush1.msra.mxu0 %v683
      %1208 = vmatprep.subr.mxu0 0.0
      %1209 = vmatpush2.msra.mxu0 0.0
      %1210 = vmatprep.subr.mxu0 0.0
      %1211 = vmatpush2.msra.mxu0 0.0
      %1212 = vmatprep.subr.mxu0 0.0
      %1213 = vmatpush2.msra.mxu0 0.0
      %1214 = vmatprep.subr.mxu0 0.0
      %1215 = vmatpush2.msra.mxu0 0.0
      %1216 = vmatprep.subr.mxu0 0.0
      %1217 = vmatpush2.msra.mxu0 0.0
      %1218 = vmatprep.subr.mxu0 0.0
      %1219 = vmatpush2.msra.mxu0 0.0
      %1220 = vmatprep.subr.mxu0 0.0
      %1221 = vmatpush2.msra.mxu0 0.0
      %1222 = vmatprep.subr.mxu0 0.0
      %1223 = vmatpush2.msra.mxu0 0.0
      %1224 = vmatprep.subr.mxu0 0.0
      %1225 = vmatpush2.msra.mxu0 0.0
      %1226 = vmatprep.subr.mxu0 0.0
      %1227 = vmatpush2.msra.mxu0 0.0
      %1228 = vmatprep.subr.mxu0 0.0
      %1229 = vmatpush2.msra.mxu0 0.0
      %1230 = vmatprep.subr.mxu0 0.0
      %1231 = vmatpush2.msra.mxu0 0.0
      %1232 = vmatprep.subr.mxu0 0.0
      %1233 = vmatpush2.msra.mxu0 0.0
      %1234 = vmatprep.subr.mxu0 0.0
      %1235 = vmatpush2.msra.mxu0 0.0
      %1236 = vmatprep.subr.mxu0 0.0
      %1237 = vmatpush2.msra.mxu0 0.0
      %1238 = vmatprep.subr.mxu0 0.0
      %1239 = vmatpush2.msra.mxu0 0.0
      %1240 = vmatprep.mubr.f32.mxu0 0.0
      %1241 = vmatmul.mubr.f32.gmra.mxu0 %v1128
      %v1242 = vpop.f32.mrf.mxu0
      %v1243 = vadd.f32 0.0, %v1242
      %v1244 = vpop.f32.mrf.mxu0
      %1245 = vmatprep.mubr.f32.mxu0 0.0
      %1246 = vmatmul.mubr.f32.gmra.mxu0 %v1129
      %v1247 = vpop.f32.mrf.mxu0
      %v1248 = vadd.f32 0.0, %v1247
      %v1249 = vpop.f32.mrf.mxu0
      %1250 = vmatprep.mubr.f32.mxu0 0.0
      %1251 = vmatmul.mubr.f32.gmra.mxu0 %v1130
      %v1252 = vpop.f32.mrf.mxu0
      %v1253 = vadd.f32 0.0, %v1252
      %v1254 = vpop.f32.mrf.mxu0
      %1255 = vmatprep.mubr.f32.mxu0 0.0
      %1256 = vmatmul.mubr.f32.gmra.mxu0 %v1131
      %v1257 = vpop.f32.mrf.mxu0
      %v1258 = vadd.f32 0.0, %v1257
      %v1259 = vpop.f32.mrf.mxu0
      %1260 = vmatprep.mubr.f32.mxu0 0.0
      %1261 = vmatmul.mubr.f32.gmra.mxu0 %v1132
      %v1262 = vpop.f32.mrf.mxu0
      %v1263 = vadd.f32 0.0, %v1262
      %v1264 = vpop.f32.mrf.mxu0
      %1265 = vmatprep.mubr.f32.mxu0 0.0
      %1266 = vmatmul.mubr.f32.gmra.mxu0 %v1133
      %v1267 = vpop.f32.mrf.mxu0
      %v1268 = vadd.f32 0.0, %v1267
      %v1269 = vpop.f32.mrf.mxu0
      %1270 = vmatprep.mubr.f32.mxu0 0.0
      %1271 = vmatmul.mubr.f32.gmra.mxu0 %v1134
      %v1272 = vpop.f32.mrf.mxu0
      %v1273 = vadd.f32 0.0, %v1272
      %v1274 = vpop.f32.mrf.mxu0
      %1275 = vmatprep.mubr.f32.mxu0 0.0
      %1276 = vmatmul.mubr.f32.gmra.mxu0 %v1135
      %v1277 = vpop.f32.mrf.mxu0
      %v1278 = vadd.f32 0.0, %v1277
      %v1279 = vpop.f32.mrf.mxu0
      %1280 = vmatprep.mubr.f32.mxu0 0.0
      %1281 = vmatmul.mubr.f32.gmra.mxu0 %v1136
      %v1282 = vpop.f32.mrf.mxu0
      %v1283 = vadd.f32 0.0, %v1282
      %v1284 = vpop.f32.mrf.mxu0
      %1285 = vmatprep.mubr.f32.mxu0 0.0
      %1286 = vmatmul.mubr.f32.gmra.mxu0 %v1137
      %v1287 = vpop.f32.mrf.mxu0
      %v1288 = vadd.f32 0.0, %v1287
      %v1289 = vpop.f32.mrf.mxu0
      %1290 = vmatprep.mubr.f32.mxu0 0.0
      %1291 = vmatmul.mubr.f32.gmra.mxu0 %v1138
      %v1292 = vpop.f32.mrf.mxu0
      %v1293 = vadd.f32 0.0, %v1292
      %v1294 = vpop.f32.mrf.mxu0
      %1295 = vmatprep.mubr.f32.mxu0 0.0
      %1296 = vmatmul.mubr.f32.gmra.mxu0 %v1139
      %v1297 = vpop.f32.mrf.mxu0
      %v1298 = vadd.f32 0.0, %v1297
      %v1299 = vpop.f32.mrf.mxu0
      %1300 = vmatprep.mubr.f32.mxu0 0.0
      %1301 = vmatmul.mubr.f32.gmra.mxu0 %v1140
      %v1302 = vpop.f32.mrf.mxu0
      %v1303 = vadd.f32 0.0, %v1302
      %v1304 = vpop.f32.mrf.mxu0
      %1305 = vmatprep.mubr.f32.mxu0 0.0
      %1306 = vmatmul.mubr.f32.gmra.mxu0 %v1141
      %v1307 = vpop.f32.mrf.mxu0
      %v1308 = vadd.f32 0.0, %v1307
      %v1309 = vpop.f32.mrf.mxu0
      %1310 = vmatprep.mubr.f32.mxu0 0.0
      %1311 = vmatmul.mubr.f32.gmra.mxu0 %v1142
      %v1312 = vpop.f32.mrf.mxu0
      %v1313 = vadd.f32 0.0, %v1312
      %v1314 = vpop.f32.mrf.mxu0
      %1315 = vmatprep.mubr.f32.mxu0 0.0
      %1316 = vmatmul.mubr.f32.gmra.mxu0 %v1143
      %v1317 = vpop.f32.mrf.mxu0
      %v1318 = vadd.f32 0.0, %v1317
      %v1319 = vpop.f32.mrf.mxu0
      %1320 = vdwg.mxu0
      %v1321 = vrcp.pop %v1145
      %v1322 = vrcp.pop %v1147
      %v1323 = vrcp.pop %v1149
      %v1324 = vrcp.pop %v1151
      %v1325 = vrcp.pop %v1153
      %v1326 = vrcp.pop %v1155
      %v1327 = vrcp.pop %v1157
      %v1328 = vrcp.pop %v1159
      %v1329 = vrcp.pop %v1161
      %v1330 = vrcp.pop %v1163
      %v1331 = vrcp.pop %v1165
      %v1332 = vrcp.pop %v1167
      %v1333 = vrcp.pop %v1169
      %v1334 = vrcp.pop %v1171
      %v1335 = vrcp.pop %v1173
      %v1336 = vrcp.pop %v1175
      %v1337 = vmul.f32 %v1243, %v1321
      %v1338 = vmul.f32 %v1248, %v1322
      %v1339 = vmul.f32 %v1253, %v1323
      %v1340 = vmul.f32 %v1258, %v1324
      %v1341 = vmul.f32 %v1263, %v1325
      %v1342 = vmul.f32 %v1268, %v1326
      %v1343 = vmul.f32 %v1273, %v1327
      %v1344 = vmul.f32 %v1278, %v1328
      %v1345 = vmul.f32 %v1283, %v1329
      %v1346 = vmul.f32 %v1288, %v1330
      %v1347 = vmul.f32 %v1293, %v1331
      %v1348 = vmul.f32 %v1298, %v1332
      %v1349 = vmul.f32 %v1303, %v1333
      %v1350 = vmul.f32 %v1308, %v1334
      %v1351 = vmul.f32 %v1313, %v1335
      %v1352 = vmul.f32 %v1318, %v1336
      %v1353 = vadd.f32 %v1337, 0.0
      %v1354 = vadd.f32 %v1338, 0.0
      %v1355 = vadd.f32 %v1339, 0.0
      %v1356 = vadd.f32 %v1340, 0.0
      %v1357 = vadd.f32 %v1341, 0.0
      %v1358 = vadd.f32 %v1342, 0.0
      %v1359 = vadd.f32 %v1343, 0.0
      %v1360 = vadd.f32 %v1344, 0.0
      %v1361 = vadd.f32 %v1345, 0.0
      %v1362 = vadd.f32 %v1346, 0.0
      %v1363 = vadd.f32 %v1347, 0.0
      %v1364 = vadd.f32 %v1348, 0.0
      %v1365 = vadd.f32 %v1349, 0.0
      %v1366 = vadd.f32 %v1350, 0.0
      %v1367 = vadd.f32 %v1351, 0.0
      %v1368 = vadd.f32 %v1352, 0.0
      %1369 = vrot.lane.b32.xlu0 %v651, 96
      %v1370 = vpop.permute.xlu0 %1369
      %1371 = vrot.lane.b32.xlu0 %v652, 96
      %v1372 = vpop.permute.xlu0 %1371
      %1373 = vrot.lane.b32.xlu0 %v653, 96
      %v1374 = vpop.permute.xlu0 %1373
      %1375 = vrot.lane.b32.xlu0 %v654, 96
      %v1376 = vpop.permute.xlu0 %1375
      %1377 = vrot.lane.b32.xlu0 %v655, 96
      %v1378 = vpop.permute.xlu0 %1377
      %1379 = vrot.lane.b32.xlu0 %v656, 96
      %v1380 = vpop.permute.xlu0 %1379
      %1381 = vrot.lane.b32.xlu0 %v657, 96
      %v1382 = vpop.permute.xlu0 %1381
      %1383 = vrot.lane.b32.xlu0 %v658, 96
      %v1384 = vpop.permute.xlu0 %1383
      %1385 = vrot.lane.b32.xlu0 %v659, 96
      %v1386 = vpop.permute.xlu0 %1385
      %1387 = vrot.lane.b32.xlu0 %v660, 96
      %v1388 = vpop.permute.xlu0 %1387
      %1389 = vrot.lane.b32.xlu0 %v661, 96
      %v1390 = vpop.permute.xlu0 %1389
      %1391 = vrot.lane.b32.xlu0 %v662, 96
      %v1392 = vpop.permute.xlu0 %1391
      %1393 = vrot.lane.b32.xlu0 %v663, 96
      %v1394 = vpop.permute.xlu0 %1393
      %1395 = vrot.lane.b32.xlu0 %v664, 96
      %v1396 = vpop.permute.xlu0 %1395
      %1397 = vrot.lane.b32.xlu0 %v665, 96
      %v1398 = vpop.permute.xlu0 %1397
      %1399 = vrot.lane.b32.xlu0 %v666, 96
      %v1400 = vpop.permute.xlu0 %1399
      %1401 = vrot.lane.b32.xlu0 %v667, 96
      %v1402 = vpop.permute.xlu0 %1401
      %1403 = vrot.lane.b32.xlu0 %v668, 96
      %v1404 = vpop.permute.xlu0 %1403
      %1405 = vrot.lane.b32.xlu0 %v669, 96
      %v1406 = vpop.permute.xlu0 %1405
      %1407 = vrot.lane.b32.xlu0 %v670, 96
      %v1408 = vpop.permute.xlu0 %1407
      %1409 = vrot.lane.b32.xlu0 %v671, 96
      %v1410 = vpop.permute.xlu0 %1409
      %1411 = vrot.lane.b32.xlu0 %v672, 96
      %v1412 = vpop.permute.xlu0 %1411
      %1413 = vrot.lane.b32.xlu0 %v673, 96
      %v1414 = vpop.permute.xlu0 %1413
      %1415 = vrot.lane.b32.xlu0 %v674, 96
      %v1416 = vpop.permute.xlu0 %1415
      %1417 = vrot.lane.b32.xlu0 %v675, 96
      %v1418 = vpop.permute.xlu0 %1417
      %1419 = vrot.lane.b32.xlu0 %v676, 96
      %v1420 = vpop.permute.xlu0 %1419
      %1421 = vrot.lane.b32.xlu0 %v677, 96
      %v1422 = vpop.permute.xlu0 %1421
      %1423 = vrot.lane.b32.xlu0 %v678, 96
      %v1424 = vpop.permute.xlu0 %1423
      %1425 = vrot.lane.b32.xlu0 %v679, 96
      %v1426 = vpop.permute.xlu0 %1425
      %1427 = vrot.lane.b32.xlu0 %v680, 96
      %v1428 = vpop.permute.xlu0 %1427
      %1429 = vrot.lane.b32.xlu0 %v681, 96
      %v1430 = vpop.permute.xlu0 %1429
      %1431 = vrot.lane.b32.xlu0 %v682, 96
      %v1432 = vpop.permute.xlu0 %1431
      %v1433 = vsel %vm248, %v1370, 0
      %v1435 = vsel %vm248, %v1372, 0
      %v1437 = vsel %vm248, %v1374, 0
      %v1439 = vsel %vm248, %v1376, 0
      %v1441 = vsel %vm248, %v1378, 0
      %v1443 = vsel %vm248, %v1380, 0
      %v1445 = vsel %vm248, %v1382, 0
      %v1447 = vsel %vm248, %v1384, 0
      %v1449 = vsel %vm248, %v1386, 0
      %v1451 = vsel %vm248, %v1388, 0
      %v1453 = vsel %vm248, %v1390, 0
      %v1455 = vsel %vm248, %v1392, 0
      %v1457 = vsel %vm248, %v1394, 0
      %v1459 = vsel %vm248, %v1396, 0
      %v1461 = vsel %vm248, %v1398, 0
      %v1463 = vsel %vm248, %v1400, 0
      %v1465 = vsel %vm248, %v1402, 0
      %v1467 = vsel %vm248, %v1404, 0
      %v1469 = vsel %vm248, %v1406, 0
      %v1471 = vsel %vm248, %v1408, 0
      %v1473 = vsel %vm248, %v1410, 0
      %v1475 = vsel %vm248, %v1412, 0
      %v1477 = vsel %vm248, %v1414, 0
      %v1479 = vsel %vm248, %v1416, 0
      %v1481 = vsel %vm248, %v1418, 0
      %v1483 = vsel %vm248, %v1420, 0
      %v1485 = vsel %vm248, %v1422, 0
      %v1487 = vsel %vm248, %v1424, 0
      %v1489 = vsel %vm248, %v1426, 0
      %v1491 = vsel %vm248, %v1428, 0
      %v1493 = vsel %vm248, %v1430, 0
      %v1495 = vsel %vm248, %v1432, 0
      %1497 = vmatprep.subr.mxu0 0.0
      %1498 = vmatpush1.xpose.msra.mxu0 %v1495
      %1499 = vmatprep.subr.mxu0 0.0
      %1500 = vmatpush1.xpose.msra.mxu0 %v1493
      %1501 = vmatprep.subr.mxu0 0.0
      %1502 = vmatpush1.xpose.msra.mxu0 %v1491
      %1503 = vmatprep.subr.mxu0 0.0
      %1504 = vmatpush1.xpose.msra.mxu0 %v1489
      %1505 = vmatprep.subr.mxu0 0.0
      %1506 = vmatpush1.xpose.msra.mxu0 %v1487
      %1507 = vmatprep.subr.mxu0 0.0
      %1508 = vmatpush1.xpose.msra.mxu0 %v1485
      %1509 = vmatprep.subr.mxu0 0.0
      %1510 = vmatpush1.xpose.msra.mxu0 %v1483
      %1511 = vmatprep.subr.mxu0 0.0
      %1512 = vmatpush1.xpose.msra.mxu0 %v1481
      %1513 = vmatprep.subr.mxu0 0.0
      %1514 = vmatpush1.xpose.msra.mxu0 %v1479
      %1515 = vmatprep.subr.mxu0 0.0
      %1516 = vmatpush1.xpose.msra.mxu0 %v1477
      %1517 = vmatprep.subr.mxu0 0.0
      %1518 = vmatpush1.xpose.msra.mxu0 %v1475
      %1519 = vmatprep.subr.mxu0 0.0
      %1520 = vmatpush1.xpose.msra.mxu0 %v1473
      %1521 = vmatprep.subr.mxu0 0.0
      %1522 = vmatpush1.xpose.msra.mxu0 %v1471
      %1523 = vmatprep.subr.mxu0 0.0
      %1524 = vmatpush1.xpose.msra.mxu0 %v1469
      %1525 = vmatprep.subr.mxu0 0.0
      %1526 = vmatpush1.xpose.msra.mxu0 %v1467
      %1527 = vmatprep.subr.mxu0 0.0
      %1528 = vmatpush1.xpose.msra.mxu0 %v1465
      %1529 = vmatprep.subr.mxu0 0.0
      %1530 = vmatpush2.xpose.msra.mxu0 0.0
      %1531 = vmatprep.subr.mxu0 0.0
      %1532 = vmatpush2.xpose.msra.mxu0 0.0
      %1533 = vmatprep.subr.mxu0 0.0
      %1534 = vmatpush2.xpose.msra.mxu0 0.0
      %1535 = vmatprep.subr.mxu0 0.0
      %1536 = vmatpush2.xpose.msra.mxu0 0.0
      %1537 = vmatprep.subr.mxu0 0.0
      %1538 = vmatpush2.xpose.msra.mxu0 0.0
      %1539 = vmatprep.subr.mxu0 0.0
      %1540 = vmatpush2.xpose.msra.mxu0 0.0
      %1541 = vmatprep.subr.mxu0 0.0
      %1542 = vmatpush2.xpose.msra.mxu0 0.0
      %1543 = vmatprep.subr.mxu0 0.0
      %1544 = vmatpush2.xpose.msra.mxu0 0.0
      %1545 = vmatprep.subr.mxu0 0.0
      %1546 = vmatpush2.xpose.msra.mxu0 0.0
      %1547 = vmatprep.subr.mxu0 0.0
      %1548 = vmatpush2.xpose.msra.mxu0 0.0
      %1549 = vmatprep.subr.mxu0 0.0
      %1550 = vmatpush2.xpose.msra.mxu0 0.0
      %1551 = vmatprep.subr.mxu0 0.0
      %1552 = vmatpush2.xpose.msra.mxu0 0.0
      %1553 = vmatprep.subr.mxu0 0.0
      %1554 = vmatpush2.xpose.msra.mxu0 0.0
      %1555 = vmatprep.subr.mxu0 0.0
      %1556 = vmatpush2.xpose.msra.mxu0 0.0
      %1557 = vmatprep.subr.mxu0 0.0
      %1558 = vmatpush2.xpose.msra.mxu0 0.0
      %1559 = vmatprep.subr.mxu0 0.0
      %1560 = vmatpush2.xpose.msra.mxu0 0.0
      %1561 = vmatprep.mubr.f32.mxu0 0.0
      %1562 = vmatmul.mubr.f32.gmra.mxu0 %v1433
      %v1563 = vpop.f32.mrf.mxu0
      %v1564 = vadd.f32 0.0, %v1563
      %v1565 = vpop.f32.mrf.mxu0
      %1566 = vmatprep.mubr.f32.mxu0 0.0
      %1567 = vmatmul.mubr.f32.gmra.mxu0 %v1435
      %v1568 = vpop.f32.mrf.mxu0
      %v1569 = vadd.f32 0.0, %v1568
      %v1570 = vpop.f32.mrf.mxu0
      %1571 = vmatprep.mubr.f32.mxu0 0.0
      %1572 = vmatmul.mubr.f32.gmra.mxu0 %v1437
      %v1573 = vpop.f32.mrf.mxu0
      %v1574 = vadd.f32 0.0, %v1573
      %v1575 = vpop.f32.mrf.mxu0
      %1576 = vmatprep.mubr.f32.mxu0 0.0
      %1577 = vmatmul.mubr.f32.gmra.mxu0 %v1439
      %v1578 = vpop.f32.mrf.mxu0
      %v1579 = vadd.f32 0.0, %v1578
      %v1580 = vpop.f32.mrf.mxu0
      %1581 = vmatprep.mubr.f32.mxu0 0.0
      %1582 = vmatmul.mubr.f32.gmra.mxu0 %v1441
      %v1583 = vpop.f32.mrf.mxu0
      %v1584 = vadd.f32 0.0, %v1583
      %v1585 = vpop.f32.mrf.mxu0
      %1586 = vmatprep.mubr.f32.mxu0 0.0
      %1587 = vmatmul.mubr.f32.gmra.mxu0 %v1443
      %v1588 = vpop.f32.mrf.mxu0
      %v1589 = vadd.f32 0.0, %v1588
      %v1590 = vpop.f32.mrf.mxu0
      %1591 = vmatprep.mubr.f32.mxu0 0.0
      %1592 = vmatmul.mubr.f32.gmra.mxu0 %v1445
      %v1593 = vpop.f32.mrf.mxu0
      %v1594 = vadd.f32 0.0, %v1593
      %v1595 = vpop.f32.mrf.mxu0
      %1596 = vmatprep.mubr.f32.mxu0 0.0
      %1597 = vmatmul.mubr.f32.gmra.mxu0 %v1447
      %v1598 = vpop.f32.mrf.mxu0
      %v1599 = vadd.f32 0.0, %v1598
      %v1600 = vpop.f32.mrf.mxu0
      %1601 = vmatprep.mubr.f32.mxu0 0.0
      %1602 = vmatmul.mubr.f32.gmra.mxu0 %v1449
      %v1603 = vpop.f32.mrf.mxu0
      %v1604 = vadd.f32 0.0, %v1603
      %v1605 = vpop.f32.mrf.mxu0
      %1606 = vmatprep.mubr.f32.mxu0 0.0
      %1607 = vmatmul.mubr.f32.gmra.mxu0 %v1451
      %v1608 = vpop.f32.mrf.mxu0
      %v1609 = vadd.f32 0.0, %v1608
      %v1610 = vpop.f32.mrf.mxu0
      %1611 = vmatprep.mubr.f32.mxu0 0.0
      %1612 = vmatmul.mubr.f32.gmra.mxu0 %v1453
      %v1613 = vpop.f32.mrf.mxu0
      %v1614 = vadd.f32 0.0, %v1613
      %v1615 = vpop.f32.mrf.mxu0
      %1616 = vmatprep.mubr.f32.mxu0 0.0
      %1617 = vmatmul.mubr.f32.gmra.mxu0 %v1455
      %v1618 = vpop.f32.mrf.mxu0
      %v1619 = vadd.f32 0.0, %v1618
      %v1620 = vpop.f32.mrf.mxu0
      %1621 = vmatprep.mubr.f32.mxu0 0.0
      %1622 = vmatmul.mubr.f32.gmra.mxu0 %v1457
      %v1623 = vpop.f32.mrf.mxu0
      %v1624 = vadd.f32 0.0, %v1623
      %v1625 = vpop.f32.mrf.mxu0
      %1626 = vmatprep.mubr.f32.mxu0 0.0
      %1627 = vmatmul.mubr.f32.gmra.mxu0 %v1459
      %v1628 = vpop.f32.mrf.mxu0
      %v1629 = vadd.f32 0.0, %v1628
      %v1630 = vpop.f32.mrf.mxu0
      %1631 = vmatprep.mubr.f32.mxu0 0.0
      %1632 = vmatmul.mubr.f32.gmra.mxu0 %v1461
      %v1633 = vpop.f32.mrf.mxu0
      %v1634 = vadd.f32 0.0, %v1633
      %v1635 = vpop.f32.mrf.mxu0
      %1636 = vmatprep.mubr.f32.mxu0 0.0
      %1637 = vmatmul.mubr.f32.gmra.mxu0 %v1463
      %v1638 = vpop.f32.mrf.mxu0
      %v1639 = vadd.f32 0.0, %v1638
      %v1640 = vpop.f32.mrf.mxu0
      %1641 = vdwg.mxu0
      %v1642 = vtanh.pop %v1564
      %v1643 = vtanh.pop %v1569
      %v1644 = vtanh.pop %v1574
      %v1645 = vtanh.pop %v1579
      %v1646 = vtanh.pop %v1584
      %v1647 = vtanh.pop %v1589
      %v1648 = vtanh.pop %v1594
      %v1649 = vtanh.pop %v1599
      %v1650 = vtanh.pop %v1604
      %v1651 = vtanh.pop %v1609
      %v1652 = vtanh.pop %v1614
      %v1653 = vtanh.pop %v1619
      %v1654 = vtanh.pop %v1624
      %v1655 = vtanh.pop %v1629
      %v1656 = vtanh.pop %v1634
      %v1657 = vtanh.pop %v1639
      %v1658 = vmul.f32 %v1642, 8.0
      %v1659 = vmul.f32 %v1643, 8.0
      %v1660 = vmul.f32 %v1644, 8.0
      %v1661 = vmul.f32 %v1645, 8.0
      %v1662 = vmul.f32 %v1646, 8.0
      %v1663 = vmul.f32 %v1647, 8.0
      %v1664 = vmul.f32 %v1648, 8.0
      %v1665 = vmul.f32 %v1649, 8.0
      %v1666 = vmul.f32 %v1650, 8.0
      %v1667 = vmul.f32 %v1651, 8.0
      %v1668 = vmul.f32 %v1652, 8.0
      %v1669 = vmul.f32 %v1653, 8.0
      %v1670 = vmul.f32 %v1654, 8.0
      %v1671 = vmul.f32 %v1655, 8.0
      %v1672 = vmul.f32 %v1656, 8.0
      %v1673 = vmul.f32 %v1657, 8.0
      %v1674 = vmul.f32 %v1658, 1.442695
      %v1675 = vpow.pop %v1674
      %v1676 = vmul.f32 %v1659, 1.442695
      %v1677 = vpow.pop %v1676
      %v1678 = vmul.f32 %v1660, 1.442695
      %v1679 = vpow.pop %v1678
      %v1680 = vmul.f32 %v1661, 1.442695
      %v1681 = vpow.pop %v1680
      %v1682 = vmul.f32 %v1662, 1.442695
      %v1683 = vpow.pop %v1682
      %v1684 = vmul.f32 %v1663, 1.442695
      %v1685 = vpow.pop %v1684
      %v1686 = vmul.f32 %v1664, 1.442695
      %v1687 = vpow.pop %v1686
      %v1688 = vmul.f32 %v1665, 1.442695
      %v1689 = vpow.pop %v1688
      %v1690 = vmul.f32 %v1666, 1.442695
      %v1691 = vpow.pop %v1690
      %v1692 = vmul.f32 %v1667, 1.442695
      %v1693 = vpow.pop %v1692
      %v1694 = vmul.f32 %v1668, 1.442695
      %v1695 = vpow.pop %v1694
      %v1696 = vmul.f32 %v1669, 1.442695
      %v1697 = vpow.pop %v1696
      %v1698 = vmul.f32 %v1670, 1.442695
      %v1699 = vpow.pop %v1698
      %v1700 = vmul.f32 %v1671, 1.442695
      %v1701 = vpow.pop %v1700
      %v1702 = vmul.f32 %v1672, 1.442695
      %v1703 = vpow.pop %v1702
      %v1704 = vmul.f32 %v1673, 1.442695
      %v1705 = vpow.pop %v1704
      %v1706 = vsel %vm1112, %v1675, 0.0
      %v1707 = vsel %vm1113, %v1677, 0.0
      %v1708 = vsel %vm1114, %v1679, 0.0
      %v1709 = vsel %vm1115, %v1681, 0.0
      %v1710 = vsel %vm1116, %v1683, 0.0
      %v1711 = vsel %vm1117, %v1685, 0.0
      %v1712 = vsel %vm1118, %v1687, 0.0
      %v1713 = vsel %vm1119, %v1689, 0.0
      %v1714 = vsel %vm1120, %v1691, 0.0
      %v1715 = vsel %vm1121, %v1693, 0.0
      %v1716 = vsel %vm1122, %v1695, 0.0
      %v1717 = vsel %vm1123, %v1697, 0.0
      %v1718 = vsel %vm1124, %v1699, 0.0
      %v1719 = vsel %vm1125, %v1701, 0.0
      %v1720 = vsel %vm1126, %v1703, 0.0
      %v1721 = vsel %vm1127, %v1705, 0.0
      %1722 = vadd.xlane.f32.xlu0 %v1706
      %v1723 = vpop.xlane.xlu0 %1722
      %1724 = vadd.xlane.f32.xlu0 %v1707
      %v1725 = vpop.xlane.xlu0 %1724
      %1726 = vadd.xlane.f32.xlu0 %v1708
      %v1727 = vpop.xlane.xlu0 %1726
      %1728 = vadd.xlane.f32.xlu0 %v1709
      %v1729 = vpop.xlane.xlu0 %1728
      %1730 = vadd.xlane.f32.xlu0 %v1710
      %v1731 = vpop.xlane.xlu0 %1730
      %1732 = vadd.xlane.f32.xlu0 %v1711
      %v1733 = vpop.xlane.xlu0 %1732
      %1734 = vadd.xlane.f32.xlu0 %v1712
      %v1735 = vpop.xlane.xlu0 %1734
      %1736 = vadd.xlane.f32.xlu0 %v1713
      %v1737 = vpop.xlane.xlu0 %1736
      %1738 = vadd.xlane.f32.xlu0 %v1714
      %v1739 = vpop.xlane.xlu0 %1738
      %1740 = vadd.xlane.f32.xlu0 %v1715
      %v1741 = vpop.xlane.xlu0 %1740
      %1742 = vadd.xlane.f32.xlu0 %v1716
      %v1743 = vpop.xlane.xlu0 %1742
      %1744 = vadd.xlane.f32.xlu0 %v1717
      %v1745 = vpop.xlane.xlu0 %1744
      %1746 = vadd.xlane.f32.xlu0 %v1718
      %v1747 = vpop.xlane.xlu0 %1746
      %1748 = vadd.xlane.f32.xlu0 %v1719
      %v1749 = vpop.xlane.xlu0 %1748
      %1750 = vadd.xlane.f32.xlu0 %v1720
      %v1751 = vpop.xlane.xlu0 %1750
      %1752 = vadd.xlane.f32.xlu0 %v1721
      %v1753 = vpop.xlane.xlu0 %1752
      %1770 = vrot.lane.b32.xlu0 %v683, 96
      %v1771 = vpop.permute.xlu0 %1770
      %1772 = vrot.lane.b32.xlu0 %v684, 96
      %v1773 = vpop.permute.xlu0 %1772
      %1774 = vrot.lane.b32.xlu0 %v685, 96
      %v1775 = vpop.permute.xlu0 %1774
      %1776 = vrot.lane.b32.xlu0 %v686, 96
      %v1777 = vpop.permute.xlu0 %1776
      %1778 = vrot.lane.b32.xlu0 %v687, 96
      %v1779 = vpop.permute.xlu0 %1778
      %1780 = vrot.lane.b32.xlu0 %v688, 96
      %v1781 = vpop.permute.xlu0 %1780
      %1782 = vrot.lane.b32.xlu0 %v689, 96
      %v1783 = vpop.permute.xlu0 %1782
      %1784 = vrot.lane.b32.xlu0 %v690, 96
      %v1785 = vpop.permute.xlu0 %1784
      %1786 = vrot.lane.b32.xlu0 %v691, 96
      %v1787 = vpop.permute.xlu0 %1786
      %1788 = vrot.lane.b32.xlu0 %v692, 96
      %v1789 = vpop.permute.xlu0 %1788
      %1790 = vrot.lane.b32.xlu0 %v693, 96
      %v1791 = vpop.permute.xlu0 %1790
      %1792 = vrot.lane.b32.xlu0 %v694, 96
      %v1793 = vpop.permute.xlu0 %1792
      %1794 = vrot.lane.b32.xlu0 %v695, 96
      %v1795 = vpop.permute.xlu0 %1794
      %1796 = vrot.lane.b32.xlu0 %v696, 96
      %v1797 = vpop.permute.xlu0 %1796
      %1798 = vrot.lane.b32.xlu0 %v697, 96
      %v1799 = vpop.permute.xlu0 %1798
      %1800 = vrot.lane.b32.xlu0 %v698, 96
      %v1801 = vpop.permute.xlu0 %1800
      %1818 = vmatprep.subr.mxu0 0.0
      %1819 = vmatpush1.msra.mxu0 %v1801
      %1820 = vmatprep.subr.mxu0 0.0
      %1821 = vmatpush1.msra.mxu0 %v1799
      %1822 = vmatprep.subr.mxu0 0.0
      %1823 = vmatpush1.msra.mxu0 %v1797
      %1824 = vmatprep.subr.mxu0 0.0
      %1825 = vmatpush1.msra.mxu0 %v1795
      %1826 = vmatprep.subr.mxu0 0.0
      %1827 = vmatpush1.msra.mxu0 %v1793
      %1828 = vmatprep.subr.mxu0 0.0
      %1829 = vmatpush1.msra.mxu0 %v1791
      %1830 = vmatprep.subr.mxu0 0.0
      %1831 = vmatpush1.msra.mxu0 %v1789
      %1832 = vmatprep.subr.mxu0 0.0
      %1833 = vmatpush1.msra.mxu0 %v1787
      %1834 = vmatprep.subr.mxu0 0.0
      %1835 = vmatpush1.msra.mxu0 %v1785
      %1836 = vmatprep.subr.mxu0 0.0
      %1837 = vmatpush1.msra.mxu0 %v1783
      %1838 = vmatprep.subr.mxu0 0.0
      %1839 = vmatpush1.msra.mxu0 %v1781
      %1840 = vmatprep.subr.mxu0 0.0
      %1841 = vmatpush1.msra.mxu0 %v1779
      %1842 = vmatprep.subr.mxu0 0.0
      %1843 = vmatpush1.msra.mxu0 %v1777
      %1844 = vmatprep.subr.mxu0 0.0
      %1845 = vmatpush1.msra.mxu0 %v1775
      %1846 = vmatprep.subr.mxu0 0.0
      %1847 = vmatpush1.msra.mxu0 %v1773
      %1848 = vmatprep.subr.mxu0 0.0
      %1849 = vmatpush1.msra.mxu0 %v1771
      %1850 = vmatprep.subr.mxu0 0.0
      %1851 = vmatpush2.msra.mxu0 0.0
      %1852 = vmatprep.subr.mxu0 0.0
      %1853 = vmatpush2.msra.mxu0 0.0
      %1854 = vmatprep.subr.mxu0 0.0
      %1855 = vmatpush2.msra.mxu0 0.0
      %1856 = vmatprep.subr.mxu0 0.0
      %1857 = vmatpush2.msra.mxu0 0.0
      %1858 = vmatprep.subr.mxu0 0.0
      %1859 = vmatpush2.msra.mxu0 0.0
      %1860 = vmatprep.subr.mxu0 0.0
      %1861 = vmatpush2.msra.mxu0 0.0
      %1862 = vmatprep.subr.mxu0 0.0
      %1863 = vmatpush2.msra.mxu0 0.0
      %1864 = vmatprep.subr.mxu0 0.0
      %1865 = vmatpush2.msra.mxu0 0.0
      %1866 = vmatprep.subr.mxu0 0.0
      %1867 = vmatpush2.msra.mxu0 0.0
      %1868 = vmatprep.subr.mxu0 0.0
      %1869 = vmatpush2.msra.mxu0 0.0
      %1870 = vmatprep.subr.mxu0 0.0
      %1871 = vmatpush2.msra.mxu0 0.0
      %1872 = vmatprep.subr.mxu0 0.0
      %1873 = vmatpush2.msra.mxu0 0.0
      %1874 = vmatprep.subr.mxu0 0.0
      %1875 = vmatpush2.msra.mxu0 0.0
      %1876 = vmatprep.subr.mxu0 0.0
      %1877 = vmatpush2.msra.mxu0 0.0
      %1878 = vmatprep.subr.mxu0 0.0
      %1879 = vmatpush2.msra.mxu0 0.0
      %1880 = vmatprep.subr.mxu0 0.0
      %1881 = vmatpush2.msra.mxu0 0.0
      %1882 = vmatprep.mubr.f32.mxu0 0.0
      %1883 = vmatmul.mubr.f32.gmra.mxu0 %v1706
      %v1884 = vpop.f32.mrf.mxu0
      %v1885 = vadd.f32 0.0, %v1884
      %v1886 = vpop.f32.mrf.mxu0
      %1887 = vmatprep.mubr.f32.mxu0 0.0
      %1888 = vmatmul.mubr.f32.gmra.mxu0 %v1707
      %v1889 = vpop.f32.mrf.mxu0
      %v1890 = vadd.f32 0.0, %v1889
      %v1891 = vpop.f32.mrf.mxu0
      %1892 = vmatprep.mubr.f32.mxu0 0.0
      %1893 = vmatmul.mubr.f32.gmra.mxu0 %v1708
      %v1894 = vpop.f32.mrf.mxu0
      %v1895 = vadd.f32 0.0, %v1894
      %v1896 = vpop.f32.mrf.mxu0
      %1897 = vmatprep.mubr.f32.mxu0 0.0
      %1898 = vmatmul.mubr.f32.gmra.mxu0 %v1709
      %v1899 = vpop.f32.mrf.mxu0
      %v1900 = vadd.f32 0.0, %v1899
      %v1901 = vpop.f32.mrf.mxu0
      %1902 = vmatprep.mubr.f32.mxu0 0.0
      %1903 = vmatmul.mubr.f32.gmra.mxu0 %v1710
      %v1904 = vpop.f32.mrf.mxu0
      %v1905 = vadd.f32 0.0, %v1904
      %v1906 = vpop.f32.mrf.mxu0
      %1907 = vmatprep.mubr.f32.mxu0 0.0
      %1908 = vmatmul.mubr.f32.gmra.mxu0 %v1711
      %v1909 = vpop.f32.mrf.mxu0
      %v1910 = vadd.f32 0.0, %v1909
      %v1911 = vpop.f32.mrf.mxu0
      %1912 = vmatprep.mubr.f32.mxu0 0.0
      %1913 = vmatmul.mubr.f32.gmra.mxu0 %v1712
      %v1914 = vpop.f32.mrf.mxu0
      %v1915 = vadd.f32 0.0, %v1914
      %v1916 = vpop.f32.mrf.mxu0
      %1917 = vmatprep.mubr.f32.mxu0 0.0
      %1918 = vmatmul.mubr.f32.gmra.mxu0 %v1713
      %v1919 = vpop.f32.mrf.mxu0
      %v1920 = vadd.f32 0.0, %v1919
      %v1921 = vpop.f32.mrf.mxu0
      %1922 = vmatprep.mubr.f32.mxu0 0.0
      %1923 = vmatmul.mubr.f32.gmra.mxu0 %v1714
      %v1924 = vpop.f32.mrf.mxu0
      %v1925 = vadd.f32 0.0, %v1924
      %v1926 = vpop.f32.mrf.mxu0
      %1927 = vmatprep.mubr.f32.mxu0 0.0
      %1928 = vmatmul.mubr.f32.gmra.mxu0 %v1715
      %v1929 = vpop.f32.mrf.mxu0
      %v1930 = vadd.f32 0.0, %v1929
      %v1931 = vpop.f32.mrf.mxu0
      %1932 = vmatprep.mubr.f32.mxu0 0.0
      %1933 = vmatmul.mubr.f32.gmra.mxu0 %v1716
      %v1934 = vpop.f32.mrf.mxu0
      %v1935 = vadd.f32 0.0, %v1934
      %v1936 = vpop.f32.mrf.mxu0
      %1937 = vmatprep.mubr.f32.mxu0 0.0
      %1938 = vmatmul.mubr.f32.gmra.mxu0 %v1717
      %v1939 = vpop.f32.mrf.mxu0
      %v1940 = vadd.f32 0.0, %v1939
      %v1941 = vpop.f32.mrf.mxu0
      %1942 = vmatprep.mubr.f32.mxu0 0.0
      %1943 = vmatmul.mubr.f32.gmra.mxu0 %v1718
      %v1944 = vpop.f32.mrf.mxu0
      %v1945 = vadd.f32 0.0, %v1944
      %v1946 = vpop.f32.mrf.mxu0
      %1947 = vmatprep.mubr.f32.mxu0 0.0
      %1948 = vmatmul.mubr.f32.gmra.mxu0 %v1719
      %v1949 = vpop.f32.mrf.mxu0
      %v1950 = vadd.f32 0.0, %v1949
      %v1951 = vpop.f32.mrf.mxu0
      %1952 = vmatprep.mubr.f32.mxu0 0.0
      %1953 = vmatmul.mubr.f32.gmra.mxu0 %v1720
      %v1954 = vpop.f32.mrf.mxu0
      %v1955 = vadd.f32 0.0, %v1954
      %v1956 = vpop.f32.mrf.mxu0
      %1957 = vmatprep.mubr.f32.mxu0 0.0
      %1958 = vmatmul.mubr.f32.gmra.mxu0 %v1721
      %v1959 = vpop.f32.mrf.mxu0
      %v1960 = vadd.f32 0.0, %v1959
      %v1961 = vpop.f32.mrf.mxu0
      %1962 = vdwg.mxu0
      %v1963 = vrcp.pop %v1723
      %v1964 = vrcp.pop %v1725
      %v1965 = vrcp.pop %v1727
      %v1966 = vrcp.pop %v1729
      %v1967 = vrcp.pop %v1731
      %v1968 = vrcp.pop %v1733
      %v1969 = vrcp.pop %v1735
      %v1970 = vrcp.pop %v1737
      %v1971 = vrcp.pop %v1739
      %v1972 = vrcp.pop %v1741
      %v1973 = vrcp.pop %v1743
      %v1974 = vrcp.pop %v1745
      %v1975 = vrcp.pop %v1747
      %v1976 = vrcp.pop %v1749
      %v1977 = vrcp.pop %v1751
      %v1978 = vrcp.pop %v1753
      %v1979 = vmul.f32 %v1885, %v1963
      %v1980 = vmul.f32 %v1890, %v1964
      %v1981 = vmul.f32 %v1895, %v1965
      %v1982 = vmul.f32 %v1900, %v1966
      %v1983 = vmul.f32 %v1905, %v1967
      %v1984 = vmul.f32 %v1910, %v1968
      %v1985 = vmul.f32 %v1915, %v1969
      %v1986 = vmul.f32 %v1920, %v1970
      %v1987 = vmul.f32 %v1925, %v1971
      %v1988 = vmul.f32 %v1930, %v1972
      %v1989 = vmul.f32 %v1935, %v1973
      %v1990 = vmul.f32 %v1940, %v1974
      %v1991 = vmul.f32 %v1945, %v1975
      %v1992 = vmul.f32 %v1950, %v1976
      %v1993 = vmul.f32 %v1955, %v1977
      %v1994 = vmul.f32 %v1960, %v1978
      %v1995 = vadd.f32 %v1353, %v1979
      %v1996 = vadd.f32 %v1354, %v1980
      %v1997 = vadd.f32 %v1355, %v1981
      %v1998 = vadd.f32 %v1356, %v1982
      %v1999 = vadd.f32 %v1357, %v1983
      %v2000 = vadd.f32 %v1358, %v1984
      %v2001 = vadd.f32 %v1359, %v1985
      %v2002 = vadd.f32 %v1360, %v1986
      %v2003 = vadd.f32 %v1361, %v1987
      %v2004 = vadd.f32 %v1362, %v1988
      %v2005 = vadd.f32 %v1363, %v1989
      %v2006 = vadd.f32 %v1364, %v1990
      %v2007 = vadd.f32 %v1365, %v1991
      %v2008 = vadd.f32 %v1366, %v1992
      %v2009 = vadd.f32 %v1367, %v1993
      %v2010 = vadd.f32 %v1368, %v1994
      %2011 = vrot.lane.b32.xlu0 %v651, 64
      %v2012 = vpop.permute.xlu0 %2011
      %2013 = vrot.lane.b32.xlu0 %v652, 64
      %v2014 = vpop.permute.xlu0 %2013
      %2015 = vrot.lane.b32.xlu0 %v653, 64
      %v2016 = vpop.permute.xlu0 %2015
      %2017 = vrot.lane.b32.xlu0 %v654, 64
      %v2018 = vpop.permute.xlu0 %2017
      %2019 = vrot.lane.b32.xlu0 %v655, 64
      %v2020 = vpop.permute.xlu0 %2019
      %2021 = vrot.lane.b32.xlu0 %v656, 64
      %v2022 = vpop.permute.xlu0 %2021
      %2023 = vrot.lane.b32.xlu0 %v657, 64
      %v2024 = vpop.permute.xlu0 %2023
      %2025 = vrot.lane.b32.xlu0 %v658, 64
      %v2026 = vpop.permute.xlu0 %2025
      %2027 = vrot.lane.b32.xlu0 %v659, 64
      %v2028 = vpop.permute.xlu0 %2027
      %2029 = vrot.lane.b32.xlu0 %v660, 64
      %v2030 = vpop.permute.xlu0 %2029
      %2031 = vrot.lane.b32.xlu0 %v661, 64
      %v2032 = vpop.permute.xlu0 %2031
      %2033 = vrot.lane.b32.xlu0 %v662, 64
      %v2034 = vpop.permute.xlu0 %2033
      %2035 = vrot.lane.b32.xlu0 %v663, 64
      %v2036 = vpop.permute.xlu0 %2035
      %2037 = vrot.lane.b32.xlu0 %v664, 64
      %v2038 = vpop.permute.xlu0 %2037
      %2039 = vrot.lane.b32.xlu0 %v665, 64
      %v2040 = vpop.permute.xlu0 %2039
      %2041 = vrot.lane.b32.xlu0 %v666, 64
      %v2042 = vpop.permute.xlu0 %2041
      %2043 = vrot.lane.b32.xlu0 %v667, 64
      %v2044 = vpop.permute.xlu0 %2043
      %2045 = vrot.lane.b32.xlu0 %v668, 64
      %v2046 = vpop.permute.xlu0 %2045
      %2047 = vrot.lane.b32.xlu0 %v669, 64
      %v2048 = vpop.permute.xlu0 %2047
      %2049 = vrot.lane.b32.xlu0 %v670, 64
      %v2050 = vpop.permute.xlu0 %2049
      %2051 = vrot.lane.b32.xlu0 %v671, 64
      %v2052 = vpop.permute.xlu0 %2051
      %2053 = vrot.lane.b32.xlu0 %v672, 64
      %v2054 = vpop.permute.xlu0 %2053
      %2055 = vrot.lane.b32.xlu0 %v673, 64
      %v2056 = vpop.permute.xlu0 %2055
      %2057 = vrot.lane.b32.xlu0 %v674, 64
      %v2058 = vpop.permute.xlu0 %2057
      %2059 = vrot.lane.b32.xlu0 %v675, 64
      %v2060 = vpop.permute.xlu0 %2059
      %2061 = vrot.lane.b32.xlu0 %v676, 64
      %v2062 = vpop.permute.xlu0 %2061
      %2063 = vrot.lane.b32.xlu0 %v677, 64
      %v2064 = vpop.permute.xlu0 %2063
      %2065 = vrot.lane.b32.xlu0 %v678, 64
      %v2066 = vpop.permute.xlu0 %2065
      %2067 = vrot.lane.b32.xlu0 %v679, 64
      %v2068 = vpop.permute.xlu0 %2067
      %2069 = vrot.lane.b32.xlu0 %v680, 64
      %v2070 = vpop.permute.xlu0 %2069
      %2071 = vrot.lane.b32.xlu0 %v681, 64
      %v2072 = vpop.permute.xlu0 %2071
      %2073 = vrot.lane.b32.xlu0 %v682, 64
      %v2074 = vpop.permute.xlu0 %2073
      %v2075 = vsel %vm248, %v2012, 0
      %v2077 = vsel %vm248, %v2014, 0
      %v2079 = vsel %vm248, %v2016, 0
      %v2081 = vsel %vm248, %v2018, 0
      %v2083 = vsel %vm248, %v2020, 0
      %v2085 = vsel %vm248, %v2022, 0
      %v2087 = vsel %vm248, %v2024, 0
      %v2089 = vsel %vm248, %v2026, 0
      %v2091 = vsel %vm248, %v2028, 0
      %v2093 = vsel %vm248, %v2030, 0
      %v2095 = vsel %vm248, %v2032, 0
      %v2097 = vsel %vm248, %v2034, 0
      %v2099 = vsel %vm248, %v2036, 0
      %v2101 = vsel %vm248, %v2038, 0
      %v2103 = vsel %vm248, %v2040, 0
      %v2105 = vsel %vm248, %v2042, 0
      %v2107 = vsel %vm248, %v2044, 0
      %v2109 = vsel %vm248, %v2046, 0
      %v2111 = vsel %vm248, %v2048, 0
      %v2113 = vsel %vm248, %v2050, 0
      %v2115 = vsel %vm248, %v2052, 0
      %v2117 = vsel %vm248, %v2054, 0
      %v2119 = vsel %vm248, %v2056, 0
      %v2121 = vsel %vm248, %v2058, 0
      %v2123 = vsel %vm248, %v2060, 0
      %v2125 = vsel %vm248, %v2062, 0
      %v2127 = vsel %vm248, %v2064, 0
      %v2129 = vsel %vm248, %v2066, 0
      %v2131 = vsel %vm248, %v2068, 0
      %v2133 = vsel %vm248, %v2070, 0
      %v2135 = vsel %vm248, %v2072, 0
      %v2137 = vsel %vm248, %v2074, 0
      %2139 = vmatprep.subr.mxu0 0.0
      %2140 = vmatpush1.xpose.msra.mxu0 %v2137
      %2141 = vmatprep.subr.mxu0 0.0
      %2142 = vmatpush1.xpose.msra.mxu0 %v2135
      %2143 = vmatprep.subr.mxu0 0.0
      %2144 = vmatpush1.xpose.msra.mxu0 %v2133
      %2145 = vmatprep.subr.mxu0 0.0
      %2146 = vmatpush1.xpose.msra.mxu0 %v2131
      %2147 = vmatprep.subr.mxu0 0.0
      %2148 = vmatpush1.xpose.msra.mxu0 %v2129
      %2149 = vmatprep.subr.mxu0 0.0
      %2150 = vmatpush1.xpose.msra.mxu0 %v2127
      %2151 = vmatprep.subr.mxu0 0.0
      %2152 = vmatpush1.xpose.msra.mxu0 %v2125
      %2153 = vmatprep.subr.mxu0 0.0
      %2154 = vmatpush1.xpose.msra.mxu0 %v2123
      %2155 = vmatprep.subr.mxu0 0.0
      %2156 = vmatpush1.xpose.msra.mxu0 %v2121
      %2157 = vmatprep.subr.mxu0 0.0
      %2158 = vmatpush1.xpose.msra.mxu0 %v2119
      %2159 = vmatprep.subr.mxu0 0.0
      %2160 = vmatpush1.xpose.msra.mxu0 %v2117
      %2161 = vmatprep.subr.mxu0 0.0
      %2162 = vmatpush1.xpose.msra.mxu0 %v2115
      %2163 = vmatprep.subr.mxu0 0.0
      %2164 = vmatpush1.xpose.msra.mxu0 %v2113
      %2165 = vmatprep.subr.mxu0 0.0
      %2166 = vmatpush1.xpose.msra.mxu0 %v2111
      %2167 = vmatprep.subr.mxu0 0.0
      %2168 = vmatpush1.xpose.msra.mxu0 %v2109
      %2169 = vmatprep.subr.mxu0 0.0
      %2170 = vmatpush1.xpose.msra.mxu0 %v2107
      %2171 = vmatprep.subr.mxu0 0.0
      %2172 = vmatpush2.xpose.msra.mxu0 0.0
      %2173 = vmatprep.subr.mxu0 0.0
      %2174 = vmatpush2.xpose.msra.mxu0 0.0
      %2175 = vmatprep.subr.mxu0 0.0
      %2176 = vmatpush2.xpose.msra.mxu0 0.0
      %2177 = vmatprep.subr.mxu0 0.0
      %2178 = vmatpush2.xpose.msra.mxu0 0.0
      %2179 = vmatprep.subr.mxu0 0.0
      %2180 = vmatpush2.xpose.msra.mxu0 0.0
      %2181 = vmatprep.subr.mxu0 0.0
      %2182 = vmatpush2.xpose.msra.mxu0 0.0
      %2183 = vmatprep.subr.mxu0 0.0
      %2184 = vmatpush2.xpose.msra.mxu0 0.0
      %2185 = vmatprep.subr.mxu0 0.0
      %2186 = vmatpush2.xpose.msra.mxu0 0.0
      %2187 = vmatprep.subr.mxu0 0.0
      %2188 = vmatpush2.xpose.msra.mxu0 0.0
      %2189 = vmatprep.subr.mxu0 0.0
      %2190 = vmatpush2.xpose.msra.mxu0 0.0
      %2191 = vmatprep.subr.mxu0 0.0
      %2192 = vmatpush2.xpose.msra.mxu0 0.0
      %2193 = vmatprep.subr.mxu0 0.0
      %2194 = vmatpush2.xpose.msra.mxu0 0.0
      %2195 = vmatprep.subr.mxu0 0.0
      %2196 = vmatpush2.xpose.msra.mxu0 0.0
      %2197 = vmatprep.subr.mxu0 0.0
      %2198 = vmatpush2.xpose.msra.mxu0 0.0
      %2199 = vmatprep.subr.mxu0 0.0
      %2200 = vmatpush2.xpose.msra.mxu0 0.0
      %2201 = vmatprep.subr.mxu0 0.0
      %2202 = vmatpush2.xpose.msra.mxu0 0.0
      %2203 = vmatprep.mubr.f32.mxu0 0.0
      %2204 = vmatmul.mubr.f32.gmra.mxu0 %v2075
      %v2205 = vpop.f32.mrf.mxu0
      %v2206 = vadd.f32 0.0, %v2205
      %v2207 = vpop.f32.mrf.mxu0
      %2208 = vmatprep.mubr.f32.mxu0 0.0
      %2209 = vmatmul.mubr.f32.gmra.mxu0 %v2077
      %v2210 = vpop.f32.mrf.mxu0
      %v2211 = vadd.f32 0.0, %v2210
      %v2212 = vpop.f32.mrf.mxu0
      %2213 = vmatprep.mubr.f32.mxu0 0.0
      %2214 = vmatmul.mubr.f32.gmra.mxu0 %v2079
      %v2215 = vpop.f32.mrf.mxu0
      %v2216 = vadd.f32 0.0, %v2215
      %v2217 = vpop.f32.mrf.mxu0
      %2218 = vmatprep.mubr.f32.mxu0 0.0
      %2219 = vmatmul.mubr.f32.gmra.mxu0 %v2081
      %v2220 = vpop.f32.mrf.mxu0
      %v2221 = vadd.f32 0.0, %v2220
      %v2222 = vpop.f32.mrf.mxu0
      %2223 = vmatprep.mubr.f32.mxu0 0.0
      %2224 = vmatmul.mubr.f32.gmra.mxu0 %v2083
      %v2225 = vpop.f32.mrf.mxu0
      %v2226 = vadd.f32 0.0, %v2225
      %v2227 = vpop.f32.mrf.mxu0
      %2228 = vmatprep.mubr.f32.mxu0 0.0
      %2229 = vmatmul.mubr.f32.gmra.mxu0 %v2085
      %v2230 = vpop.f32.mrf.mxu0
      %v2231 = vadd.f32 0.0, %v2230
      %v2232 = vpop.f32.mrf.mxu0
      %2233 = vmatprep.mubr.f32.mxu0 0.0
      %2234 = vmatmul.mubr.f32.gmra.mxu0 %v2087
      %v2235 = vpop.f32.mrf.mxu0
      %v2236 = vadd.f32 0.0, %v2235
      %v2237 = vpop.f32.mrf.mxu0
      %2238 = vmatprep.mubr.f32.mxu0 0.0
      %2239 = vmatmul.mubr.f32.gmra.mxu0 %v2089
      %v2240 = vpop.f32.mrf.mxu0
      %v2241 = vadd.f32 0.0, %v2240
      %v2242 = vpop.f32.mrf.mxu0
      %2243 = vmatprep.mubr.f32.mxu0 0.0
      %2244 = vmatmul.mubr.f32.gmra.mxu0 %v2091
      %v2245 = vpop.f32.mrf.mxu0
      %v2246 = vadd.f32 0.0, %v2245
      %v2247 = vpop.f32.mrf.mxu0
      %2248 = vmatprep.mubr.f32.mxu0 0.0
      %2249 = vmatmul.mubr.f32.gmra.mxu0 %v2093
      %v2250 = vpop.f32.mrf.mxu0
      %v2251 = vadd.f32 0.0, %v2250
      %v2252 = vpop.f32.mrf.mxu0
      %2253 = vmatprep.mubr.f32.mxu0 0.0
      %2254 = vmatmul.mubr.f32.gmra.mxu0 %v2095
      %v2255 = vpop.f32.mrf.mxu0
      %v2256 = vadd.f32 0.0, %v2255
      %v2257 = vpop.f32.mrf.mxu0
      %2258 = vmatprep.mubr.f32.mxu0 0.0
      %2259 = vmatmul.mubr.f32.gmra.mxu0 %v2097
      %v2260 = vpop.f32.mrf.mxu0
      %v2261 = vadd.f32 0.0, %v2260
      %v2262 = vpop.f32.mrf.mxu0
      %2263 = vmatprep.mubr.f32.mxu0 0.0
      %2264 = vmatmul.mubr.f32.gmra.mxu0 %v2099
      %v2265 = vpop.f32.mrf.mxu0
      %v2266 = vadd.f32 0.0, %v2265
      %v2267 = vpop.f32.mrf.mxu0
      %2268 = vmatprep.mubr.f32.mxu0 0.0
      %2269 = vmatmul.mubr.f32.gmra.mxu0 %v2101
      %v2270 = vpop.f32.mrf.mxu0
      %v2271 = vadd.f32 0.0, %v2270
      %v2272 = vpop.f32.mrf.mxu0
      %2273 = vmatprep.mubr.f32.mxu0 0.0
      %2274 = vmatmul.mubr.f32.gmra.mxu0 %v2103
      %v2275 = vpop.f32.mrf.mxu0
      %v2276 = vadd.f32 0.0, %v2275
      %v2277 = vpop.f32.mrf.mxu0
      %2278 = vmatprep.mubr.f32.mxu0 0.0
      %2279 = vmatmul.mubr.f32.gmra.mxu0 %v2105
      %v2280 = vpop.f32.mrf.mxu0
      %v2281 = vadd.f32 0.0, %v2280
      %v2282 = vpop.f32.mrf.mxu0
      %2283 = vdwg.mxu0
      %v2284 = vtanh.pop %v2206
      %v2285 = vtanh.pop %v2211
      %v2286 = vtanh.pop %v2216
      %v2287 = vtanh.pop %v2221
      %v2288 = vtanh.pop %v2226
      %v2289 = vtanh.pop %v2231
      %v2290 = vtanh.pop %v2236
      %v2291 = vtanh.pop %v2241
      %v2292 = vtanh.pop %v2246
      %v2293 = vtanh.pop %v2251
      %v2294 = vtanh.pop %v2256
      %v2295 = vtanh.pop %v2261
      %v2296 = vtanh.pop %v2266
      %v2297 = vtanh.pop %v2271
      %v2298 = vtanh.pop %v2276
      %v2299 = vtanh.pop %v2281
      %v2300 = vmul.f32 %v2284, 8.0
      %v2301 = vmul.f32 %v2285, 8.0
      %v2302 = vmul.f32 %v2286, 8.0
      %v2303 = vmul.f32 %v2287, 8.0
      %v2304 = vmul.f32 %v2288, 8.0
      %v2305 = vmul.f32 %v2289, 8.0
      %v2306 = vmul.f32 %v2290, 8.0
      %v2307 = vmul.f32 %v2291, 8.0
      %v2308 = vmul.f32 %v2292, 8.0
      %v2309 = vmul.f32 %v2293, 8.0
      %v2310 = vmul.f32 %v2294, 8.0
      %v2311 = vmul.f32 %v2295, 8.0
      %v2312 = vmul.f32 %v2296, 8.0
      %v2313 = vmul.f32 %v2297, 8.0
      %v2314 = vmul.f32 %v2298, 8.0
      %v2315 = vmul.f32 %v2299, 8.0
      %v2316 = vmul.f32 %v2300, 1.442695
      %v2317 = vpow.pop %v2316
      %v2318 = vmul.f32 %v2301, 1.442695
      %v2319 = vpow.pop %v2318
      %v2320 = vmul.f32 %v2302, 1.442695
      %v2321 = vpow.pop %v2320
      %v2322 = vmul.f32 %v2303, 1.442695
      %v2323 = vpow.pop %v2322
      %v2324 = vmul.f32 %v2304, 1.442695
      %v2325 = vpow.pop %v2324
      %v2326 = vmul.f32 %v2305, 1.442695
      %v2327 = vpow.pop %v2326
      %v2328 = vmul.f32 %v2306, 1.442695
      %v2329 = vpow.pop %v2328
      %v2330 = vmul.f32 %v2307, 1.442695
      %v2331 = vpow.pop %v2330
      %v2332 = vmul.f32 %v2308, 1.442695
      %v2333 = vpow.pop %v2332
      %v2334 = vmul.f32 %v2309, 1.442695
      %v2335 = vpow.pop %v2334
      %v2336 = vmul.f32 %v2310, 1.442695
      %v2337 = vpow.pop %v2336
      %v2338 = vmul.f32 %v2311, 1.442695
      %v2339 = vpow.pop %v2338
      %v2340 = vmul.f32 %v2312, 1.442695
      %v2341 = vpow.pop %v2340
      %v2342 = vmul.f32 %v2313, 1.442695
      %v2343 = vpow.pop %v2342
      %v2344 = vmul.f32 %v2314, 1.442695
      %v2345 = vpow.pop %v2344
      %v2346 = vmul.f32 %v2315, 1.442695
      %v2347 = vpow.pop %v2346
      %v2348 = vsel %vm1112, %v2317, 0.0
      %v2349 = vsel %vm1113, %v2319, 0.0
      %v2350 = vsel %vm1114, %v2321, 0.0
      %v2351 = vsel %vm1115, %v2323, 0.0
      %v2352 = vsel %vm1116, %v2325, 0.0
      %v2353 = vsel %vm1117, %v2327, 0.0
      %v2354 = vsel %vm1118, %v2329, 0.0
      %v2355 = vsel %vm1119, %v2331, 0.0
      %v2356 = vsel %vm1120, %v2333, 0.0
      %v2357 = vsel %vm1121, %v2335, 0.0
      %v2358 = vsel %vm1122, %v2337, 0.0
      %v2359 = vsel %vm1123, %v2339, 0.0
      %v2360 = vsel %vm1124, %v2341, 0.0
      %v2361 = vsel %vm1125, %v2343, 0.0
      %v2362 = vsel %vm1126, %v2345, 0.0
      %v2363 = vsel %vm1127, %v2347, 0.0
      %2364 = vadd.xlane.f32.xlu0 %v2348
      %v2365 = vpop.xlane.xlu0 %2364
      %2366 = vadd.xlane.f32.xlu0 %v2349
      %v2367 = vpop.xlane.xlu0 %2366
      %2368 = vadd.xlane.f32.xlu0 %v2350
      %v2369 = vpop.xlane.xlu0 %2368
      %2370 = vadd.xlane.f32.xlu0 %v2351
      %v2371 = vpop.xlane.xlu0 %2370
      %2372 = vadd.xlane.f32.xlu0 %v2352
      %v2373 = vpop.xlane.xlu0 %2372
      %2374 = vadd.xlane.f32.xlu0 %v2353
      %v2375 = vpop.xlane.xlu0 %2374
      %2376 = vadd.xlane.f32.xlu0 %v2354
      %v2377 = vpop.xlane.xlu0 %2376
      %2378 = vadd.xlane.f32.xlu0 %v2355
      %v2379 = vpop.xlane.xlu0 %2378
      %2380 = vadd.xlane.f32.xlu0 %v2356
      %v2381 = vpop.xlane.xlu0 %2380
      %2382 = vadd.xlane.f32.xlu0 %v2357
      %v2383 = vpop.xlane.xlu0 %2382
      %2384 = vadd.xlane.f32.xlu0 %v2358
      %v2385 = vpop.xlane.xlu0 %2384
      %2386 = vadd.xlane.f32.xlu0 %v2359
      %v2387 = vpop.xlane.xlu0 %2386
      %2388 = vadd.xlane.f32.xlu0 %v2360
      %v2389 = vpop.xlane.xlu0 %2388
      %2390 = vadd.xlane.f32.xlu0 %v2361
      %v2391 = vpop.xlane.xlu0 %2390
      %2392 = vadd.xlane.f32.xlu0 %v2362
      %v2393 = vpop.xlane.xlu0 %2392
      %2394 = vadd.xlane.f32.xlu0 %v2363
      %v2395 = vpop.xlane.xlu0 %2394
      %2396 = vrot.lane.b32.xlu0 %v683, 64
      %v2397 = vpop.permute.xlu0 %2396
      %2398 = vrot.lane.b32.xlu0 %v684, 64
      %v2399 = vpop.permute.xlu0 %2398
      %2400 = vrot.lane.b32.xlu0 %v685, 64
      %v2401 = vpop.permute.xlu0 %2400
      %2402 = vrot.lane.b32.xlu0 %v686, 64
      %v2403 = vpop.permute.xlu0 %2402
      %2404 = vrot.lane.b32.xlu0 %v687, 64
      %v2405 = vpop.permute.xlu0 %2404
      %2406 = vrot.lane.b32.xlu0 %v688, 64
      %v2407 = vpop.permute.xlu0 %2406
      %2408 = vrot.lane.b32.xlu0 %v689, 64
      %v2409 = vpop.permute.xlu0 %2408
      %2410 = vrot.lane.b32.xlu0 %v690, 64
      %v2411 = vpop.permute.xlu0 %2410
      %2412 = vrot.lane.b32.xlu0 %v691, 64
      %v2413 = vpop.permute.xlu0 %2412
      %2414 = vrot.lane.b32.xlu0 %v692, 64
      %v2415 = vpop.permute.xlu0 %2414
      %2416 = vrot.lane.b32.xlu0 %v693, 64
      %v2417 = vpop.permute.xlu0 %2416
      %2418 = vrot.lane.b32.xlu0 %v694, 64
      %v2419 = vpop.permute.xlu0 %2418
      %2420 = vrot.lane.b32.xlu0 %v695, 64
      %v2421 = vpop.permute.xlu0 %2420
      %2422 = vrot.lane.b32.xlu0 %v696, 64
      %v2423 = vpop.permute.xlu0 %2422
      %2424 = vrot.lane.b32.xlu0 %v697, 64
      %v2425 = vpop.permute.xlu0 %2424
      %2426 = vrot.lane.b32.xlu0 %v698, 64
      %v2427 = vpop.permute.xlu0 %2426
      %2444 = vmatprep.subr.mxu0 0.0
      %2445 = vmatpush1.msra.mxu0 %v2427
      %2446 = vmatprep.subr.mxu0 0.0
      %2447 = vmatpush1.msra.mxu0 %v2425
      %2448 = vmatprep.subr.mxu0 0.0
      %2449 = vmatpush1.msra.mxu0 %v2423
      %2450 = vmatprep.subr.mxu0 0.0
      %2451 = vmatpush1.msra.mxu0 %v2421
      %2452 = vmatprep.subr.mxu0 0.0
      %2453 = vmatpush1.msra.mxu0 %v2419
      %2454 = vmatprep.subr.mxu0 0.0
      %2455 = vmatpush1.msra.mxu0 %v2417
      %2456 = vmatprep.subr.mxu0 0.0
      %2457 = vmatpush1.msra.mxu0 %v2415
      %2458 = vmatprep.subr.mxu0 0.0
      %2459 = vmatpush1.msra.mxu0 %v2413
      %2460 = vmatprep.subr.mxu0 0.0
      %2461 = vmatpush1.msra.mxu0 %v2411
      %2462 = vmatprep.subr.mxu0 0.0
      %2463 = vmatpush1.msra.mxu0 %v2409
      %2464 = vmatprep.subr.mxu0 0.0
      %2465 = vmatpush1.msra.mxu0 %v2407
      %2466 = vmatprep.subr.mxu0 0.0
      %2467 = vmatpush1.msra.mxu0 %v2405
      %2468 = vmatprep.subr.mxu0 0.0
      %2469 = vmatpush1.msra.mxu0 %v2403
      %2470 = vmatprep.subr.mxu0 0.0
      %2471 = vmatpush1.msra.mxu0 %v2401
      %2472 = vmatprep.subr.mxu0 0.0
      %2473 = vmatpush1.msra.mxu0 %v2399
      %2474 = vmatprep.subr.mxu0 0.0
      %2475 = vmatpush1.msra.mxu0 %v2397
      %2476 = vmatprep.subr.mxu0 0.0
      %2477 = vmatpush2.msra.mxu0 0.0
      %2478 = vmatprep.subr.mxu0 0.0
      %2479 = vmatpush2.msra.mxu0 0.0
      %2480 = vmatprep.subr.mxu0 0.0
      %2481 = vmatpush2.msra.mxu0 0.0
      %2482 = vmatprep.subr.mxu0 0.0
      %2483 = vmatpush2.msra.mxu0 0.0
      %2484 = vmatprep.subr.mxu0 0.0
      %2485 = vmatpush2.msra.mxu0 0.0
      %2486 = vmatprep.subr.mxu0 0.0
      %2487 = vmatpush2.msra.mxu0 0.0
      %2488 = vmatprep.subr.mxu0 0.0
      %2489 = vmatpush2.msra.mxu0 0.0
      %2490 = vmatprep.subr.mxu0 0.0
      %2491 = vmatpush2.msra.mxu0 0.0
      %2492 = vmatprep.subr.mxu0 0.0
      %2493 = vmatpush2.msra.mxu0 0.0
      %2494 = vmatprep.subr.mxu0 0.0
      %2495 = vmatpush2.msra.mxu0 0.0
      %2496 = vmatprep.subr.mxu0 0.0
      %2497 = vmatpush2.msra.mxu0 0.0
      %2498 = vmatprep.subr.mxu0 0.0
      %2499 = vmatpush2.msra.mxu0 0.0
      %2500 = vmatprep.subr.mxu0 0.0
      %2501 = vmatpush2.msra.mxu0 0.0
      %2502 = vmatprep.subr.mxu0 0.0
      %2503 = vmatpush2.msra.mxu0 0.0
      %2504 = vmatprep.subr.mxu0 0.0
      %2505 = vmatpush2.msra.mxu0 0.0
      %2506 = vmatprep.subr.mxu0 0.0
      %2507 = vmatpush2.msra.mxu0 0.0
      %2508 = vmatprep.mubr.f32.mxu0 0.0
      %2509 = vmatmul.mubr.f32.gmra.mxu0 %v2348
      %v2510 = vpop.f32.mrf.mxu0
      %v2511 = vadd.f32 0.0, %v2510
      %v2512 = vpop.f32.mrf.mxu0
      %2513 = vmatprep.mubr.f32.mxu0 0.0
      %2514 = vmatmul.mubr.f32.gmra.mxu0 %v2349
      %v2515 = vpop.f32.mrf.mxu0
      %v2516 = vadd.f32 0.0, %v2515
      %v2517 = vpop.f32.mrf.mxu0
      %2518 = vmatprep.mubr.f32.mxu0 0.0
      %2519 = vmatmul.mubr.f32.gmra.mxu0 %v2350
      %v2520 = vpop.f32.mrf.mxu0
      %v2521 = vadd.f32 0.0, %v2520
      %v2522 = vpop.f32.mrf.mxu0
      %2523 = vmatprep.mubr.f32.mxu0 0.0
      %2524 = vmatmul.mubr.f32.gmra.mxu0 %v2351
      %v2525 = vpop.f32.mrf.mxu0
      %v2526 = vadd.f32 0.0, %v2525
      %v2527 = vpop.f32.mrf.mxu0
      %2528 = vmatprep.mubr.f32.mxu0 0.0
      %2529 = vmatmul.mubr.f32.gmra.mxu0 %v2352
      %v2530 = vpop.f32.mrf.mxu0
      %v2531 = vadd.f32 0.0, %v2530
      %v2532 = vpop.f32.mrf.mxu0
      %2533 = vmatprep.mubr.f32.mxu0 0.0
      %2534 = vmatmul.mubr.f32.gmra.mxu0 %v2353
      %v2535 = vpop.f32.mrf.mxu0
      %v2536 = vadd.f32 0.0, %v2535
      %v2537 = vpop.f32.mrf.mxu0
      %2538 = vmatprep.mubr.f32.mxu0 0.0
      %2539 = vmatmul.mubr.f32.gmra.mxu0 %v2354
      %v2540 = vpop.f32.mrf.mxu0
      %v2541 = vadd.f32 0.0, %v2540
      %v2542 = vpop.f32.mrf.mxu0
      %2543 = vmatprep.mubr.f32.mxu0 0.0
      %2544 = vmatmul.mubr.f32.gmra.mxu0 %v2355
      %v2545 = vpop.f32.mrf.mxu0
      %v2546 = vadd.f32 0.0, %v2545
      %v2547 = vpop.f32.mrf.mxu0
      %2548 = vmatprep.mubr.f32.mxu0 0.0
      %2549 = vmatmul.mubr.f32.gmra.mxu0 %v2356
      %v2550 = vpop.f32.mrf.mxu0
      %v2551 = vadd.f32 0.0, %v2550
      %v2552 = vpop.f32.mrf.mxu0
      %2553 = vmatprep.mubr.f32.mxu0 0.0
      %2554 = vmatmul.mubr.f32.gmra.mxu0 %v2357
      %v2555 = vpop.f32.mrf.mxu0
      %v2556 = vadd.f32 0.0, %v2555
      %v2557 = vpop.f32.mrf.mxu0
      %2558 = vmatprep.mubr.f32.mxu0 0.0
      %2559 = vmatmul.mubr.f32.gmra.mxu0 %v2358
      %v2560 = vpop.f32.mrf.mxu0
      %v2561 = vadd.f32 0.0, %v2560
      %v2562 = vpop.f32.mrf.mxu0
      %2563 = vmatprep.mubr.f32.mxu0 0.0
      %2564 = vmatmul.mubr.f32.gmra.mxu0 %v2359
      %v2565 = vpop.f32.mrf.mxu0
      %v2566 = vadd.f32 0.0, %v2565
      %v2567 = vpop.f32.mrf.mxu0
      %2568 = vmatprep.mubr.f32.mxu0 0.0
      %2569 = vmatmul.mubr.f32.gmra.mxu0 %v2360
      %v2570 = vpop.f32.mrf.mxu0
      %v2571 = vadd.f32 0.0, %v2570
      %v2572 = vpop.f32.mrf.mxu0
      %2573 = vmatprep.mubr.f32.mxu0 0.0
      %2574 = vmatmul.mubr.f32.gmra.mxu0 %v2361
      %v2575 = vpop.f32.mrf.mxu0
      %v2576 = vadd.f32 0.0, %v2575
      %v2577 = vpop.f32.mrf.mxu0
      %2578 = vmatprep.mubr.f32.mxu0 0.0
      %2579 = vmatmul.mubr.f32.gmra.mxu0 %v2362
      %v2580 = vpop.f32.mrf.mxu0
      %v2581 = vadd.f32 0.0, %v2580
      %v2582 = vpop.f32.mrf.mxu0
      %2583 = vmatprep.mubr.f32.mxu0 0.0
      %2584 = vmatmul.mubr.f32.gmra.mxu0 %v2363
      %v2585 = vpop.f32.mrf.mxu0
      %v2586 = vadd.f32 0.0, %v2585
      %v2587 = vpop.f32.mrf.mxu0
      %2588 = vdwg.mxu0
      %v2589 = vrcp.pop %v2365
      %v2590 = vrcp.pop %v2367
      %v2591 = vrcp.pop %v2369
      %v2592 = vrcp.pop %v2371
      %v2593 = vrcp.pop %v2373
      %v2594 = vrcp.pop %v2375
      %v2595 = vrcp.pop %v2377
      %v2596 = vrcp.pop %v2379
      %v2597 = vrcp.pop %v2381
      %v2598 = vrcp.pop %v2383
      %v2599 = vrcp.pop %v2385
      %v2600 = vrcp.pop %v2387
      %v2601 = vrcp.pop %v2389
      %v2602 = vrcp.pop %v2391
      %v2603 = vrcp.pop %v2393
      %v2604 = vrcp.pop %v2395
      %v2605 = vmul.f32 %v2511, %v2589
      %v2606 = vmul.f32 %v2516, %v2590
      %v2607 = vmul.f32 %v2521, %v2591
      %v2608 = vmul.f32 %v2526, %v2592
      %v2609 = vmul.f32 %v2531, %v2593
      %v2610 = vmul.f32 %v2536, %v2594
      %v2611 = vmul.f32 %v2541, %v2595
      %v2612 = vmul.f32 %v2546, %v2596
      %v2613 = vmul.f32 %v2551, %v2597
      %v2614 = vmul.f32 %v2556, %v2598
      %v2615 = vmul.f32 %v2561, %v2599
      %v2616 = vmul.f32 %v2566, %v2600
      %v2617 = vmul.f32 %v2571, %v2601
      %v2618 = vmul.f32 %v2576, %v2602
      %v2619 = vmul.f32 %v2581, %v2603
      %v2620 = vmul.f32 %v2586, %v2604
      %v2621 = vadd.f32 %v1995, %v2605
      %v2622 = vadd.f32 %v1996, %v2606
      %v2623 = vadd.f32 %v1997, %v2607
      %v2624 = vadd.f32 %v1998, %v2608
      %v2625 = vadd.f32 %v1999, %v2609
      %v2626 = vadd.f32 %v2000, %v2610
      %v2627 = vadd.f32 %v2001, %v2611
      %v2628 = vadd.f32 %v2002, %v2612
      %v2629 = vadd.f32 %v2003, %v2613
      %v2630 = vadd.f32 %v2004, %v2614
      %v2631 = vadd.f32 %v2005, %v2615
      %v2632 = vadd.f32 %v2006, %v2616
      %v2633 = vadd.f32 %v2007, %v2617
      %v2634 = vadd.f32 %v2008, %v2618
      %v2635 = vadd.f32 %v2009, %v2619
      %v2636 = vadd.f32 %v2010, %v2620
      %2637 = vrot.lane.b32.xlu0 %v651, 32
      %v2638 = vpop.permute.xlu0 %2637
      %2639 = vrot.lane.b32.xlu0 %v652, 32
      %v2640 = vpop.permute.xlu0 %2639
      %2641 = vrot.lane.b32.xlu0 %v653, 32
      %v2642 = vpop.permute.xlu0 %2641
      %2643 = vrot.lane.b32.xlu0 %v654, 32
      %v2644 = vpop.permute.xlu0 %2643
      %2645 = vrot.lane.b32.xlu0 %v655, 32
      %v2646 = vpop.permute.xlu0 %2645
      %2647 = vrot.lane.b32.xlu0 %v656, 32
      %v2648 = vpop.permute.xlu0 %2647
      %2649 = vrot.lane.b32.xlu0 %v657, 32
      %v2650 = vpop.permute.xlu0 %2649
      %2651 = vrot.lane.b32.xlu0 %v658, 32
      %v2652 = vpop.permute.xlu0 %2651
      %2653 = vrot.lane.b32.xlu0 %v659, 32
      %v2654 = vpop.permute.xlu0 %2653
      %2655 = vrot.lane.b32.xlu0 %v660, 32
      %v2656 = vpop.permute.xlu0 %2655
      %2657 = vrot.lane.b32.xlu0 %v661, 32
      %v2658 = vpop.permute.xlu0 %2657
      %2659 = vrot.lane.b32.xlu0 %v662, 32
      %v2660 = vpop.permute.xlu0 %2659
      %2661 = vrot.lane.b32.xlu0 %v663, 32
      %v2662 = vpop.permute.xlu0 %2661
      %2663 = vrot.lane.b32.xlu0 %v664, 32
      %v2664 = vpop.permute.xlu0 %2663
      %2665 = vrot.lane.b32.xlu0 %v665, 32
      %v2666 = vpop.permute.xlu0 %2665
      %2667 = vrot.lane.b32.xlu0 %v666, 32
      %v2668 = vpop.permute.xlu0 %2667
      %2669 = vrot.lane.b32.xlu0 %v667, 32
      %v2670 = vpop.permute.xlu0 %2669
      %2671 = vrot.lane.b32.xlu0 %v668, 32
      %v2672 = vpop.permute.xlu0 %2671
      %2673 = vrot.lane.b32.xlu0 %v669, 32
      %v2674 = vpop.permute.xlu0 %2673
      %2675 = vrot.lane.b32.xlu0 %v670, 32
      %v2676 = vpop.permute.xlu0 %2675
      %2677 = vrot.lane.b32.xlu0 %v671, 32
      %v2678 = vpop.permute.xlu0 %2677
      %2679 = vrot.lane.b32.xlu0 %v672, 32
      %v2680 = vpop.permute.xlu0 %2679
      %2681 = vrot.lane.b32.xlu0 %v673, 32
      %v2682 = vpop.permute.xlu0 %2681
      %2683 = vrot.lane.b32.xlu0 %v674, 32
      %v2684 = vpop.permute.xlu0 %2683
      %2685 = vrot.lane.b32.xlu0 %v675, 32
      %v2686 = vpop.permute.xlu0 %2685
      %2687 = vrot.lane.b32.xlu0 %v676, 32
      %v2688 = vpop.permute.xlu0 %2687
      %2689 = vrot.lane.b32.xlu0 %v677, 32
      %v2690 = vpop.permute.xlu0 %2689
      %2691 = vrot.lane.b32.xlu0 %v678, 32
      %v2692 = vpop.permute.xlu0 %2691
      %2693 = vrot.lane.b32.xlu0 %v679, 32
      %v2694 = vpop.permute.xlu0 %2693
      %2695 = vrot.lane.b32.xlu0 %v680, 32
      %v2696 = vpop.permute.xlu0 %2695
      %2697 = vrot.lane.b32.xlu0 %v681, 32
      %v2698 = vpop.permute.xlu0 %2697
      %2699 = vrot.lane.b32.xlu0 %v682, 32
      %v2700 = vpop.permute.xlu0 %2699
      %v2701 = vsel %vm248, %v2638, 0
      %v2703 = vsel %vm248, %v2640, 0
      %v2705 = vsel %vm248, %v2642, 0
      %v2707 = vsel %vm248, %v2644, 0
      %v2709 = vsel %vm248, %v2646, 0
      %v2711 = vsel %vm248, %v2648, 0
      %v2713 = vsel %vm248, %v2650, 0
      %v2715 = vsel %vm248, %v2652, 0
      %v2717 = vsel %vm248, %v2654, 0
      %v2719 = vsel %vm248, %v2656, 0
      %v2721 = vsel %vm248, %v2658, 0
      %v2723 = vsel %vm248, %v2660, 0
      %v2725 = vsel %vm248, %v2662, 0
      %v2727 = vsel %vm248, %v2664, 0
      %v2729 = vsel %vm248, %v2666, 0
      %v2731 = vsel %vm248, %v2668, 0
      %v2733 = vsel %vm248, %v2670, 0
      %v2735 = vsel %vm248, %v2672, 0
      %v2737 = vsel %vm248, %v2674, 0
      %v2739 = vsel %vm248, %v2676, 0
      %v2741 = vsel %vm248, %v2678, 0
      %v2743 = vsel %vm248, %v2680, 0
      %v2745 = vsel %vm248, %v2682, 0
      %v2747 = vsel %vm248, %v2684, 0
      %v2749 = vsel %vm248, %v2686, 0
      %v2751 = vsel %vm248, %v2688, 0
      %v2753 = vsel %vm248, %v2690, 0
      %v2755 = vsel %vm248, %v2692, 0
      %v2757 = vsel %vm248, %v2694, 0
      %v2759 = vsel %vm248, %v2696, 0
      %v2761 = vsel %vm248, %v2698, 0
      %v2763 = vsel %vm248, %v2700, 0
      %2765 = vmatprep.subr.mxu0 0.0
      %2766 = vmatpush1.xpose.msra.mxu0 %v2763
      %2767 = vmatprep.subr.mxu0 0.0
      %2768 = vmatpush1.xpose.msra.mxu0 %v2761
      %2769 = vmatprep.subr.mxu0 0.0
      %2770 = vmatpush1.xpose.msra.mxu0 %v2759
      %2771 = vmatprep.subr.mxu0 0.0
      %2772 = vmatpush1.xpose.msra.mxu0 %v2757
      %2773 = vmatprep.subr.mxu0 0.0
      %2774 = vmatpush1.xpose.msra.mxu0 %v2755
      %2775 = vmatprep.subr.mxu0 0.0
      %2776 = vmatpush1.xpose.msra.mxu0 %v2753
      %2777 = vmatprep.subr.mxu0 0.0
      %2778 = vmatpush1.xpose.msra.mxu0 %v2751
      %2779 = vmatprep.subr.mxu0 0.0
      %2780 = vmatpush1.xpose.msra.mxu0 %v2749
      %2781 = vmatprep.subr.mxu0 0.0
      %2782 = vmatpush1.xpose.msra.mxu0 %v2747
      %2783 = vmatprep.subr.mxu0 0.0
      %2784 = vmatpush1.xpose.msra.mxu0 %v2745
      %2785 = vmatprep.subr.mxu0 0.0
      %2786 = vmatpush1.xpose.msra.mxu0 %v2743
      %2787 = vmatprep.subr.mxu0 0.0
      %2788 = vmatpush1.xpose.msra.mxu0 %v2741
      %2789 = vmatprep.subr.mxu0 0.0
      %2790 = vmatpush1.xpose.msra.mxu0 %v2739
      %2791 = vmatprep.subr.mxu0 0.0
      %2792 = vmatpush1.xpose.msra.mxu0 %v2737
      %2793 = vmatprep.subr.mxu0 0.0
      %2794 = vmatpush1.xpose.msra.mxu0 %v2735
      %2795 = vmatprep.subr.mxu0 0.0
      %2796 = vmatpush1.xpose.msra.mxu0 %v2733
      %2797 = vmatprep.subr.mxu0 0.0
      %2798 = vmatpush2.xpose.msra.mxu0 0.0
      %2799 = vmatprep.subr.mxu0 0.0
      %2800 = vmatpush2.xpose.msra.mxu0 0.0
      %2801 = vmatprep.subr.mxu0 0.0
      %2802 = vmatpush2.xpose.msra.mxu0 0.0
      %2803 = vmatprep.subr.mxu0 0.0
      %2804 = vmatpush2.xpose.msra.mxu0 0.0
      %2805 = vmatprep.subr.mxu0 0.0
      %2806 = vmatpush2.xpose.msra.mxu0 0.0
      %2807 = vmatprep.subr.mxu0 0.0
      %2808 = vmatpush2.xpose.msra.mxu0 0.0
      %2809 = vmatprep.subr.mxu0 0.0
      %2810 = vmatpush2.xpose.msra.mxu0 0.0
      %2811 = vmatprep.subr.mxu0 0.0
      %2812 = vmatpush2.xpose.msra.mxu0 0.0
      %2813 = vmatprep.subr.mxu0 0.0
      %2814 = vmatpush2.xpose.msra.mxu0 0.0
      %2815 = vmatprep.subr.mxu0 0.0
      %2816 = vmatpush2.xpose.msra.mxu0 0.0
      %2817 = vmatprep.subr.mxu0 0.0
      %2818 = vmatpush2.xpose.msra.mxu0 0.0
      %2819 = vmatprep.subr.mxu0 0.0
      %2820 = vmatpush2.xpose.msra.mxu0 0.0
      %2821 = vmatprep.subr.mxu0 0.0
      %2822 = vmatpush2.xpose.msra.mxu0 0.0
      %2823 = vmatprep.subr.mxu0 0.0
      %2824 = vmatpush2.xpose.msra.mxu0 0.0
      %2825 = vmatprep.subr.mxu0 0.0
      %2826 = vmatpush2.xpose.msra.mxu0 0.0
      %2827 = vmatprep.subr.mxu0 0.0
      %2828 = vmatpush2.xpose.msra.mxu0 0.0
      %2829 = vmatprep.mubr.f32.mxu0 0.0
      %2830 = vmatmul.mubr.f32.gmra.mxu0 %v2701
      %v2831 = vpop.f32.mrf.mxu0
      %v2832 = vadd.f32 0.0, %v2831
      %v2833 = vpop.f32.mrf.mxu0
      %2834 = vmatprep.mubr.f32.mxu0 0.0
      %2835 = vmatmul.mubr.f32.gmra.mxu0 %v2703
      %v2836 = vpop.f32.mrf.mxu0
      %v2837 = vadd.f32 0.0, %v2836
      %v2838 = vpop.f32.mrf.mxu0
      %2839 = vmatprep.mubr.f32.mxu0 0.0
      %2840 = vmatmul.mubr.f32.gmra.mxu0 %v2705
      %v2841 = vpop.f32.mrf.mxu0
      %v2842 = vadd.f32 0.0, %v2841
      %v2843 = vpop.f32.mrf.mxu0
      %2844 = vmatprep.mubr.f32.mxu0 0.0
      %2845 = vmatmul.mubr.f32.gmra.mxu0 %v2707
      %v2846 = vpop.f32.mrf.mxu0
      %v2847 = vadd.f32 0.0, %v2846
      %v2848 = vpop.f32.mrf.mxu0
      %2849 = vmatprep.mubr.f32.mxu0 0.0
      %2850 = vmatmul.mubr.f32.gmra.mxu0 %v2709
      %v2851 = vpop.f32.mrf.mxu0
      %v2852 = vadd.f32 0.0, %v2851
      %v2853 = vpop.f32.mrf.mxu0
      %2854 = vmatprep.mubr.f32.mxu0 0.0
      %2855 = vmatmul.mubr.f32.gmra.mxu0 %v2711
      %v2856 = vpop.f32.mrf.mxu0
      %v2857 = vadd.f32 0.0, %v2856
      %v2858 = vpop.f32.mrf.mxu0
      %2859 = vmatprep.mubr.f32.mxu0 0.0
      %2860 = vmatmul.mubr.f32.gmra.mxu0 %v2713
      %v2861 = vpop.f32.mrf.mxu0
      %v2862 = vadd.f32 0.0, %v2861
      %v2863 = vpop.f32.mrf.mxu0
      %2864 = vmatprep.mubr.f32.mxu0 0.0
      %2865 = vmatmul.mubr.f32.gmra.mxu0 %v2715
      %v2866 = vpop.f32.mrf.mxu0
      %v2867 = vadd.f32 0.0, %v2866
      %v2868 = vpop.f32.mrf.mxu0
      %2869 = vmatprep.mubr.f32.mxu0 0.0
      %2870 = vmatmul.mubr.f32.gmra.mxu0 %v2717
      %v2871 = vpop.f32.mrf.mxu0
      %v2872 = vadd.f32 0.0, %v2871
      %v2873 = vpop.f32.mrf.mxu0
      %2874 = vmatprep.mubr.f32.mxu0 0.0
      %2875 = vmatmul.mubr.f32.gmra.mxu0 %v2719
      %v2876 = vpop.f32.mrf.mxu0
      %v2877 = vadd.f32 0.0, %v2876
      %v2878 = vpop.f32.mrf.mxu0
      %2879 = vmatprep.mubr.f32.mxu0 0.0
      %2880 = vmatmul.mubr.f32.gmra.mxu0 %v2721
      %v2881 = vpop.f32.mrf.mxu0
      %v2882 = vadd.f32 0.0, %v2881
      %v2883 = vpop.f32.mrf.mxu0
      %2884 = vmatprep.mubr.f32.mxu0 0.0
      %2885 = vmatmul.mubr.f32.gmra.mxu0 %v2723
      %v2886 = vpop.f32.mrf.mxu0
      %v2887 = vadd.f32 0.0, %v2886
      %v2888 = vpop.f32.mrf.mxu0
      %2889 = vmatprep.mubr.f32.mxu0 0.0
      %2890 = vmatmul.mubr.f32.gmra.mxu0 %v2725
      %v2891 = vpop.f32.mrf.mxu0
      %v2892 = vadd.f32 0.0, %v2891
      %v2893 = vpop.f32.mrf.mxu0
      %2894 = vmatprep.mubr.f32.mxu0 0.0
      %2895 = vmatmul.mubr.f32.gmra.mxu0 %v2727
      %v2896 = vpop.f32.mrf.mxu0
      %v2897 = vadd.f32 0.0, %v2896
      %v2898 = vpop.f32.mrf.mxu0
      %2899 = vmatprep.mubr.f32.mxu0 0.0
      %2900 = vmatmul.mubr.f32.gmra.mxu0 %v2729
      %v2901 = vpop.f32.mrf.mxu0
      %v2902 = vadd.f32 0.0, %v2901
      %v2903 = vpop.f32.mrf.mxu0
      %2904 = vmatprep.mubr.f32.mxu0 0.0
      %2905 = vmatmul.mubr.f32.gmra.mxu0 %v2731
      %v2906 = vpop.f32.mrf.mxu0
      %v2907 = vadd.f32 0.0, %v2906
      %v2908 = vpop.f32.mrf.mxu0
      %2909 = vdwg.mxu0
      %v2910 = vtanh.pop %v2832
      %v2911 = vtanh.pop %v2837
      %v2912 = vtanh.pop %v2842
      %v2913 = vtanh.pop %v2847
      %v2914 = vtanh.pop %v2852
      %v2915 = vtanh.pop %v2857
      %v2916 = vtanh.pop %v2862
      %v2917 = vtanh.pop %v2867
      %v2918 = vtanh.pop %v2872
      %v2919 = vtanh.pop %v2877
      %v2920 = vtanh.pop %v2882
      %v2921 = vtanh.pop %v2887
      %v2922 = vtanh.pop %v2892
      %v2923 = vtanh.pop %v2897
      %v2924 = vtanh.pop %v2902
      %v2925 = vtanh.pop %v2907
      %v2926 = vmul.f32 %v2910, 8.0
      %v2927 = vmul.f32 %v2911, 8.0
      %v2928 = vmul.f32 %v2912, 8.0
      %v2929 = vmul.f32 %v2913, 8.0
      %v2930 = vmul.f32 %v2914, 8.0
      %v2931 = vmul.f32 %v2915, 8.0
      %v2932 = vmul.f32 %v2916, 8.0
      %v2933 = vmul.f32 %v2917, 8.0
      %v2934 = vmul.f32 %v2918, 8.0
      %v2935 = vmul.f32 %v2919, 8.0
      %v2936 = vmul.f32 %v2920, 8.0
      %v2937 = vmul.f32 %v2921, 8.0
      %v2938 = vmul.f32 %v2922, 8.0
      %v2939 = vmul.f32 %v2923, 8.0
      %v2940 = vmul.f32 %v2924, 8.0
      %v2941 = vmul.f32 %v2925, 8.0
      %v2942 = vmul.f32 %v2926, 1.442695
      %v2943 = vpow.pop %v2942
      %v2944 = vmul.f32 %v2927, 1.442695
      %v2945 = vpow.pop %v2944
      %v2946 = vmul.f32 %v2928, 1.442695
      %v2947 = vpow.pop %v2946
      %v2948 = vmul.f32 %v2929, 1.442695
      %v2949 = vpow.pop %v2948
      %v2950 = vmul.f32 %v2930, 1.442695
      %v2951 = vpow.pop %v2950
      %v2952 = vmul.f32 %v2931, 1.442695
      %v2953 = vpow.pop %v2952
      %v2954 = vmul.f32 %v2932, 1.442695
      %v2955 = vpow.pop %v2954
      %v2956 = vmul.f32 %v2933, 1.442695
      %v2957 = vpow.pop %v2956
      %v2958 = vmul.f32 %v2934, 1.442695
      %v2959 = vpow.pop %v2958
      %v2960 = vmul.f32 %v2935, 1.442695
      %v2961 = vpow.pop %v2960
      %v2962 = vmul.f32 %v2936, 1.442695
      %v2963 = vpow.pop %v2962
      %v2964 = vmul.f32 %v2937, 1.442695
      %v2965 = vpow.pop %v2964
      %v2966 = vmul.f32 %v2938, 1.442695
      %v2967 = vpow.pop %v2966
      %v2968 = vmul.f32 %v2939, 1.442695
      %v2969 = vpow.pop %v2968
      %v2970 = vmul.f32 %v2940, 1.442695
      %v2971 = vpow.pop %v2970
      %v2972 = vmul.f32 %v2941, 1.442695
      %v2973 = vpow.pop %v2972
      %v2974 = vsel %vm1112, %v2943, 0.0
      %v2975 = vsel %vm1113, %v2945, 0.0
      %v2976 = vsel %vm1114, %v2947, 0.0
      %v2977 = vsel %vm1115, %v2949, 0.0
      %v2978 = vsel %vm1116, %v2951, 0.0
      %v2979 = vsel %vm1117, %v2953, 0.0
      %v2980 = vsel %vm1118, %v2955, 0.0
      %v2981 = vsel %vm1119, %v2957, 0.0
      %v2982 = vsel %vm1120, %v2959, 0.0
      %v2983 = vsel %vm1121, %v2961, 0.0
      %v2984 = vsel %vm1122, %v2963, 0.0
      %v2985 = vsel %vm1123, %v2965, 0.0
      %v2986 = vsel %vm1124, %v2967, 0.0
      %v2987 = vsel %vm1125, %v2969, 0.0
      %v2988 = vsel %vm1126, %v2971, 0.0
      %v2989 = vsel %vm1127, %v2973, 0.0
      %2990 = vadd.xlane.f32.xlu0 %v2974
      %v2991 = vpop.xlane.xlu0 %2990
      %2992 = vadd.xlane.f32.xlu0 %v2975
      %v2993 = vpop.xlane.xlu0 %2992
      %2994 = vadd.xlane.f32.xlu0 %v2976
      %v2995 = vpop.xlane.xlu0 %2994
      %2996 = vadd.xlane.f32.xlu0 %v2977
      %v2997 = vpop.xlane.xlu0 %2996
      %2998 = vadd.xlane.f32.xlu0 %v2978
      %v2999 = vpop.xlane.xlu0 %2998
      %3000 = vadd.xlane.f32.xlu0 %v2979
      %v3001 = vpop.xlane.xlu0 %3000
      %3002 = vadd.xlane.f32.xlu0 %v2980
      %v3003 = vpop.xlane.xlu0 %3002
      %3004 = vadd.xlane.f32.xlu0 %v2981
      %v3005 = vpop.xlane.xlu0 %3004
      %3006 = vadd.xlane.f32.xlu0 %v2982
      %v3007 = vpop.xlane.xlu0 %3006
      %3008 = vadd.xlane.f32.xlu0 %v2983
      %v3009 = vpop.xlane.xlu0 %3008
      %3010 = vadd.xlane.f32.xlu0 %v2984
      %v3011 = vpop.xlane.xlu0 %3010
      %3012 = vadd.xlane.f32.xlu0 %v2985
      %v3013 = vpop.xlane.xlu0 %3012
      %3014 = vadd.xlane.f32.xlu0 %v2986
      %v3015 = vpop.xlane.xlu0 %3014
      %3016 = vadd.xlane.f32.xlu0 %v2987
      %v3017 = vpop.xlane.xlu0 %3016
      %3018 = vadd.xlane.f32.xlu0 %v2988
      %v3019 = vpop.xlane.xlu0 %3018
      %3020 = vadd.xlane.f32.xlu0 %v2989
      %v3021 = vpop.xlane.xlu0 %3020
      %3022 = vrot.lane.b32.xlu0 %v683, 32
      %v3023 = vpop.permute.xlu0 %3022
      %3024 = vrot.lane.b32.xlu0 %v684, 32
      %v3025 = vpop.permute.xlu0 %3024
      %3026 = vrot.lane.b32.xlu0 %v685, 32
      %v3027 = vpop.permute.xlu0 %3026
      %3028 = vrot.lane.b32.xlu0 %v686, 32
      %v3029 = vpop.permute.xlu0 %3028
      %3030 = vrot.lane.b32.xlu0 %v687, 32
      %v3031 = vpop.permute.xlu0 %3030
      %3032 = vrot.lane.b32.xlu0 %v688, 32
      %v3033 = vpop.permute.xlu0 %3032
      %3034 = vrot.lane.b32.xlu0 %v689, 32
      %v3035 = vpop.permute.xlu0 %3034
      %3036 = vrot.lane.b32.xlu0 %v690, 32
      %v3037 = vpop.permute.xlu0 %3036
      %3038 = vrot.lane.b32.xlu0 %v691, 32
      %v3039 = vpop.permute.xlu0 %3038
      %3040 = vrot.lane.b32.xlu0 %v692, 32
      %v3041 = vpop.permute.xlu0 %3040
      %3042 = vrot.lane.b32.xlu0 %v693, 32
      %v3043 = vpop.permute.xlu0 %3042
      %3044 = vrot.lane.b32.xlu0 %v694, 32
      %v3045 = vpop.permute.xlu0 %3044
      %3046 = vrot.lane.b32.xlu0 %v695, 32
      %v3047 = vpop.permute.xlu0 %3046
      %3048 = vrot.lane.b32.xlu0 %v696, 32
      %v3049 = vpop.permute.xlu0 %3048
      %3050 = vrot.lane.b32.xlu0 %v697, 32
      %v3051 = vpop.permute.xlu0 %3050
      %3052 = vrot.lane.b32.xlu0 %v698, 32
      %v3053 = vpop.permute.xlu0 %3052
      %3070 = vmatprep.subr.mxu0 0.0
      %3071 = vmatpush1.msra.mxu0 %v3053
      %3072 = vmatprep.subr.mxu0 0.0
      %3073 = vmatpush1.msra.mxu0 %v3051
      %3074 = vmatprep.subr.mxu0 0.0
      %3075 = vmatpush1.msra.mxu0 %v3049
      %3076 = vmatprep.subr.mxu0 0.0
      %3077 = vmatpush1.msra.mxu0 %v3047
      %3078 = vmatprep.subr.mxu0 0.0
      %3079 = vmatpush1.msra.mxu0 %v3045
      %3080 = vmatprep.subr.mxu0 0.0
      %3081 = vmatpush1.msra.mxu0 %v3043
      %3082 = vmatprep.subr.mxu0 0.0
      %3083 = vmatpush1.msra.mxu0 %v3041
      %3084 = vmatprep.subr.mxu0 0.0
      %3085 = vmatpush1.msra.mxu0 %v3039
      %3086 = vmatprep.subr.mxu0 0.0
      %3087 = vmatpush1.msra.mxu0 %v3037
      %3088 = vmatprep.subr.mxu0 0.0
      %3089 = vmatpush1.msra.mxu0 %v3035
      %3090 = vmatprep.subr.mxu0 0.0
      %3091 = vmatpush1.msra.mxu0 %v3033
      %3092 = vmatprep.subr.mxu0 0.0
      %3093 = vmatpush1.msra.mxu0 %v3031
      %3094 = vmatprep.subr.mxu0 0.0
      %3095 = vmatpush1.msra.mxu0 %v3029
      %3096 = vmatprep.subr.mxu0 0.0
      %3097 = vmatpush1.msra.mxu0 %v3027
      %3098 = vmatprep.subr.mxu0 0.0
      %3099 = vmatpush1.msra.mxu0 %v3025
      %3100 = vmatprep.subr.mxu0 0.0
      %3101 = vmatpush1.msra.mxu0 %v3023
      %3102 = vmatprep.subr.mxu0 0.0
      %3103 = vmatpush2.msra.mxu0 0.0
      %3104 = vmatprep.subr.mxu0 0.0
      %3105 = vmatpush2.msra.mxu0 0.0
      %3106 = vmatprep.subr.mxu0 0.0
      %3107 = vmatpush2.msra.mxu0 0.0
      %3108 = vmatprep.subr.mxu0 0.0
      %3109 = vmatpush2.msra.mxu0 0.0
      %3110 = vmatprep.subr.mxu0 0.0
      %3111 = vmatpush2.msra.mxu0 0.0
      %3112 = vmatprep.subr.mxu0 0.0
      %3113 = vmatpush2.msra.mxu0 0.0
      %3114 = vmatprep.subr.mxu0 0.0
      %3115 = vmatpush2.msra.mxu0 0.0
      %3116 = vmatprep.subr.mxu0 0.0
      %3117 = vmatpush2.msra.mxu0 0.0
      %3118 = vmatprep.subr.mxu0 0.0
      %3119 = vmatpush2.msra.mxu0 0.0
      %3120 = vmatprep.subr.mxu0 0.0
      %3121 = vmatpush2.msra.mxu0 0.0
      %3122 = vmatprep.subr.mxu0 0.0
      %3123 = vmatpush2.msra.mxu0 0.0
      %3124 = vmatprep.subr.mxu0 0.0
      %3125 = vmatpush2.msra.mxu0 0.0
      %3126 = vmatprep.subr.mxu0 0.0
      %3127 = vmatpush2.msra.mxu0 0.0
      %3128 = vmatprep.subr.mxu0 0.0
      %3129 = vmatpush2.msra.mxu0 0.0
      %3130 = vmatprep.subr.mxu0 0.0
      %3131 = vmatpush2.msra.mxu0 0.0
      %3132 = vmatprep.subr.mxu0 0.0
      %3133 = vmatpush2.msra.mxu0 0.0
      %3134 = vmatprep.mubr.f32.mxu0 0.0
      %3135 = vmatmul.mubr.f32.gmra.mxu0 %v2974
      %v3136 = vpop.f32.mrf.mxu0
      %v3137 = vadd.f32 0.0, %v3136
      %v3138 = vpop.f32.mrf.mxu0
      %3139 = vmatprep.mubr.f32.mxu0 0.0
      %3140 = vmatmul.mubr.f32.gmra.mxu0 %v2975
      %v3141 = vpop.f32.mrf.mxu0
      %v3142 = vadd.f32 0.0, %v3141
      %v3143 = vpop.f32.mrf.mxu0
      %3144 = vmatprep.mubr.f32.mxu0 0.0
      %3145 = vmatmul.mubr.f32.gmra.mxu0 %v2976
      %v3146 = vpop.f32.mrf.mxu0
      %v3147 = vadd.f32 0.0, %v3146
      %v3148 = vpop.f32.mrf.mxu0
      %3149 = vmatprep.mubr.f32.mxu0 0.0
      %3150 = vmatmul.mubr.f32.gmra.mxu0 %v2977
      %v3151 = vpop.f32.mrf.mxu0
      %v3152 = vadd.f32 0.0, %v3151
      %v3153 = vpop.f32.mrf.mxu0
      %3154 = vmatprep.mubr.f32.mxu0 0.0
      %3155 = vmatmul.mubr.f32.gmra.mxu0 %v2978
      %v3156 = vpop.f32.mrf.mxu0
      %v3157 = vadd.f32 0.0, %v3156
      %v3158 = vpop.f32.mrf.mxu0
      %3159 = vmatprep.mubr.f32.mxu0 0.0
      %3160 = vmatmul.mubr.f32.gmra.mxu0 %v2979
      %v3161 = vpop.f32.mrf.mxu0
      %v3162 = vadd.f32 0.0, %v3161
      %v3163 = vpop.f32.mrf.mxu0
      %3164 = vmatprep.mubr.f32.mxu0 0.0
      %3165 = vmatmul.mubr.f32.gmra.mxu0 %v2980
      %v3166 = vpop.f32.mrf.mxu0
      %v3167 = vadd.f32 0.0, %v3166
      %v3168 = vpop.f32.mrf.mxu0
      %3169 = vmatprep.mubr.f32.mxu0 0.0
      %3170 = vmatmul.mubr.f32.gmra.mxu0 %v2981
      %v3171 = vpop.f32.mrf.mxu0
      %v3172 = vadd.f32 0.0, %v3171
      %v3173 = vpop.f32.mrf.mxu0
      %3174 = vmatprep.mubr.f32.mxu0 0.0
      %3175 = vmatmul.mubr.f32.gmra.mxu0 %v2982
      %v3176 = vpop.f32.mrf.mxu0
      %v3177 = vadd.f32 0.0, %v3176
      %v3178 = vpop.f32.mrf.mxu0
      %3179 = vmatprep.mubr.f32.mxu0 0.0
      %3180 = vmatmul.mubr.f32.gmra.mxu0 %v2983
      %v3181 = vpop.f32.mrf.mxu0
      %v3182 = vadd.f32 0.0, %v3181
      %v3183 = vpop.f32.mrf.mxu0
      %3184 = vmatprep.mubr.f32.mxu0 0.0
      %3185 = vmatmul.mubr.f32.gmra.mxu0 %v2984
      %v3186 = vpop.f32.mrf.mxu0
      %v3187 = vadd.f32 0.0, %v3186
      %v3188 = vpop.f32.mrf.mxu0
      %3189 = vmatprep.mubr.f32.mxu0 0.0
      %3190 = vmatmul.mubr.f32.gmra.mxu0 %v2985
      %v3191 = vpop.f32.mrf.mxu0
      %v3192 = vadd.f32 0.0, %v3191
      %v3193 = vpop.f32.mrf.mxu0
      %3194 = vmatprep.mubr.f32.mxu0 0.0
      %3195 = vmatmul.mubr.f32.gmra.mxu0 %v2986
      %v3196 = vpop.f32.mrf.mxu0
      %v3197 = vadd.f32 0.0, %v3196
      %v3198 = vpop.f32.mrf.mxu0
      %3199 = vmatprep.mubr.f32.mxu0 0.0
      %3200 = vmatmul.mubr.f32.gmra.mxu0 %v2987
      %v3201 = vpop.f32.mrf.mxu0
      %v3202 = vadd.f32 0.0, %v3201
      %v3203 = vpop.f32.mrf.mxu0
      %3204 = vmatprep.mubr.f32.mxu0 0.0
      %3205 = vmatmul.mubr.f32.gmra.mxu0 %v2988
      %v3206 = vpop.f32.mrf.mxu0
      %v3207 = vadd.f32 0.0, %v3206
      %v3208 = vpop.f32.mrf.mxu0
      %3209 = vmatprep.mubr.f32.mxu0 0.0
      %3210 = vmatmul.mubr.f32.gmra.mxu0 %v2989
      %v3211 = vpop.f32.mrf.mxu0
      %v3212 = vadd.f32 0.0, %v3211
      %v3213 = vpop.f32.mrf.mxu0
      %3214 = vdwg.mxu0
      %v3215 = vrcp.pop %v2991
      %v3216 = vrcp.pop %v2993
      %v3217 = vrcp.pop %v2995
      %v3218 = vrcp.pop %v2997
      %v3219 = vrcp.pop %v2999
      %v3220 = vrcp.pop %v3001
      %v3221 = vrcp.pop %v3003
      %v3222 = vrcp.pop %v3005
      %v3223 = vrcp.pop %v3007
      %v3224 = vrcp.pop %v3009
      %v3225 = vrcp.pop %v3011
      %v3226 = vrcp.pop %v3013
      %v3227 = vrcp.pop %v3015
      %v3228 = vrcp.pop %v3017
      %v3229 = vrcp.pop %v3019
      %v3230 = vrcp.pop %v3021
      %v3231 = vmul.f32 %v3137, %v3215
      %v3232 = vmul.f32 %v3142, %v3216
      %v3233 = vmul.f32 %v3147, %v3217
      %v3234 = vmul.f32 %v3152, %v3218
      %v3235 = vmul.f32 %v3157, %v3219
      %v3236 = vmul.f32 %v3162, %v3220
      %v3237 = vmul.f32 %v3167, %v3221
      %v3238 = vmul.f32 %v3172, %v3222
      %v3239 = vmul.f32 %v3177, %v3223
      %v3240 = vmul.f32 %v3182, %v3224
      %v3241 = vmul.f32 %v3187, %v3225
      %v3242 = vmul.f32 %v3192, %v3226
      %v3243 = vmul.f32 %v3197, %v3227
      %v3244 = vmul.f32 %v3202, %v3228
      %v3245 = vmul.f32 %v3207, %v3229
      %v3246 = vmul.f32 %v3212, %v3230
      %v3247 = vadd.f32 %v2621, %v3231
      %v3248 = vadd.f32 %v2622, %v3232
      %v3249 = vadd.f32 %v2623, %v3233
      %v3250 = vadd.f32 %v2624, %v3234
      %v3251 = vadd.f32 %v2625, %v3235
      %v3252 = vadd.f32 %v2626, %v3236
      %v3253 = vadd.f32 %v2627, %v3237
      %v3254 = vadd.f32 %v2628, %v3238
      %v3255 = vadd.f32 %v2629, %v3239
      %v3256 = vadd.f32 %v2630, %v3240
      %v3257 = vadd.f32 %v2631, %v3241
      %v3258 = vadd.f32 %v2632, %v3242
      %v3259 = vadd.f32 %v2633, %v3243
      %v3260 = vadd.f32 %v2634, %v3244
      %v3261 = vadd.f32 %v2635, %v3245
      %v3262 = vadd.f32 %v2636, %v3246
      %v3263 = vld [vmem:[%s3] sm:$0x1]
      %v3265 = vlaneseq
      %v3266 = vshrl.u32 %v3265, 7
      %v3267 = vsub.s32 0, %v3266
      %v3268 = vrot.slane %v3263, %v3267
      %v3270 = vadd.f32 %v3247, %v3268
      %v3271 = vadd.f32 %v3248, %v3268
      %v3272 = vadd.f32 %v3249, %v3268
      %v3273 = vadd.f32 %v3250, %v3268
      %v3274 = vadd.f32 %v3251, %v3268
      %v3275 = vadd.f32 %v3252, %v3268
      %v3276 = vadd.f32 %v3253, %v3268
      %v3277 = vadd.f32 %v3254, %v3268
      %v3278 = vadd.f32 %v3255, %v3268
      %v3279 = vadd.f32 %v3256, %v3268
      %v3280 = vadd.f32 %v3257, %v3268
      %v3281 = vadd.f32 %v3258, %v3268
      %v3282 = vadd.f32 %v3259, %v3268
      %v3283 = vadd.f32 %v3260, %v3268
      %v3284 = vadd.f32 %v3261, %v3268
      %v3285 = vadd.f32 %v3262, %v3268
      %3286 = vst.msk [vmem:[%s217] sm:$0xff] %vm248, %v3270
      %3287 = vst.msk [vmem:[%s217 + $0x8] sm:$0xff] %vm248, %v3271
      %3288 = vst.msk [vmem:[%s217 + $0x10] sm:$0xff] %vm248, %v3272
      %3289 = vst.msk [vmem:[%s217 + $0x18] sm:$0xff] %vm248, %v3273
      %3290 = vst.msk [vmem:[%s217 + $0x20] sm:$0xff] %vm248, %v3274
      %3291 = vst.msk [vmem:[%s217 + $0x28] sm:$0xff] %vm248, %v3275
      %3292 = vst.msk [vmem:[%s217 + $0x30] sm:$0xff] %vm248, %v3276
      %3293 = vst.msk [vmem:[%s217 + $0x38] sm:$0xff] %vm248, %v3277
      %3294 = vst.msk [vmem:[%s217 + $0x40] sm:$0xff] %vm248, %v3278
      %3295 = vst.msk [vmem:[%s217 + $0x48] sm:$0xff] %vm248, %v3279
      %3296 = vst.msk [vmem:[%s217 + $0x50] sm:$0xff] %vm248, %v3280
      %3297 = vst.msk [vmem:[%s217 + $0x58] sm:$0xff] %vm248, %v3281
      %3298 = vst.msk [vmem:[%s217 + $0x60] sm:$0xff] %vm248, %v3282
      %3299 = vst.msk [vmem:[%s217 + $0x68] sm:$0xff] %vm248, %v3283
      %3300 = vst.msk [vmem:[%s217 + $0x70] sm:$0xff] %vm248, %v3284
      %3301 = vst.msk [vmem:[%s217 + $0x78] sm:$0xff] %vm248, %v3285
      %p3302 = scmp.lt.s32.totalorder %s15, 1
      %s3303 = scalar_select %p3302, %s15, 1
      %s3304 = smul.addr %s3303, 16
      %s3305 = smul.addr %s3304, 8
      %s3306 = scalar_lea.vmem %s4, %s3305
      // Predicated region
      $region37: #{tpu_custom_call.1} parent=35 // pred_check
        %p3307 = pneg %p127
      $region38: #{tpu_custom_call.1} parent=35 // pred_check_branch
        %3309 = sbr.rel (%p3307) target = $region40
      $region39: #{tpu_custom_call.1} parent=35 // pred_region
        _
      $region40: #{tpu_custom_call.1} parent=35 // pred_fallthru
        _
    $region36: #{tpu_custom_call.1} parent=5 // pred_fallthru
      _
    %p3310 = scmp.le.s32.totalorder 2, %s10
    // Predicated region
    $region41: #{tpu_custom_call.1} parent=5 // pred_check
      %p3311 = pneg %p3310
    $region42: #{tpu_custom_call.1} parent=5 // pred_check_branch
      %3313 = sbr.rel (%p3311) target = $region44
    $region43: #{tpu_custom_call.1} parent=5 // pred_region
      %s3314 = ssub.s32 %s10, 2
      // Predicated region
      $region45: #{tpu_custom_call.1} parent=43 // pred_check
        %p3315 = pneg %p133
      $region46: #{tpu_custom_call.1} parent=43 // pred_check_branch
        %3317 = sbr.rel (%p3315) target = $region48
      $region47: #{tpu_custom_call.1} parent=43 // pred_region
        %p3318 = scmp.lt.s32.totalorder %s16, 1
        %s3319 = scalar_select %p3318, %s16, 1
        %s3320 = smul.addr %s3319, 16
        %s3321 = smul.addr %s3320, 8
        %s3322 = scalar_lea.vmem %s4, %s3321
      $region48: #{tpu_custom_call.1} parent=43 // pred_fallthru
        _
    $region44: #{tpu_custom_call.1} parent=5 // pred_fallthru
      _
  $region6: #{tpu_custom_call.1} parent=0 // loop_footer
    %s14 = sadd.s32 1, %s10
  $region7: #{tpu_custom_call.1} parent=0 // loop_footer_branch
    %9 = sbr.rel target = $region3
  $region8: #{tpu_custom_call.1} parent=0 // loop_exit
    _

</llo_original>
